<compile_context>
chip_gen: v6e
topology: v6e:2x2x1
jax: 0.10.0
libtpu: 0.0.40
codegen_flags: <defaults>
</compile_context>

<pallas_src>
import math
import functools

import jax
import jax.numpy as jnp
from jax import lax
from jax.experimental import pallas as pl
from jax.experimental.pallas import tpu as pltpu


# ----------------------------- model config ---------------------------------
NUM_TOKENS = 64
D_MODEL    = 32
NUM_HEADS  = 4
HEAD_DIM   = D_MODEL // NUM_HEADS
DIM_FF     = 64
NUM_LAYERS = 2
LN_EPS     = 1e-5
SEQ_LEN    = 8
BATCH      = 2
MAX_LEN    = 64          # positional-encoding table length (>= SEQ_LEN)
V_PAD      = 128         # lane-dense padded vocab width for the decoder output
NEG_INF    = -1e9        # finite "fully masked" value (avoids NaN for all-masked rows)

N_ROWS = SEQ_LEN * BATCH  # rows processed as one block, (seq, batch)-major

# --- constants slab layout (bf16, [CONST_ROWS, 128]); row offsets multiples of 16 ---
EMB_OFF    = 0                               # [NUM_TOKENS, D]   embedding table
PE_OFF     = EMB_OFF + NUM_TOKENS            # [N_ROWS, D]       PE rows, seq-major
DECW_OFF   = PE_OFF + N_ROWS                 # [D, 128]          decoder weight (vocab lane-padded)
DECB_OFF   = DECW_OFF + D_MODEL              # [1, 128]          decoder bias
CONST_ROWS = 128

# --- per-layer weight slab layout (bf16, [L, W_ROWS, W_COLS]); all lane offsets 0 ---
QKV_R  = 0                                   # rows 0:32,   cols 0:96   Wqkv  (x @ W convention)
W2_R   = D_MODEL                             # rows 32:96,  cols 0:32   W2
WO_R   = W2_R + DIM_FF                       # rows 96:128, cols 0:32   Wo
W1_R   = WO_R + D_MODEL                      # rows 128:160,cols 0:64   W1
W_ROWS = W1_R + D_MODEL                      # 160
W_COLS = 3 * D_MODEL                         # 96

# --- per-layer small-vector slab (f32, [L, 8, 128]) row assignment ---
# 0: bo   1: ln1_g  2: ln1_b  3: b1  4: b2  5: ln2_g  6: ln2_b  7: bqkv (96 wide)


# ------------------------- fused transformer kernel --------------------------
def _fused_transformer_kernel(ids_ref, mask_ref, const_ref, lw_ref, vec_ref, o_ref, *,
                              seq_len, batch, num_layers, num_heads, d_model,
                              dim_ff, num_tokens, eps, scale):
    S, B = seq_len, batch
    N = S * B
    D, F, H = d_model, dim_ff, num_heads
    hd = D // H
    f32, bf16 = jnp.float32, jnp.bfloat16

    # ---- embedding gather as a one-hot matmul (table stays in VMEM), scale, + PE ----
    ids = ids_ref[...]                                               # [N, 1] int32
    tok = lax.broadcasted_iota(jnp.int32, (N, num_tokens), 1)        # [N, V]
    onehot = (tok == ids).astype(bf16)
    emb = const_ref[EMB_OFF:EMB_OFF + num_tokens, 0:D]               # [V, D] bf16
    x = jnp.dot(onehot, emb, preferred_element_type=f32) * scale
    x = x + const_ref[PE_OFF:PE_OFF + N, 0:D].astype(f32)            # [N, D]
    # TODO(synk): dropout (pos-encoder / attention / FFN) is identity (eval mode).

    # ---- expand the [S, S] additive mask to the fused [N, N] layout, in-kernel ----
    # row/col n = s*B + b; same-batch entries keep the (finitely clamped) user mask,
    # cross-batch entries are fully masked.
    m_small = jnp.maximum(mask_ref[...], NEG_INF)                    # clamp -inf -> finite
    E = (lax.broadcasted_iota(jnp.int32, (S, B, S), 0) ==
         lax.broadcasted_iota(jnp.int32, (S, B, S), 2)).astype(f32).reshape(N, S)
    ET = (lax.broadcasted_iota(jnp.int32, (S, S, B), 0) ==
          lax.broadcasted_iota(jnp.int32, (S, S, B), 1)).astype(f32).reshape(S, N)
    expanded = jnp.dot(E, jnp.dot(m_small, ET, preferred_element_type=f32),
                       preferred_element_type=f32)                   # [N, N]
    qb = lax.broadcasted_iota(jnp.int32, (S, B, N), 1).reshape(N, N)  # batch idx per row
    kb = lax.broadcasted_iota(jnp.int32, (N, S, B), 2).reshape(N, N)  # batch idx per col
    big_mask = jnp.where(qb == kb, expanded, NEG_INF)                 # [N, N]

    inv_sqrt_hd = 1.0 / math.sqrt(hd)

    for l in range(num_layers):                                       # static unroll
        vec = vec_ref[l]                                              # [8, 128] f32
        bo    = vec[0:1, :D]
        ln1_g = vec[1:2, :D]; ln1_b = vec[2:3, :D]
        b1    = vec[3:4, :F]; b2    = vec[4:5, :D]
        ln2_g = vec[5:6, :D]; ln2_b = vec[6:7, :D]
        bqkv  = vec[7:8, :3 * D]

        # ---- fused QKV projection: one lane-dense K=32 matmul ----
        wqkv = lw_ref[l, QKV_R:QKV_R + D, 0:3 * D]                    # [D, 3D] bf16
        qkv = jnp.dot(x.astype(bf16), wqkv, preferred_element_type=f32) + bqkv  # [N, 3D]

        def heads(t):                                                 # [N, D] -> [H, N, hd]
            return jnp.transpose(t.reshape(N, H, hd), (1, 0, 2))
        q = heads(qkv[:, 0:D])
        k = heads(qkv[:, D:2 * D])
        v = heads(qkv[:, 2 * D:3 * D])

        # ---- scaled dot-product attention, all heads in one batched contraction ----
        s = jnp.einsum('hqd,hkd->hqk', q, k, preferred_element_type=f32)
        s = s * inv_sqrt_hd + big_mask[None]                          # [H, N, N]
        m = jnp.max(s, axis=-1, keepdims=True)
        e = jnp.exp(s - m)
        p = e * pl.reciprocal(jnp.sum(e, axis=-1, keepdims=True), approx=True)
        ctx = jnp.einsum('hqk,hkd->hqd', p, v, preferred_element_type=f32)   # [H, N, hd]

        # ---- output projection: one K=32 matmul on re-flattened heads ----
        ctx_flat = jnp.transpose(ctx, (1, 0, 2)).reshape(N, D)        # [N, D]
        wo = lw_ref[l, WO_R:WO_R + D, 0:D]                            # [D, D] bf16
        attn = jnp.dot(ctx_flat.astype(bf16), wo, preferred_element_type=f32) + bo

        # ---- add & layernorm 1 (post-norm, norm_first=False) ----
        y = x + attn
        mu = jnp.mean(y, axis=-1, keepdims=True)
        var = jnp.mean((y - mu) ** 2, axis=-1, keepdims=True)
        y = (y - mu) * lax.rsqrt(var + eps) * ln1_g + ln1_b

        # ---- feed forward: linear -> relu -> linear ----
        w1 = lw_ref[l, W1_R:W1_R + D, 0:F]                            # [D, F] bf16
        w2 = lw_ref[l, W2_R:W2_R + F, 0:D]                            # [F, D] bf16
        h1 = jnp.maximum(jnp.dot(y.astype(bf16), w1, preferred_element_type=f32) + b1, 0.0)
        ff = jnp.dot(h1.astype(bf16), w2, preferred_element_type=f32) + b2

        # ---- add & layernorm 2 ----
        z = y + ff
        mu2 = jnp.mean(z, axis=-1, keepdims=True)
        var2 = jnp.mean((z - mu2) ** 2, axis=-1, keepdims=True)
        x = (z - mu2) * lax.rsqrt(var2 + eps) * ln2_g + ln2_b

    # ---- decoder linear, lane-dense (vocab padded to 128 lanes) ----
    dec_w = const_ref[DECW_OFF:DECW_OFF + D, :]                       # [D, 128] bf16
    dec_b = const_ref[DECB_OFF:DECB_OFF + 1, :].astype(f32)           # [1, 128] (zero-init)
    o_ref[...] = jnp.dot(x.astype(bf16), dec_w, preferred_element_type=f32) + dec_b


# --------------------------- parameter construction --------------------------
def make_positional_encoding(max_len, d_model):
    position = jnp.arange(max_len, dtype=jnp.float32)[:, None]
    div_term = jnp.exp(jnp.arange(0, d_model, 2, dtype=jnp.float32)
                       * (-math.log(10000.0) / d_model))
    pe = jnp.zeros((max_len, d_model), dtype=jnp.float32)
    pe = pe.at[:, 0::2].set(jnp.sin(position * div_term))
    pe = pe.at[:, 1::2].set(jnp.cos(position * div_term))
    return pe


def init_params(key):
    keys = iter(jax.random.split(key, 2 + 8 * NUM_LAYERS))
    nxt = lambda: next(keys)
    initrange = 0.1
    D, F = D_MODEL, DIM_FF

    # ---- constants slab: emb | PE rows | dec_w | dec_b, one bf16 [128, 128] buffer ----
    emb = jax.random.uniform(nxt(), (NUM_TOKENS, D), minval=-initrange,
                             maxval=initrange, dtype=jnp.float32)
    dec_w = jax.random.uniform(nxt(), (D, NUM_TOKENS), minval=-initrange,
                               maxval=initrange, dtype=jnp.float32)
    pe_rows = jnp.repeat(make_positional_encoding(MAX_LEN, D)[:SEQ_LEN], BATCH, axis=0)

    const = jnp.zeros((CONST_ROWS, 128), jnp.float32)
    const = const.at[EMB_OFF:EMB_OFF + NUM_TOKENS, :D].set(emb)
    const = const.at[PE_OFF:PE_OFF + N_ROWS, :D].set(pe_rows)
    const = const.at[DECW_OFF:DECW_OFF + D, :NUM_TOKENS].set(dec_w)
    # decoder bias row (DECB_OFF) stays zero (PyTorch decoder.bias.data.zero_())
    const = const.astype(jnp.bfloat16)

    lw, vec = [], []
    for _ in range(NUM_LAYERS):
        # x @ Wqkv convention (== PyTorch in_proj_weight.T), q|k|v stacked on columns
        wqkv    = 0.05 * jax.random.normal(nxt(), (D, 3 * D), dtype=jnp.float32)
        bqkv    = 0.01 * jax.random.normal(nxt(), (3 * D,), dtype=jnp.float32)
        wo_full = 0.05 * jax.random.normal(nxt(), (D, D), dtype=jnp.float32)   # out_proj.weight.T
        bo      = 0.01 * jax.random.normal(nxt(), (D,), dtype=jnp.float32)
        w1_full = 0.05 * jax.random.normal(nxt(), (D, F), dtype=jnp.float32)
        b1      = 0.01 * jax.random.normal(nxt(), (F,), dtype=jnp.float32)
        w2_full = 0.05 * jax.random.normal(nxt(), (F, D), dtype=jnp.float32)
        b2      = 0.01 * jax.random.normal(nxt(), (D,), dtype=jnp.float32)
        ln1_g = jnp.ones((D,), jnp.float32); ln1_b = jnp.zeros((D,), jnp.float32)
        ln2_g = jnp.ones((D,), jnp.float32); ln2_b = jnp.zeros((D,), jnp.float32)

        slab = jnp.zeros((W_ROWS, W_COLS), jnp.float32)
        slab = slab.at[QKV_R:QKV_R + D, 0:3 * D].set(wqkv)
        slab = slab.at[W2_R:W2_R + F, 0:D].set(w2_full)
        slab = slab.at[WO_R:WO_R + D, 0:D].set(wo_full)
        slab = slab.at[W1_R:W1_R + D, 0:F].set(w1_full)
        lw.append(slab.astype(jnp.bfloat16))

        vslab = jnp.zeros((8, 128), jnp.float32)
        vslab = vslab.at[0, :D].set(bo)
        vslab = vslab.at[1, :D].set(ln1_g)
        vslab = vslab.at[2, :D].set(ln1_b)
        vslab = vslab.at[3, :F].set(b1)
        vslab = vslab.at[4, :D].set(b2)
        vslab = vslab.at[5, :D].set(ln2_g)
        vslab = vslab.at[6, :D].set(ln2_b)
        vslab = vslab.at[7, :3 * D].set(bqkv)
        vec.append(vslab)

    return {"const": const, "layer_w": jnp.stack(lw), "vec": jnp.stack(vec)}


# ------------------------------ full forward ---------------------------------
def transformer_forward(src, src_mask, params):
    """src: [S, B] int tokens; src_mask: [S, S] float additive mask.
    Returns logits [S, B, NUM_TOKENS] (PyTorch output convention)."""
    S, B = src.shape
    N = S * B

    ids = src.reshape(N, 1).astype(jnp.int32)          # rows in (seq, batch)-major order

    kernel = functools.partial(
        _fused_transformer_kernel,
        seq_len=S, batch=B, num_layers=NUM_LAYERS, num_heads=NUM_HEADS,
        d_model=D_MODEL, dim_ff=DIM_FF, num_tokens=NUM_TOKENS,
        eps=LN_EPS, scale=math.sqrt(D_MODEL))

    vmem = pl.BlockSpec(memory_space=pltpu.MemorySpace.VMEM)
    logits_pad = pl.pallas_call(
        kernel,
        out_shape=jax.ShapeDtypeStruct((N, V_PAD), jnp.float32),
        in_specs=[vmem] * 5,
        out_specs=vmem,
        # Gridless single invocation: total resident footprint is <200 KB, far under
        # every chip's scoped-VMEM default -> no tiling / vmem_limit_bytes needed.
        # TODO(synk): for v7x throughput over many sequences, add a leading "parallel"
        # grid axis over batch groups so both TensorCores get work.
    )(ids, src_mask.astype(jnp.float32), params["const"],
      params["layer_w"], params["vec"])

    # [N, 128] -> [S, B, NUM_TOKENS]  (pure reshape + vocab slice; no transpose)
    return logits_pad.reshape(S, B, V_PAD)[:, :, :NUM_TOKENS]


# ----------------------------------- main -------------------------------------
if __name__ == "__main__":
    key = jax.random.PRNGKey(0)
    k_param, k_tok = jax.random.split(key)

    params = init_params(k_param)

    src = jax.random.randint(k_tok, (SEQ_LEN, BATCH), 0, NUM_TOKENS, dtype=jnp.int32)
    # causal mask a la torch generate_square_subsequent_mask: 0 on/below diag, -inf above
    causal = jnp.triu(jnp.ones((SEQ_LEN, SEQ_LEN), dtype=bool), k=1)
    src_mask = jnp.where(causal, -jnp.inf, 0.0).astype(jnp.float32)

    fwd = jax.jit(transformer_forward)
    out = jax.block_until_ready(fwd(src, src_mask, params))

    assert out.shape == (SEQ_LEN, BATCH, NUM_TOKENS), out.shape
    assert out.dtype == jnp.float32
    assert bool(jnp.all(jnp.isfinite(out)))
    print("KERNEL_OK")
</pallas_src>

<mosaic_0001>
module attributes {stable_mosaic.version = 11 : i64} {
  func.func @_fused_transformer_kernel(%arg0: memref<16x1xi32, #tpu.memory_space<vmem>>, %arg1: memref<8x8xf32, #tpu.memory_space<vmem>>, %arg2: memref<128x128xbf16, #tpu.memory_space<vmem>>, %arg3: memref<2x160x96xbf16, #tpu.memory_space<vmem>>, %arg4: memref<2x8x128xf32, #tpu.memory_space<vmem>>, %arg5: memref<16x128xf32, #tpu.memory_space<vmem>>) attributes {dimension_semantics = [], scalar_prefetch = 0 : i64, scratch_operands = 0 : i64, tpu.core_type = #tpu.core_type<tc>} {
    %c0 = arith.constant 0 : index
    %c0_0 = arith.constant 0 : index
    %0 = vector.load %arg0[%c0, %c0_0] : memref<16x1xi32, #tpu.memory_space<vmem>>, vector<16x1xi32>
    %1 = tpu.iota {dimensions = array<i32: 1>} : vector<16x64xi32>
    %2 = vector.broadcast %0 : vector<16x1xi32> to vector<16x64xi32>
    %3 = arith.cmpi eq, %1, %2 : vector<16x64xi32>
    %4 = arith.extui %3 : vector<16x64xi1> to vector<16x64xi32>
    %5 = arith.sitofp %4 : vector<16x64xi32> to vector<16x64xf32>
    %6 = arith.truncf %5 : vector<16x64xf32> to vector<16x64xbf16>
    %c0_1 = arith.constant 0 : index
    %c0_2 = arith.constant 0 : index
    %7 = vector.load %arg2[%c0_1, %c0_2] : memref<128x128xbf16, #tpu.memory_space<vmem>>, vector<64x32xbf16>
    %cst = arith.constant dense<0.000000e+00> : vector<16x32xf32>
    %8 = tpu.matmul %6, %7, %cst {dimension_numbers = #tpu.dot_dimension_numbers<[1], [0], [0], [1], [0, 0, 1, 1], [], []>} : vector<16x64xbf16>, vector<64x32xbf16>, vector<16x32xf32> -> vector<16x32xf32>
    %cst_3 = arith.constant 5.65685415 : f32
    %9 = vector.broadcast %cst_3 : f32 to vector<16x32xf32>
    %10 = arith.mulf %8, %9 : vector<16x32xf32>
    %c64 = arith.constant 64 : index
    %c0_4 = arith.constant 0 : index
    %11 = vector.load %arg2[%c64, %c0_4] : memref<128x128xbf16, #tpu.memory_space<vmem>>, vector<16x32xbf16>
    %12 = arith.extf %11 : vector<16x32xbf16> to vector<16x32xf32>
    %13 = arith.addf %10, %12 : vector<16x32xf32>
    %c0_5 = arith.constant 0 : index
    %c0_6 = arith.constant 0 : index
    %14 = vector.load %arg1[%c0_5, %c0_6] : memref<8x8xf32, #tpu.memory_space<vmem>>, vector<8x8xf32>
    %cst_7 = arith.constant -1.000000e+09 : f32
    %15 = vector.broadcast %cst_7 : f32 to vector<8x8xf32>
    %16 = arith.maximumf %14, %15 : vector<8x8xf32>
    %17 = tpu.iota {dimensions = array<i32: 0>} : vector<8x2x8xi32>
    %18 = tpu.iota {dimensions = array<i32: 2>} : vector<8x2x8xi32>
    %19 = arith.cmpi eq, %17, %18 : vector<8x2x8xi32>
    %20 = arith.extui %19 : vector<8x2x8xi1> to vector<8x2x8xi32>
    %21 = arith.sitofp %20 : vector<8x2x8xi32> to vector<8x2x8xf32>
    %22 = vector.shape_cast %21 : vector<8x2x8xf32> to vector<16x8xf32>
    %23 = tpu.iota {dimensions = array<i32: 0>} : vector<8x8x2xi32>
    %24 = tpu.iota {dimensions = array<i32: 1>} : vector<8x8x2xi32>
    %25 = arith.cmpi eq, %23, %24 : vector<8x8x2xi32>
    %26 = arith.extui %25 : vector<8x8x2xi1> to vector<8x8x2xi32>
    %27 = arith.sitofp %26 : vector<8x8x2xi32> to vector<8x8x2xf32>
    %28 = vector.shape_cast %27 : vector<8x8x2xf32> to vector<8x16xf32>
    %cst_8 = arith.constant dense<0.000000e+00> : vector<8x16xf32>
    %29 = tpu.matmul %16, %28, %cst_8 {dimension_numbers = #tpu.dot_dimension_numbers<[1], [0], [0], [1], [0, 0, 1, 1], [], []>} : vector<8x8xf32>, vector<8x16xf32>, vector<8x16xf32> -> vector<8x16xf32>
    %cst_9 = arith.constant dense<0.000000e+00> : vector<16x16xf32>
    %30 = tpu.matmul %22, %29, %cst_9 {dimension_numbers = #tpu.dot_dimension_numbers<[1], [0], [0], [1], [0, 0, 1, 1], [], []>} : vector<16x8xf32>, vector<8x16xf32>, vector<16x16xf32> -> vector<16x16xf32>
    %31 = tpu.iota {dimensions = array<i32: 1>} : vector<8x2x16xi32>
    %32 = vector.shape_cast %31 : vector<8x2x16xi32> to vector<16x16xi32>
    %33 = tpu.iota {dimensions = array<i32: 2>} : vector<16x8x2xi32>
    %34 = vector.shape_cast %33 : vector<16x8x2xi32> to vector<16x16xi32>
    %35 = arith.cmpi eq, %32, %34 : vector<16x16xi32>
    %cst_10 = arith.constant -1.000000e+09 : f32
    %36 = vector.broadcast %cst_10 : f32 to vector<16x16xf32>
    %37 = arith.select %35, %30, %36 : vector<16x16xi1>, vector<16x16xf32>
    %c0_11 = arith.constant 0 : index
    %c0_12 = arith.constant 0 : index
    %c0_13 = arith.constant 0 : index
    %38 = vector.load %arg4[%c0_11, %c0_12, %c0_13] : memref<2x8x128xf32, #tpu.memory_space<vmem>>, vector<1x8x128xf32>
    %39 = vector.shape_cast %38 : vector<1x8x128xf32> to vector<8x128xf32>
    %40 = vector.extract_strided_slice %39 {offsets = [0, 0], sizes = [1, 32], strides = [1, 1]} : vector<8x128xf32> to vector<1x32xf32>
    %41 = vector.extract_strided_slice %39 {offsets = [1, 0], sizes = [1, 32], strides = [1, 1]} : vector<8x128xf32> to vector<1x32xf32>
    %42 = vector.extract_strided_slice %39 {offsets = [2, 0], sizes = [1, 32], strides = [1, 1]} : vector<8x128xf32> to vector<1x32xf32>
    %43 = vector.extract_strided_slice %39 {offsets = [3, 0], sizes = [1, 64], strides = [1, 1]} : vector<8x128xf32> to vector<1x64xf32>
    %44 = vector.extract_strided_slice %39 {offsets = [4, 0], sizes = [1, 32], strides = [1, 1]} : vector<8x128xf32> to vector<1x32xf32>
    %45 = vector.extract_strided_slice %39 {offsets = [5, 0], sizes = [1, 32], strides = [1, 1]} : vector<8x128xf32> to vector<1x32xf32>
    %46 = vector.extract_strided_slice %39 {offsets = [6, 0], sizes = [1, 32], strides = [1, 1]} : vector<8x128xf32> to vector<1x32xf32>
    %47 = vector.extract_strided_slice %39 {offsets = [7, 0], sizes = [1, 96], strides = [1, 1]} : vector<8x128xf32> to vector<1x96xf32>
    %c0_14 = arith.constant 0 : index
    %c0_15 = arith.constant 0 : index
    %c0_16 = arith.constant 0 : index
    %48 = vector.load %arg3[%c0_14, %c0_15, %c0_16] : memref<2x160x96xbf16, #tpu.memory_space<vmem>>, vector<1x32x96xbf16>
    %49 = vector.shape_cast %48 : vector<1x32x96xbf16> to vector<32x96xbf16>
    %50 = arith.truncf %13 : vector<16x32xf32> to vector<16x32xbf16>
    %cst_17 = arith.constant dense<0.000000e+00> : vector<16x96xf32>
    %51 = tpu.matmul %50, %49, %cst_17 {dimension_numbers = #tpu.dot_dimension_numbers<[1], [0], [0], [1], [0, 0, 1, 1], [], []>} : vector<16x32xbf16>, vector<32x96xbf16>, vector<16x96xf32> -> vector<16x96xf32>
    %52 = vector.broadcast %47 : vector<1x96xf32> to vector<16x96xf32>
    %53 = arith.addf %51, %52 : vector<16x96xf32>
    %54 = vector.extract_strided_slice %53 {offsets = [0, 0], sizes = [16, 32], strides = [1, 1]} : vector<16x96xf32> to vector<16x32xf32>
    %55 = vector.shape_cast %54 : vector<16x32xf32> to vector<16x4x8xf32>
    %56 = tpu.transpose %55, [1, 0, 2] : vector<16x4x8xf32> -> vector<4x16x8xf32>
    %57 = vector.extract_strided_slice %53 {offsets = [0, 32], sizes = [16, 32], strides = [1, 1]} : vector<16x96xf32> to vector<16x32xf32>
    %58 = vector.shape_cast %57 : vector<16x32xf32> to vector<16x4x8xf32>
    %59 = tpu.transpose %58, [1, 0, 2] : vector<16x4x8xf32> -> vector<4x16x8xf32>
    %60 = vector.extract_strided_slice %53 {offsets = [0, 64], sizes = [16, 32], strides = [1, 1]} : vector<16x96xf32> to vector<16x32xf32>
    %61 = vector.shape_cast %60 : vector<16x32xf32> to vector<16x4x8xf32>
    %62 = tpu.transpose %61, [1, 0, 2] : vector<16x4x8xf32> -> vector<4x16x8xf32>
    "tpu.trace_start"() <{level = 10 : i32, message = "hqd,hkd->hqk"}> : () -> ()
    %cst_18 = arith.constant dense<0.000000e+00> : vector<4x16x16xf32>
    %63 = tpu.matmul %56, %59, %cst_18 {dimension_numbers = #tpu.dot_dimension_numbers<[2], [2], [1], [1], [0, 0, 0, 1, 1, 1], [0], [0]>} : vector<4x16x8xf32>, vector<4x16x8xf32>, vector<4x16x16xf32> -> vector<4x16x16xf32>
    "tpu.trace_stop"() : () -> ()
    %cst_19 = arith.constant 0.353553385 : f32
    %64 = vector.broadcast %cst_19 : f32 to vector<4x16x16xf32>
    %65 = arith.mulf %63, %64 : vector<4x16x16xf32>
    %66 = vector.shape_cast %37 : vector<16x16xf32> to vector<1x16x16xf32>
    %67 = vector.broadcast %66 : vector<1x16x16xf32> to vector<4x16x16xf32>
    %68 = arith.addf %65, %67 : vector<4x16x16xf32>
    %cst_20 = arith.constant dense<0xFF800000> : vector<4x16xf32>
    %69 = vector.multi_reduction <maximumf>, %68, %cst_20 [2] : vector<4x16x16xf32> to vector<4x16xf32>
    %70 = vector.shape_cast %69 : vector<4x16xf32> to vector<4x16x1xf32>
    %71 = vector.broadcast %70 : vector<4x16x1xf32> to vector<4x16x16xf32>
    %72 = arith.subf %68, %71 : vector<4x16x16xf32>
    %73 = math.exp %72 : vector<4x16x16xf32>
    %cst_21 = arith.constant dense<0.000000e+00> : vector<4x16xf32>
    %74 = vector.multi_reduction <add>, %73, %cst_21 [2] : vector<4x16x16xf32> to vector<4x16xf32>
    %75 = vector.shape_cast %74 : vector<4x16xf32> to vector<4x16x1xf32>
    %76 = tpu.reciprocal %75 {approx = true} : vector<4x16x1xf32> -> vector<4x16x1xf32>
    %77 = vector.broadcast %76 : vector<4x16x1xf32> to vector<4x16x16xf32>
    %78 = arith.mulf %73, %77 : vector<4x16x16xf32>
    "tpu.trace_start"() <{level = 10 : i32, message = "hqk,hkd->hqd"}> : () -> ()
    %cst_22 = arith.constant dense<0.000000e+00> : vector<4x16x8xf32>
    %79 = tpu.matmul %78, %62, %cst_22 {dimension_numbers = #tpu.dot_dimension_numbers<[2], [1], [1], [2], [0, 0, 0, 1, 1, 2], [0], [0]>} : vector<4x16x16xf32>, vector<4x16x8xf32>, vector<4x16x8xf32> -> vector<4x16x8xf32>
    "tpu.trace_stop"() : () -> ()
    %80 = tpu.transpose %79, [1, 0, 2] : vector<4x16x8xf32> -> vector<16x4x8xf32>
    %81 = vector.shape_cast %80 : vector<16x4x8xf32> to vector<16x32xf32>
    %c0_23 = arith.constant 0 : index
    %c96 = arith.constant 96 : index
    %c0_24 = arith.constant 0 : index
    %82 = vector.load %arg3[%c0_23, %c96, %c0_24] : memref<2x160x96xbf16, #tpu.memory_space<vmem>>, vector<1x32x32xbf16>
    %83 = vector.shape_cast %82 : vector<1x32x32xbf16> to vector<32x32xbf16>
    %84 = arith.truncf %81 : vector<16x32xf32> to vector<16x32xbf16>
    %cst_25 = arith.constant dense<0.000000e+00> : vector<16x32xf32>
    %85 = tpu.matmul %84, %83, %cst_25 {dimension_numbers = #tpu.dot_dimension_numbers<[1], [0], [0], [1], [0, 0, 1, 1], [], []>} : vector<16x32xbf16>, vector<32x32xbf16>, vector<16x32xf32> -> vector<16x32xf32>
    %86 = vector.broadcast %40 : vector<1x32xf32> to vector<16x32xf32>
    %87 = arith.addf %85, %86 : vector<16x32xf32>
    %88 = arith.addf %13, %87 : vector<16x32xf32>
    %cst_26 = arith.constant dense<0.000000e+00> : vector<16xf32>
    %89 = vector.multi_reduction <add>, %88, %cst_26 [1] : vector<16x32xf32> to vector<16xf32>
    %90 = vector.shape_cast %89 : vector<16xf32> to vector<16x1xf32>
    %cst_27 = arith.constant 3.200000e+01 : f32
    %91 = vector.broadcast %cst_27 : f32 to vector<16x1xf32>
    %92 = arith.divf %90, %91 : vector<16x1xf32>
    %93 = vector.broadcast %92 : vector<16x1xf32> to vector<16x32xf32>
    %94 = arith.subf %88, %93 : vector<16x32xf32>
    %95 = arith.mulf %94, %94 : vector<16x32xf32>
    %cst_28 = arith.constant dense<0.000000e+00> : vector<16xf32>
    %96 = vector.multi_reduction <add>, %95, %cst_28 [1] : vector<16x32xf32> to vector<16xf32>
    %97 = vector.shape_cast %96 : vector<16xf32> to vector<16x1xf32>
    %cst_29 = arith.constant 3.200000e+01 : f32
    %98 = vector.broadcast %cst_29 : f32 to vector<16x1xf32>
    %99 = arith.divf %97, %98 : vector<16x1xf32>
    %100 = vector.broadcast %92 : vector<16x1xf32> to vector<16x32xf32>
    %101 = arith.subf %88, %100 : vector<16x32xf32>
    %cst_30 = arith.constant 9.99999974E-6 : f32
    %102 = vector.broadcast %cst_30 : f32 to vector<16x1xf32>
    %103 = arith.addf %99, %102 : vector<16x1xf32>
    %104 = math.rsqrt %103 : vector<16x1xf32>
    %105 = vector.broadcast %104 : vector<16x1xf32> to vector<16x32xf32>
    %106 = arith.mulf %101, %105 : vector<16x32xf32>
    %107 = vector.broadcast %41 : vector<1x32xf32> to vector<16x32xf32>
    %108 = arith.mulf %106, %107 : vector<16x32xf32>
    %109 = vector.broadcast %42 : vector<1x32xf32> to vector<16x32xf32>
    %110 = arith.addf %108, %109 : vector<16x32xf32>
    %c0_31 = arith.constant 0 : index
    %c128 = arith.constant 128 : index
    %c0_32 = arith.constant 0 : index
    %111 = vector.load %arg3[%c0_31, %c128, %c0_32] : memref<2x160x96xbf16, #tpu.memory_space<vmem>>, vector<1x32x64xbf16>
    %112 = vector.shape_cast %111 : vector<1x32x64xbf16> to vector<32x64xbf16>
    %c0_33 = arith.constant 0 : index
    %c32 = arith.constant 32 : index
    %c0_34 = arith.constant 0 : index
    %113 = vector.load %arg3[%c0_33, %c32, %c0_34] : memref<2x160x96xbf16, #tpu.memory_space<vmem>>, vector<1x64x32xbf16>
    %114 = vector.shape_cast %113 : vector<1x64x32xbf16> to vector<64x32xbf16>
    %115 = arith.truncf %110 : vector<16x32xf32> to vector<16x32xbf16>
    %cst_35 = arith.constant dense<0.000000e+00> : vector<16x64xf32>
    %116 = tpu.matmul %115, %112, %cst_35 {dimension_numbers = #tpu.dot_dimension_numbers<[1], [0], [0], [1], [0, 0, 1, 1], [], []>} : vector<16x32xbf16>, vector<32x64xbf16>, vector<16x64xf32> -> vector<16x64xf32>
    %117 = vector.broadcast %43 : vector<1x64xf32> to vector<16x64xf32>
    %118 = arith.addf %116, %117 : vector<16x64xf32>
    %cst_36 = arith.constant 0.000000e+00 : f32
    %119 = vector.broadcast %cst_36 : f32 to vector<16x64xf32>
    %120 = arith.maximumf %118, %119 : vector<16x64xf32>
    %121 = arith.truncf %120 : vector<16x64xf32> to vector<16x64xbf16>
    %cst_37 = arith.constant dense<0.000000e+00> : vector<16x32xf32>
    %122 = tpu.matmul %121, %114, %cst_37 {dimension_numbers = #tpu.dot_dimension_numbers<[1], [0], [0], [1], [0, 0, 1, 1], [], []>} : vector<16x64xbf16>, vector<64x32xbf16>, vector<16x32xf32> -> vector<16x32xf32>
    %123 = vector.broadcast %44 : vector<1x32xf32> to vector<16x32xf32>
    %124 = arith.addf %122, %123 : vector<16x32xf32>
    %125 = arith.addf %110, %124 : vector<16x32xf32>
    %cst_38 = arith.constant dense<0.000000e+00> : vector<16xf32>
    %126 = vector.multi_reduction <add>, %125, %cst_38 [1] : vector<16x32xf32> to vector<16xf32>
    %127 = vector.shape_cast %126 : vector<16xf32> to vector<16x1xf32>
    %cst_39 = arith.constant 3.200000e+01 : f32
    %128 = vector.broadcast %cst_39 : f32 to vector<16x1xf32>
    %129 = arith.divf %127, %128 : vector<16x1xf32>
    %130 = vector.broadcast %129 : vector<16x1xf32> to vector<16x32xf32>
    %131 = arith.subf %125, %130 : vector<16x32xf32>
    %132 = arith.mulf %131, %131 : vector<16x32xf32>
    %cst_40 = arith.constant dense<0.000000e+00> : vector<16xf32>
    %133 = vector.multi_reduction <add>, %132, %cst_40 [1] : vector<16x32xf32> to vector<16xf32>
    %134 = vector.shape_cast %133 : vector<16xf32> to vector<16x1xf32>
    %cst_41 = arith.constant 3.200000e+01 : f32
    %135 = vector.broadcast %cst_41 : f32 to vector<16x1xf32>
    %136 = arith.divf %134, %135 : vector<16x1xf32>
    %137 = vector.broadcast %129 : vector<16x1xf32> to vector<16x32xf32>
    %138 = arith.subf %125, %137 : vector<16x32xf32>
    %cst_42 = arith.constant 9.99999974E-6 : f32
    %139 = vector.broadcast %cst_42 : f32 to vector<16x1xf32>
    %140 = arith.addf %136, %139 : vector<16x1xf32>
    %141 = math.rsqrt %140 : vector<16x1xf32>
    %142 = vector.broadcast %141 : vector<16x1xf32> to vector<16x32xf32>
    %143 = arith.mulf %138, %142 : vector<16x32xf32>
    %144 = vector.broadcast %45 : vector<1x32xf32> to vector<16x32xf32>
    %145 = arith.mulf %143, %144 : vector<16x32xf32>
    %146 = vector.broadcast %46 : vector<1x32xf32> to vector<16x32xf32>
    %147 = arith.addf %145, %146 : vector<16x32xf32>
    %c1 = arith.constant 1 : index
    %c0_43 = arith.constant 0 : index
    %c0_44 = arith.constant 0 : index
    %148 = vector.load %arg4[%c1, %c0_43, %c0_44] : memref<2x8x128xf32, #tpu.memory_space<vmem>>, vector<1x8x128xf32>
    %149 = vector.shape_cast %148 : vector<1x8x128xf32> to vector<8x128xf32>
    %150 = vector.extract_strided_slice %149 {offsets = [0, 0], sizes = [1, 32], strides = [1, 1]} : vector<8x128xf32> to vector<1x32xf32>
    %151 = vector.extract_strided_slice %149 {offsets = [1, 0], sizes = [1, 32], strides = [1, 1]} : vector<8x128xf32> to vector<1x32xf32>
    %152 = vector.extract_strided_slice %149 {offsets = [2, 0], sizes = [1, 32], strides = [1, 1]} : vector<8x128xf32> to vector<1x32xf32>
    %153 = vector.extract_strided_slice %149 {offsets = [3, 0], sizes = [1, 64], strides = [1, 1]} : vector<8x128xf32> to vector<1x64xf32>
    %154 = vector.extract_strided_slice %149 {offsets = [4, 0], sizes = [1, 32], strides = [1, 1]} : vector<8x128xf32> to vector<1x32xf32>
    %155 = vector.extract_strided_slice %149 {offsets = [5, 0], sizes = [1, 32], strides = [1, 1]} : vector<8x128xf32> to vector<1x32xf32>
    %156 = vector.extract_strided_slice %149 {offsets = [6, 0], sizes = [1, 32], strides = [1, 1]} : vector<8x128xf32> to vector<1x32xf32>
    %157 = vector.extract_strided_slice %149 {offsets = [7, 0], sizes = [1, 96], strides = [1, 1]} : vector<8x128xf32> to vector<1x96xf32>
    %c1_45 = arith.constant 1 : index
    %c0_46 = arith.constant 0 : index
    %c0_47 = arith.constant 0 : index
    %158 = vector.load %arg3[%c1_45, %c0_46, %c0_47] : memref<2x160x96xbf16, #tpu.memory_space<vmem>>, vector<1x32x96xbf16>
    %159 = vector.shape_cast %158 : vector<1x32x96xbf16> to vector<32x96xbf16>
    %160 = arith.truncf %147 : vector<16x32xf32> to vector<16x32xbf16>
    %cst_48 = arith.constant dense<0.000000e+00> : vector<16x96xf32>
    %161 = tpu.matmul %160, %159, %cst_48 {dimension_numbers = #tpu.dot_dimension_numbers<[1], [0], [0], [1], [0, 0, 1, 1], [], []>} : vector<16x32xbf16>, vector<32x96xbf16>, vector<16x96xf32> -> vector<16x96xf32>
    %162 = vector.broadcast %157 : vector<1x96xf32> to vector<16x96xf32>
    %163 = arith.addf %161, %162 : vector<16x96xf32>
    %164 = vector.extract_strided_slice %163 {offsets = [0, 0], sizes = [16, 32], strides = [1, 1]} : vector<16x96xf32> to vector<16x32xf32>
    %165 = vector.shape_cast %164 : vector<16x32xf32> to vector<16x4x8xf32>
    %166 = tpu.transpose %165, [1, 0, 2] : vector<16x4x8xf32> -> vector<4x16x8xf32>
    %167 = vector.extract_strided_slice %163 {offsets = [0, 32], sizes = [16, 32], strides = [1, 1]} : vector<16x96xf32> to vector<16x32xf32>
    %168 = vector.shape_cast %167 : vector<16x32xf32> to vector<16x4x8xf32>
    %169 = tpu.transpose %168, [1, 0, 2] : vector<16x4x8xf32> -> vector<4x16x8xf32>
    %170 = vector.extract_strided_slice %163 {offsets = [0, 64], sizes = [16, 32], strides = [1, 1]} : vector<16x96xf32> to vector<16x32xf32>
    %171 = vector.shape_cast %170 : vector<16x32xf32> to vector<16x4x8xf32>
    %172 = tpu.transpose %171, [1, 0, 2] : vector<16x4x8xf32> -> vector<4x16x8xf32>
    "tpu.trace_start"() <{level = 10 : i32, message = "hqd,hkd->hqk"}> : () -> ()
    %cst_49 = arith.constant dense<0.000000e+00> : vector<4x16x16xf32>
    %173 = tpu.matmul %166, %169, %cst_49 {dimension_numbers = #tpu.dot_dimension_numbers<[2], [2], [1], [1], [0, 0, 0, 1, 1, 1], [0], [0]>} : vector<4x16x8xf32>, vector<4x16x8xf32>, vector<4x16x16xf32> -> vector<4x16x16xf32>
    "tpu.trace_stop"() : () -> ()
    %cst_50 = arith.constant 0.353553385 : f32
    %174 = vector.broadcast %cst_50 : f32 to vector<4x16x16xf32>
    %175 = arith.mulf %173, %174 : vector<4x16x16xf32>
    %176 = vector.shape_cast %37 : vector<16x16xf32> to vector<1x16x16xf32>
    %177 = vector.broadcast %176 : vector<1x16x16xf32> to vector<4x16x16xf32>
    %178 = arith.addf %175, %177 : vector<4x16x16xf32>
    %cst_51 = arith.constant dense<0xFF800000> : vector<4x16xf32>
    %179 = vector.multi_reduction <maximumf>, %178, %cst_51 [2] : vector<4x16x16xf32> to vector<4x16xf32>
    %180 = vector.shape_cast %179 : vector<4x16xf32> to vector<4x16x1xf32>
    %181 = vector.broadcast %180 : vector<4x16x1xf32> to vector<4x16x16xf32>
    %182 = arith.subf %178, %181 : vector<4x16x16xf32>
    %183 = math.exp %182 : vector<4x16x16xf32>
    %cst_52 = arith.constant dense<0.000000e+00> : vector<4x16xf32>
    %184 = vector.multi_reduction <add>, %183, %cst_52 [2] : vector<4x16x16xf32> to vector<4x16xf32>
    %185 = vector.shape_cast %184 : vector<4x16xf32> to vector<4x16x1xf32>
    %186 = tpu.reciprocal %185 {approx = true} : vector<4x16x1xf32> -> vector<4x16x1xf32>
    %187 = vector.broadcast %186 : vector<4x16x1xf32> to vector<4x16x16xf32>
    %188 = arith.mulf %183, %187 : vector<4x16x16xf32>
    "tpu.trace_start"() <{level = 10 : i32, message = "hqk,hkd->hqd"}> : () -> ()
    %cst_53 = arith.constant dense<0.000000e+00> : vector<4x16x8xf32>
    %189 = tpu.matmul %188, %172, %cst_53 {dimension_numbers = #tpu.dot_dimension_numbers<[2], [1], [1], [2], [0, 0, 0, 1, 1, 2], [0], [0]>} : vector<4x16x16xf32>, vector<4x16x8xf32>, vector<4x16x8xf32> -> vector<4x16x8xf32>
    "tpu.trace_stop"() : () -> ()
    %190 = tpu.transpose %189, [1, 0, 2] : vector<4x16x8xf32> -> vector<16x4x8xf32>
    %191 = vector.shape_cast %190 : vector<16x4x8xf32> to vector<16x32xf32>
    %c1_54 = arith.constant 1 : index
    %c96_55 = arith.constant 96 : index
    %c0_56 = arith.constant 0 : index
    %192 = vector.load %arg3[%c1_54, %c96_55, %c0_56] : memref<2x160x96xbf16, #tpu.memory_space<vmem>>, vector<1x32x32xbf16>
    %193 = vector.shape_cast %192 : vector<1x32x32xbf16> to vector<32x32xbf16>
    %194 = arith.truncf %191 : vector<16x32xf32> to vector<16x32xbf16>
    %cst_57 = arith.constant dense<0.000000e+00> : vector<16x32xf32>
    %195 = tpu.matmul %194, %193, %cst_57 {dimension_numbers = #tpu.dot_dimension_numbers<[1], [0], [0], [1], [0, 0, 1, 1], [], []>} : vector<16x32xbf16>, vector<32x32xbf16>, vector<16x32xf32> -> vector<16x32xf32>
    %196 = vector.broadcast %150 : vector<1x32xf32> to vector<16x32xf32>
    %197 = arith.addf %195, %196 : vector<16x32xf32>
    %198 = arith.addf %147, %197 : vector<16x32xf32>
    %cst_58 = arith.constant dense<0.000000e+00> : vector<16xf32>
    %199 = vector.multi_reduction <add>, %198, %cst_58 [1] : vector<16x32xf32> to vector<16xf32>
    %200 = vector.shape_cast %199 : vector<16xf32> to vector<16x1xf32>
    %cst_59 = arith.constant 3.200000e+01 : f32
    %201 = vector.broadcast %cst_59 : f32 to vector<16x1xf32>
    %202 = arith.divf %200, %201 : vector<16x1xf32>
    %203 = vector.broadcast %202 : vector<16x1xf32> to vector<16x32xf32>
    %204 = arith.subf %198, %203 : vector<16x32xf32>
    %205 = arith.mulf %204, %204 : vector<16x32xf32>
    %cst_60 = arith.constant dense<0.000000e+00> : vector<16xf32>
    %206 = vector.multi_reduction <add>, %205, %cst_60 [1] : vector<16x32xf32> to vector<16xf32>
    %207 = vector.shape_cast %206 : vector<16xf32> to vector<16x1xf32>
    %cst_61 = arith.constant 3.200000e+01 : f32
    %208 = vector.broadcast %cst_61 : f32 to vector<16x1xf32>
    %209 = arith.divf %207, %208 : vector<16x1xf32>
    %210 = vector.broadcast %202 : vector<16x1xf32> to vector<16x32xf32>
    %211 = arith.subf %198, %210 : vector<16x32xf32>
    %cst_62 = arith.constant 9.99999974E-6 : f32
    %212 = vector.broadcast %cst_62 : f32 to vector<16x1xf32>
    %213 = arith.addf %209, %212 : vector<16x1xf32>
    %214 = math.rsqrt %213 : vector<16x1xf32>
    %215 = vector.broadcast %214 : vector<16x1xf32> to vector<16x32xf32>
    %216 = arith.mulf %211, %215 : vector<16x32xf32>
    %217 = vector.broadcast %151 : vector<1x32xf32> to vector<16x32xf32>
    %218 = arith.mulf %216, %217 : vector<16x32xf32>
    %219 = vector.broadcast %152 : vector<1x32xf32> to vector<16x32xf32>
    %220 = arith.addf %218, %219 : vector<16x32xf32>
    %c1_63 = arith.constant 1 : index
    %c128_64 = arith.constant 128 : index
    %c0_65 = arith.constant 0 : index
    %221 = vector.load %arg3[%c1_63, %c128_64, %c0_65] : memref<2x160x96xbf16, #tpu.memory_space<vmem>>, vector<1x32x64xbf16>
    %222 = vector.shape_cast %221 : vector<1x32x64xbf16> to vector<32x64xbf16>
    %c1_66 = arith.constant 1 : index
    %c32_67 = arith.constant 32 : index
    %c0_68 = arith.constant 0 : index
    %223 = vector.load %arg3[%c1_66, %c32_67, %c0_68] : memref<2x160x96xbf16, #tpu.memory_space<vmem>>, vector<1x64x32xbf16>
    %224 = vector.shape_cast %223 : vector<1x64x32xbf16> to vector<64x32xbf16>
    %225 = arith.truncf %220 : vector<16x32xf32> to vector<16x32xbf16>
    %cst_69 = arith.constant dense<0.000000e+00> : vector<16x64xf32>
    %226 = tpu.matmul %225, %222, %cst_69 {dimension_numbers = #tpu.dot_dimension_numbers<[1], [0], [0], [1], [0, 0, 1, 1], [], []>} : vector<16x32xbf16>, vector<32x64xbf16>, vector<16x64xf32> -> vector<16x64xf32>
    %227 = vector.broadcast %153 : vector<1x64xf32> to vector<16x64xf32>
    %228 = arith.addf %226, %227 : vector<16x64xf32>
    %cst_70 = arith.constant 0.000000e+00 : f32
    %229 = vector.broadcast %cst_70 : f32 to vector<16x64xf32>
    %230 = arith.maximumf %228, %229 : vector<16x64xf32>
    %231 = arith.truncf %230 : vector<16x64xf32> to vector<16x64xbf16>
    %cst_71 = arith.constant dense<0.000000e+00> : vector<16x32xf32>
    %232 = tpu.matmul %231, %224, %cst_71 {dimension_numbers = #tpu.dot_dimension_numbers<[1], [0], [0], [1], [0, 0, 1, 1], [], []>} : vector<16x64xbf16>, vector<64x32xbf16>, vector<16x32xf32> -> vector<16x32xf32>
    %233 = vector.broadcast %154 : vector<1x32xf32> to vector<16x32xf32>
    %234 = arith.addf %232, %233 : vector<16x32xf32>
    %235 = arith.addf %220, %234 : vector<16x32xf32>
    %cst_72 = arith.constant dense<0.000000e+00> : vector<16xf32>
    %236 = vector.multi_reduction <add>, %235, %cst_72 [1] : vector<16x32xf32> to vector<16xf32>
    %237 = vector.shape_cast %236 : vector<16xf32> to vector<16x1xf32>
    %cst_73 = arith.constant 3.200000e+01 : f32
    %238 = vector.broadcast %cst_73 : f32 to vector<16x1xf32>
    %239 = arith.divf %237, %238 : vector<16x1xf32>
    %240 = vector.broadcast %239 : vector<16x1xf32> to vector<16x32xf32>
    %241 = arith.subf %235, %240 : vector<16x32xf32>
    %242 = arith.mulf %241, %241 : vector<16x32xf32>
    %cst_74 = arith.constant dense<0.000000e+00> : vector<16xf32>
    %243 = vector.multi_reduction <add>, %242, %cst_74 [1] : vector<16x32xf32> to vector<16xf32>
    %244 = vector.shape_cast %243 : vector<16xf32> to vector<16x1xf32>
    %cst_75 = arith.constant 3.200000e+01 : f32
    %245 = vector.broadcast %cst_75 : f32 to vector<16x1xf32>
    %246 = arith.divf %244, %245 : vector<16x1xf32>
    %247 = vector.broadcast %239 : vector<16x1xf32> to vector<16x32xf32>
    %248 = arith.subf %235, %247 : vector<16x32xf32>
    %cst_76 = arith.constant 9.99999974E-6 : f32
    %249 = vector.broadcast %cst_76 : f32 to vector<16x1xf32>
    %250 = arith.addf %246, %249 : vector<16x1xf32>
    %251 = math.rsqrt %250 : vector<16x1xf32>
    %252 = vector.broadcast %251 : vector<16x1xf32> to vector<16x32xf32>
    %253 = arith.mulf %248, %252 : vector<16x32xf32>
    %254 = vector.broadcast %155 : vector<1x32xf32> to vector<16x32xf32>
    %255 = arith.mulf %253, %254 : vector<16x32xf32>
    %256 = vector.broadcast %156 : vector<1x32xf32> to vector<16x32xf32>
    %257 = arith.addf %255, %256 : vector<16x32xf32>
    %c80 = arith.constant 80 : index
    %c0_77 = arith.constant 0 : index
    %258 = vector.load %arg2[%c80, %c0_77] : memref<128x128xbf16, #tpu.memory_space<vmem>>, vector<32x128xbf16>
    %c112 = arith.constant 112 : index
    %c0_78 = arith.constant 0 : index
    %259 = vector.load %arg2[%c112, %c0_78] : memref<128x128xbf16, #tpu.memory_space<vmem>>, vector<1x128xbf16>
    %260 = arith.extf %259 : vector<1x128xbf16> to vector<1x128xf32>
    %261 = arith.truncf %257 : vector<16x32xf32> to vector<16x32xbf16>
    %cst_79 = arith.constant dense<0.000000e+00> : vector<16x128xf32>
    %262 = tpu.matmul %261, %258, %cst_79 {dimension_numbers = #tpu.dot_dimension_numbers<[1], [0], [0], [1], [0, 0, 1, 1], [], []>} : vector<16x32xbf16>, vector<32x128xbf16>, vector<16x128xf32> -> vector<16x128xf32>
    %263 = vector.broadcast %260 : vector<1x128xf32> to vector<16x128xf32>
    %264 = arith.addf %262, %263 : vector<16x128xf32>
    %c0_80 = arith.constant 0 : index
    %c0_81 = arith.constant 0 : index
    %265 = vector.load %arg5[%c0_80, %c0_81] : memref<16x128xf32, #tpu.memory_space<vmem>>, vector<16x128xf32>
    tpu.vector_store %arg5[%c0_80, %c0_81], %264 {strides = array<i32>} : memref<16x128xf32, #tpu.memory_space<vmem>>, vector<16x128xf32>,
    return
  }
}

</mosaic_0001>

<llo_original>
// kernel: transformer_forward.1
$region0: #{transformer_forward.1}
  #allocation0 [shape = 'u32[]', space=smem, size = 0x4, offset = 0x4, fixed_abs, tag = 'smem constant byte address 0x4 - core index']
  #allocation1 [shape = 'u32[144,128]{1,0:T(1,128)}', space=vmem, size = 0x12000, scoped, tag = 'internal scratch']
  %s0 = inlined_call_operand.vmem [shape: s32[16,1], index: 0, kind: input, shape index: {}]
  %s1 = inlined_call_operand.vmem [shape: f32[8,8], index: 1, kind: input, shape index: {}]
  %s2 = inlined_call_operand.hbm [shape: bf16[128,128], index: 2, kind: input, shape index: {}]
  %s3 = inlined_call_operand.hbm [shape: bf16[2,160,96], index: 3, kind: input, shape index: {}]
  %s4 = inlined_call_operand.vmem [shape: f32[2,8,128], index: 4, kind: input, shape index: {}]
  %s5 = inlined_call_operand.hbm [shape: f32[16,128], index: 5, kind: output, shape index: {}]
  %s6 = sld [smem:[#allocation0]]
  $region38: #{transformer_forward.1} parent=0
    _
  %s8 = ssub.s32 1, %s6
  %s9 = scalar_select 0, %s8, %s6
  $region1: #{transformer_forward.1} parent=0
    #allocation2 [shape = 'u8[32768]{0}', space=vmem, size = 0x8000, scoped, tag = 'input window, operand 2, single buffered']
    #allocation3 [shape = 's32[1]{0}', space=sflag, size = 0x4, scoped, tag = 'scoped memory for transformer_forward.1']
    #allocation4 [shape = 's32[1]{0}', space=sflag, size = 0x4, scoped, tag = 'scoped memory for transformer_forward.1']
    #allocation5 [shape = 'u8[81920]{0}', space=vmem, size = 0x14000, scoped, tag = 'input window, operand 3, single buffered']
    #allocation6 [shape = 's32[1]{0}', space=sflag, size = 0x4, scoped, tag = 'scoped memory for transformer_forward.1']
    #allocation7 [shape = 'u8[8192]{0}', space=vmem, size = 0x2000, scoped, tag = 'output window, operand 0, single buffered']
    %10 = vsyncpa [#allocation3], 0
    %11 = vsyncpa [#allocation6], 0
    %12 = vsyncpa [#allocation4], 0
    // Predicated region
    $region2: #{transformer_forward.1} parent=1 // pred_check
      _
    $region3: #{transformer_forward.1} parent=1 // pred_check_branch
      %14 = sbr.rel (0) target = $region5
    $region4: #{transformer_forward.1} parent=1 // pred_region
      _
    $region5: #{transformer_forward.1} parent=1 // pred_fallthru
      _
    // Predicated region
    $region6: #{transformer_forward.1} parent=1 // pred_check
      _
    $region7: #{transformer_forward.1} parent=1 // pred_check_branch
      %16 = sbr.rel (0) target = $region9
    $region8: #{transformer_forward.1} parent=1 // pred_region
      _
    $region9: #{transformer_forward.1} parent=1 // pred_fallthru
      _
    // Predicated region
    $region10: #{transformer_forward.1} parent=1 // pred_check
      _
    $region11: #{transformer_forward.1} parent=1 // pred_check_branch
      %18 = sbr.rel (0) target = $region13
    $region12: #{transformer_forward.1} parent=1 // pred_region
      %s20 = ssub.s32 1024, 1024
      %21 = vsyncadd [#allocation3], %s20
      %s22 = sshll.u32 [#allocation2], 4
      %s23 = int_to_ptr.vmem [resolvable:$true] %s22
      %28 = dma.hbm_to_vmem [thread:$0]  %s2, 1024, %s23, [#allocation3], 64, 64, 4
    $region13: #{transformer_forward.1} parent=1 // pred_fallthru
      _
    // Predicated region
    $region14: #{transformer_forward.1} parent=1 // pred_check
      _
    $region15: #{transformer_forward.1} parent=1 // pred_check_branch
      %30 = sbr.rel (0) target = $region17
    $region16: #{transformer_forward.1} parent=1 // pred_region
      %s32 = ssub.s32 2560, 2560
      %33 = vsyncadd [#allocation6], %s32
      %s34 = sshll.u32 [#allocation5], 4
      %s35 = int_to_ptr.vmem [resolvable:$true] %s34
      %40 = dma.hbm_to_vmem [thread:$0]  %s3, 2560, %s35, [#allocation6], 64, 64, 4
    $region17: #{transformer_forward.1} parent=1 // pred_fallthru
      _
    // Predicated region
    $region18: #{transformer_forward.1} parent=1 // pred_check
      _
    $region19: #{transformer_forward.1} parent=1 // pred_check_branch
      %42 = sbr.rel (0) target = $region21
    $region20: #{transformer_forward.1} parent=1 // pred_region
      _
    $region21: #{transformer_forward.1} parent=1 // pred_fallthru
      _
    // Predicated region
    $region22: #{transformer_forward.1} parent=1 // pred_check
      _
    $region23: #{transformer_forward.1} parent=1 // pred_check_branch
      %44 = sbr.rel (0) target = $region25
    $region24: #{transformer_forward.1} parent=1 // pred_region
      %45 = dma.done [#allocation3], 1024
    $region25: #{transformer_forward.1} parent=1 // pred_fallthru
      _
    // Predicated region
    $region26: #{transformer_forward.1} parent=1 // pred_check
      _
    $region27: #{transformer_forward.1} parent=1 // pred_check_branch
      %47 = sbr.rel (0) target = $region29
    $region28: #{transformer_forward.1} parent=1 // pred_region
      %48 = dma.done [#allocation6], 2560
    $region29: #{transformer_forward.1} parent=1 // pred_fallthru
      _
    %v50 = vld [vmem:[%s0] sm:$0xff]
    %v51 = vld [vmem:[%s0 + $0x8] sm:$0xff]
    %v52 = vlaneseq
    %v53 = vand.u32 %v52, 127
    %54 = vset.pattern.permute.xlu0 0
    %55 = vperm.xlu0 %54, %v50
    %v56 = vpop.permute.xlu0 %55
    %57 = vset.pattern.permute.xlu0 0
    %58 = vperm.xlu0 %57, %v51
    %v59 = vpop.permute.xlu0 %58
    %vm60 = vcmp.eq.s32.totalorder %v53, %v56
    %vm61 = vcmp.eq.s32.totalorder %v53, %v59
    %v62 = vsel %vm60, 1, 0
    %v63 = vsel %vm61, 1, 0
    %v64 = vcvt.s32.f32 %v62
    %v65 = vcvt.s32.f32 %v63
    %v66 = vpack.c.bf16 %v65, %v64
    %v67 = vld [vmem:[#allocation2] sm:$0xf]
    %v68 = vld [vmem:[#allocation2 + $0x4] sm:$0xf]
    %v69 = vld [vmem:[#allocation2 + $0x8] sm:$0xf]
    %v70 = vld [vmem:[#allocation2 + $0xc] sm:$0xf]
    %v71 = vld [vmem:[#allocation2 + $0x10] sm:$0xf]
    %v72 = vld [vmem:[#allocation2 + $0x14] sm:$0xf]
    %v73 = vld [vmem:[#allocation2 + $0x18] sm:$0xf]
    %v74 = vld [vmem:[#allocation2 + $0x1c] sm:$0xf]
    %v83 = vunpack.c.l.b16 %v67
    %v84 = vunpack.c.l.b16 %v68
    %v85 = vunpack.c.l.b16 %v69
    %v86 = vunpack.c.l.b16 %v70
    %v87 = vunpack.c.l.b16 %v71
    %v88 = vunpack.c.l.b16 %v72
    %v89 = vunpack.c.l.b16 %v73
    %v90 = vunpack.c.l.b16 %v74
    %v91 = vpack.c.b16 %v84, %v83
    %v92 = vpack.c.b16 %v86, %v85
    %v93 = vpack.c.b16 %v88, %v87
    %v94 = vpack.c.b16 %v90, %v89
    %vm99 = vcmask 523264
    %v101 = vsel %vm99, %v66, 0
    %103 = vmatprep.subr.bf16.mxu0 0
    %104 = vmatpush1.bf16.msra.mxu0 0
    %105 = vmatprep.subr.bf16.mxu0 0
    %106 = vmatpush1.bf16.msra.mxu0 0
    %107 = vmatprep.subr.bf16.mxu0 0
    %108 = vmatpush1.bf16.msra.mxu0 0
    %109 = vmatprep.subr.bf16.mxu0 0
    %110 = vmatpush1.bf16.msra.mxu0 0
    %111 = vmatprep.subr.bf16.mxu0 0
    %112 = vmatpush1.bf16.msra.mxu0 %v94
    %113 = vmatprep.subr.bf16.mxu0 0
    %114 = vmatpush1.bf16.msra.mxu0 %v93
    %115 = vmatprep.subr.bf16.mxu0 0
    %116 = vmatpush1.bf16.msra.mxu0 %v92
    %117 = vmatprep.subr.bf16.mxu0 0
    %118 = vmatpush1.bf16.msra.mxu0 %v91
    %119 = vmatprep.subr.bf16.mxu0 0
    %120 = vmatpush2.bf16.msra.mxu0 0
    %121 = vmatprep.subr.bf16.mxu0 0
    %122 = vmatpush2.bf16.msra.mxu0 0
    %123 = vmatprep.subr.bf16.mxu0 0
    %124 = vmatpush2.bf16.msra.mxu0 0
    %125 = vmatprep.subr.bf16.mxu0 0
    %126 = vmatpush2.bf16.msra.mxu0 0
    %127 = vmatprep.subr.bf16.mxu0 0
    %128 = vmatpush2.bf16.msra.mxu0 0
    %129 = vmatprep.subr.bf16.mxu0 0
    %130 = vmatpush2.bf16.msra.mxu0 0
    %131 = vmatprep.subr.bf16.mxu0 0
    %132 = vmatpush2.bf16.msra.mxu0 0
    %133 = vmatprep.subr.bf16.mxu0 0
    %134 = vmatpush2.bf16.msra.mxu0 0
    %135 = vmatprep.mubr.bf16.mxu0 0
    %136 = vmatmul.mubr.bf16.gmra.mxu0 %v101
    %v137 = vpop.f32.mrf.mxu0
    %v138 = vadd.f32 0.0, %v137
    %v139 = vpop.f32.mrf.mxu0
    %v140 = vpop.f32.mrf.mxu0
    %v141 = vadd.f32 0.0, %v140
    %v142 = vpop.f32.mrf.mxu0
    %143 = vdwg.mxu0
    %v144 = vmul.f32 %v138, 5.656854
    %v145 = vmul.f32 %v141, 5.656854
    %v146 = vld [vmem:[#allocation2 + $0x20] sm:$0xf]
    %v147 = vld [vmem:[#allocation2 + $0x24] sm:$0xf]
    %v148 = vunpack.c.l.bf16 %v146
    %v149 = vunpack.c.l.bf16 %v147
    %v150 = vadd.f32 %v144, %v148
    %v151 = vadd.f32 %v145, %v149
    %v152 = vld [vmem:[%s1] sm:$0xff]
    %v153 = vmax.f32 %v152, -1e+09
    %vm154 = vcmp.eq.s32.totalorder %v53, 0
    %vm155 = vcmp.eq.s32.totalorder %v53, 1
    %vm156 = vcmp.eq.s32.totalorder %v53, 2
    %vm157 = vcmp.eq.s32.totalorder %v53, 3
    %vm158 = vcmp.eq.s32.totalorder %v53, 4
    %vm159 = vcmp.eq.s32.totalorder %v53, 5
    %vm160 = vcmp.eq.s32.totalorder %v53, 6
    %vm161 = vcmp.eq.s32.totalorder %v53, 7
    %v162 = vsel %vm154, 1, 0
    %v163 = vsel %vm155, 1, 0
    %v164 = vsel %vm156, 1, 0
    %v165 = vsel %vm157, 1, 0
    %v166 = vsel %vm158, 1, 0
    %v167 = vsel %vm159, 1, 0
    %v168 = vsel %vm160, 1, 0
    %v169 = vsel %vm161, 1, 0
    %v170 = vcvt.s32.f32 %v162
    %v171 = vcvt.s32.f32 %v163
    %v172 = vcvt.s32.f32 %v164
    %v173 = vcvt.s32.f32 %v165
    %v174 = vcvt.s32.f32 %v166
    %v175 = vcvt.s32.f32 %v167
    %v176 = vcvt.s32.f32 %v168
    %v177 = vcvt.s32.f32 %v169
    %v178 = vlaneseq
    %v179 = vshrl.u32 %v178, 7
    %vm180 = vcmp.eq.s32.totalorder %v179, 0
    %vm181 = vcmp.eq.s32.totalorder %v179, 1
    %vm182 = vcmp.eq.s32.totalorder %v179, 2
    %vm183 = vcmp.eq.s32.totalorder %v179, 3
    %vm184 = vcmp.eq.s32.totalorder %v179, 4
    %vm185 = vcmp.eq.s32.totalorder %v179, 5
    %vm186 = vcmp.eq.s32.totalorder %v179, 6
    %vm187 = vcmp.eq.s32.totalorder %v179, 7
    %v188 = vsel %vm180, 1, 0
    %v189 = vsel %vm181, 1, 0
    %v190 = vsel %vm182, 1, 0
    %v191 = vsel %vm183, 1, 0
    %v192 = vsel %vm184, 1, 0
    %v193 = vsel %vm185, 1, 0
    %v194 = vsel %vm186, 1, 0
    %v195 = vsel %vm187, 1, 0
    %v196 = vcvt.s32.f32 %v188
    %v197 = vcvt.s32.f32 %v189
    %v198 = vcvt.s32.f32 %v190
    %v199 = vcvt.s32.f32 %v191
    %v200 = vcvt.s32.f32 %v192
    %v201 = vcvt.s32.f32 %v193
    %v202 = vcvt.s32.f32 %v194
    %v203 = vcvt.s32.f32 %v195
    %v204 = vcombine.low %v196, %v198
    %v205 = vcombine.high %v196, %v198
    %v207 = vunpack.c.l.s4 1983009808
    %v208 = vunpack.c.0.s8 %v207
    %v209 = vlaneseq
    %v210 = vshrl.u32 %v209, 7
    %v211 = vsub.s32 %v208, %v210
    %v212 = vrot.slane %v204, %v211
    %v214 = vunpack.c.l.s4 1983009808
    %v215 = vunpack.c.0.s8 %v214
    %v216 = vlaneseq
    %v217 = vshrl.u32 %v216, 7
    %v218 = vsub.s32 %v215, %v217
    %v219 = vrot.slane %v205, %v218
    %v220 = vcombine.low %v197, %v199
    %v221 = vcombine.high %v197, %v199
    %v223 = vunpack.c.l.s4 1983009808
    %v224 = vunpack.c.0.s8 %v223
    %v225 = vlaneseq
    %v226 = vshrl.u32 %v225, 7
    %v227 = vsub.s32 %v224, %v226
    %v228 = vrot.slane %v220, %v227
    %v230 = vunpack.c.l.s4 1983009808
    %v231 = vunpack.c.0.s8 %v230
    %v232 = vlaneseq
    %v233 = vshrl.u32 %v232, 7
    %v234 = vsub.s32 %v231, %v233
    %v235 = vrot.slane %v221, %v234
    %v236 = vcombine.low %v200, %v202
    %v237 = vcombine.high %v200, %v202
    %v239 = vunpack.c.l.s4 1983009808
    %v240 = vunpack.c.0.s8 %v239
    %v241 = vlaneseq
    %v242 = vshrl.u32 %v241, 7
    %v243 = vsub.s32 %v240, %v242
    %v244 = vrot.slane %v236, %v243
    %v246 = vunpack.c.l.s4 1983009808
    %v247 = vunpack.c.0.s8 %v246
    %v248 = vlaneseq
    %v249 = vshrl.u32 %v248, 7
    %v250 = vsub.s32 %v247, %v249
    %v251 = vrot.slane %v237, %v250
    %v252 = vcombine.low %v201, %v203
    %v253 = vcombine.high %v201, %v203
    %v255 = vunpack.c.l.s4 1983009808
    %v256 = vunpack.c.0.s8 %v255
    %v257 = vlaneseq
    %v258 = vshrl.u32 %v257, 7
    %v259 = vsub.s32 %v256, %v258
    %v260 = vrot.slane %v252, %v259
    %v262 = vunpack.c.l.s4 1983009808
    %v263 = vunpack.c.0.s8 %v262
    %v264 = vlaneseq
    %v265 = vshrl.u32 %v264, 7
    %v266 = vsub.s32 %v263, %v265
    %v267 = vrot.slane %v253, %v266
    %v268 = vcombine.low %v212, %v228
    %v269 = vcombine.high %v212, %v228
    %v271 = vunpack.c.l.s4 1934713408
    %v272 = vunpack.c.0.s8 %v271
    %v273 = vlaneseq
    %v274 = vshrl.u32 %v273, 7
    %v275 = vsub.s32 %v272, %v274
    %v276 = vrot.slane %v268, %v275
    %v278 = vunpack.c.l.s4 1934713408
    %v279 = vunpack.c.0.s8 %v278
    %v280 = vlaneseq
    %v281 = vshrl.u32 %v280, 7
    %v282 = vsub.s32 %v279, %v281
    %v283 = vrot.slane %v269, %v282
    %v284 = vcombine.low %v219, %v235
    %v285 = vcombine.high %v219, %v235
    %v287 = vunpack.c.l.s4 1934713408
    %v288 = vunpack.c.0.s8 %v287
    %v289 = vlaneseq
    %v290 = vshrl.u32 %v289, 7
    %v291 = vsub.s32 %v288, %v290
    %v292 = vrot.slane %v284, %v291
    %v294 = vunpack.c.l.s4 1934713408
    %v295 = vunpack.c.0.s8 %v294
    %v296 = vlaneseq
    %v297 = vshrl.u32 %v296, 7
    %v298 = vsub.s32 %v295, %v297
    %v299 = vrot.slane %v285, %v298
    %v300 = vcombine.low %v244, %v260
    %v301 = vcombine.high %v244, %v260
    %v303 = vunpack.c.l.s4 1934713408
    %v304 = vunpack.c.0.s8 %v303
    %v305 = vlaneseq
    %v306 = vshrl.u32 %v305, 7
    %v307 = vsub.s32 %v304, %v306
    %v308 = vrot.slane %v300, %v307
    %v310 = vunpack.c.l.s4 1934713408
    %v311 = vunpack.c.0.s8 %v310
    %v312 = vlaneseq
    %v313 = vshrl.u32 %v312, 7
    %v314 = vsub.s32 %v311, %v313
    %v315 = vrot.slane %v301, %v314
    %v316 = vcombine.low %v251, %v267
    %v317 = vcombine.high %v251, %v267
    %v319 = vunpack.c.l.s4 1934713408
    %v320 = vunpack.c.0.s8 %v319
    %v321 = vlaneseq
    %v322 = vshrl.u32 %v321, 7
    %v323 = vsub.s32 %v320, %v322
    %v324 = vrot.slane %v316, %v323
    %v326 = vunpack.c.l.s4 1934713408
    %v327 = vunpack.c.0.s8 %v326
    %v328 = vlaneseq
    %v329 = vshrl.u32 %v328, 7
    %v330 = vsub.s32 %v327, %v329
    %v331 = vrot.slane %v317, %v330
    %v332 = vcombine.low %v276, %v308
    %v333 = vcombine.high %v276, %v308
    %v334 = vcombine.low %v283, %v315
    %v335 = vcombine.high %v283, %v315
    %v336 = vcombine.low %v292, %v324
    %v337 = vcombine.high %v292, %v324
    %v338 = vcombine.low %v299, %v331
    %v339 = vcombine.high %v299, %v331
    %341 = vrot.lane.b32.xlu0 %v333, 2
    %v342 = vpop.permute.xlu0 %341
    %345 = vrot.lane.b32.xlu0 %v334, 4
    %v346 = vpop.permute.xlu0 %345
    %349 = vrot.lane.b32.xlu0 %v335, 6
    %v350 = vpop.permute.xlu0 %349
    %353 = vrot.lane.b32.xlu0 %v336, 8
    %v354 = vpop.permute.xlu0 %353
    %357 = vrot.lane.b32.xlu0 %v337, 10
    %v358 = vpop.permute.xlu0 %357
    %361 = vrot.lane.b32.xlu0 %v338, 12
    %v362 = vpop.permute.xlu0 %361
    %365 = vrot.lane.b32.xlu0 %v339, 14
    %v366 = vpop.permute.xlu0 %365
    %vm368 = vcmask 15360
    %v369 = vsel %vm368, %v332, %v342
    %vm370 = vcmask 31744
    %v371 = vsel %vm370, %v369, %v346
    %vm372 = vcmask 48128
    %v373 = vsel %vm372, %v371, %v350
    %vm374 = vcmask 64512
    %v375 = vsel %vm374, %v373, %v354
    %vm376 = vcmask 80896
    %v377 = vsel %vm376, %v375, %v358
    %vm378 = vcmask 97280
    %v379 = vsel %vm378, %v377, %v362
    %vm380 = vcmask 113664
    %v381 = vsel %vm380, %v379, %v366
    %v383 = vsel %vm374, %v153, 0
    %385 = vmatprep.subr.mxu0 0.0
    %386 = vmatpush1.msra.mxu0 0.0
    %387 = vmatprep.subr.mxu0 0.0
    %388 = vmatpush1.msra.mxu0 0.0
    %389 = vmatprep.subr.mxu0 0.0
    %390 = vmatpush1.msra.mxu0 0.0
    %391 = vmatprep.subr.mxu0 0.0
    %392 = vmatpush1.msra.mxu0 0.0
    %393 = vmatprep.subr.mxu0 0.0
    %394 = vmatpush1.msra.mxu0 0.0
    %395 = vmatprep.subr.mxu0 0.0
    %396 = vmatpush1.msra.mxu0 0.0
    %397 = vmatprep.subr.mxu0 0.0
    %398 = vmatpush1.msra.mxu0 0.0
    %399 = vmatprep.subr.mxu0 0.0
    %400 = vmatpush1.msra.mxu0 0.0
    %401 = vmatprep.subr.mxu0 0.0
    %402 = vmatpush1.msra.mxu0 0.0
    %403 = vmatprep.subr.mxu0 0.0
    %404 = vmatpush1.msra.mxu0 0.0
    %405 = vmatprep.subr.mxu0 0.0
    %406 = vmatpush1.msra.mxu0 0.0
    %407 = vmatprep.subr.mxu0 0.0
    %408 = vmatpush1.msra.mxu0 0.0
    %409 = vmatprep.subr.mxu0 0.0
    %410 = vmatpush1.msra.mxu0 0.0
    %411 = vmatprep.subr.mxu0 0.0
    %412 = vmatpush1.msra.mxu0 0.0
    %413 = vmatprep.subr.mxu0 0.0
    %414 = vmatpush1.msra.mxu0 0.0
    %415 = vmatprep.subr.mxu0 0.0
    %416 = vmatpush1.msra.mxu0 %v381
    %417 = vmatprep.subr.mxu0 0.0
    %418 = vmatpush2.msra.mxu0 0.0
    %419 = vmatprep.subr.mxu0 0.0
    %420 = vmatpush2.msra.mxu0 0.0
    %421 = vmatprep.subr.mxu0 0.0
    %422 = vmatpush2.msra.mxu0 0.0
    %423 = vmatprep.subr.mxu0 0.0
    %424 = vmatpush2.msra.mxu0 0.0
    %425 = vmatprep.subr.mxu0 0.0
    %426 = vmatpush2.msra.mxu0 0.0
    %427 = vmatprep.subr.mxu0 0.0
    %428 = vmatpush2.msra.mxu0 0.0
    %429 = vmatprep.subr.mxu0 0.0
    %430 = vmatpush2.msra.mxu0 0.0
    %431 = vmatprep.subr.mxu0 0.0
    %432 = vmatpush2.msra.mxu0 0.0
    %433 = vmatprep.subr.mxu0 0.0
    %434 = vmatpush2.msra.mxu0 0.0
    %435 = vmatprep.subr.mxu0 0.0
    %436 = vmatpush2.msra.mxu0 0.0
    %437 = vmatprep.subr.mxu0 0.0
    %438 = vmatpush2.msra.mxu0 0.0
    %439 = vmatprep.subr.mxu0 0.0
    %440 = vmatpush2.msra.mxu0 0.0
    %441 = vmatprep.subr.mxu0 0.0
    %442 = vmatpush2.msra.mxu0 0.0
    %443 = vmatprep.subr.mxu0 0.0
    %444 = vmatpush2.msra.mxu0 0.0
    %445 = vmatprep.subr.mxu0 0.0
    %446 = vmatpush2.msra.mxu0 0.0
    %447 = vmatprep.subr.mxu0 0.0
    %448 = vmatpush2.msra.mxu0 0.0
    %449 = vmatprep.mubr.f32.mxu0 0.0
    %450 = vmatmul.mubr.f32.gmra.mxu0 %v383
    %v451 = vpop.f32.mrf.mxu0
    %v452 = vadd.f32 0.0, %v451
    %v453 = vpop.f32.mrf.mxu0
    %454 = vdwg.mxu0
    %v463 = vcombine.low %v170, %v171
    %v464 = vcombine.low %v172, %v173
    %v466 = vunpack.c.l.s4 1983009808
    %v467 = vunpack.c.0.s8 %v466
    %v468 = vlaneseq
    %v469 = vshrl.u32 %v468, 7
    %v470 = vsub.s32 %v467, %v469
    %v471 = vrot.slane %v463, %v470
    %v473 = vunpack.c.l.s4 1983009808
    %v474 = vunpack.c.0.s8 %v473
    %v475 = vlaneseq
    %v476 = vshrl.u32 %v475, 7
    %v477 = vsub.s32 %v474, %v476
    %v478 = vrot.slane %v464, %v477
    %v479 = vcombine.low %v471, %v478
    %v480 = vcombine.low %v174, %v175
    %v481 = vcombine.low %v176, %v177
    %v483 = vunpack.c.l.s4 1983009808
    %v484 = vunpack.c.0.s8 %v483
    %v485 = vlaneseq
    %v486 = vshrl.u32 %v485, 7
    %v487 = vsub.s32 %v484, %v486
    %v488 = vrot.slane %v480, %v487
    %v490 = vunpack.c.l.s4 1983009808
    %v491 = vunpack.c.0.s8 %v490
    %v492 = vlaneseq
    %v493 = vshrl.u32 %v492, 7
    %v494 = vsub.s32 %v491, %v493
    %v495 = vrot.slane %v481, %v494
    %v496 = vcombine.low %v488, %v495
    %v497 = vsel %vm374, %v479, 0
    %v499 = vsel %vm374, %v496, 0
    %501 = vmatprep.subr.mxu0 0.0
    %502 = vmatpush1.msra.mxu0 0.0
    %503 = vmatprep.subr.mxu0 0.0
    %504 = vmatpush1.msra.mxu0 0.0
    %505 = vmatprep.subr.mxu0 0.0
    %506 = vmatpush1.msra.mxu0 0.0
    %507 = vmatprep.subr.mxu0 0.0
    %508 = vmatpush1.msra.mxu0 0.0
    %509 = vmatprep.subr.mxu0 0.0
    %510 = vmatpush1.msra.mxu0 0.0
    %511 = vmatprep.subr.mxu0 0.0
    %512 = vmatpush1.msra.mxu0 0.0
    %513 = vmatprep.subr.mxu0 0.0
    %514 = vmatpush1.msra.mxu0 0.0
    %515 = vmatprep.subr.mxu0 0.0
    %516 = vmatpush1.msra.mxu0 0.0
    %517 = vmatprep.subr.mxu0 0.0
    %518 = vmatpush1.msra.mxu0 0.0
    %519 = vmatprep.subr.mxu0 0.0
    %520 = vmatpush1.msra.mxu0 0.0
    %521 = vmatprep.subr.mxu0 0.0
    %522 = vmatpush1.msra.mxu0 0.0
    %523 = vmatprep.subr.mxu0 0.0
    %524 = vmatpush1.msra.mxu0 0.0
    %525 = vmatprep.subr.mxu0 0.0
    %526 = vmatpush1.msra.mxu0 0.0
    %527 = vmatprep.subr.mxu0 0.0
    %528 = vmatpush1.msra.mxu0 0.0
    %529 = vmatprep.subr.mxu0 0.0
    %530 = vmatpush1.msra.mxu0 0.0
    %531 = vmatprep.subr.mxu0 0.0
    %532 = vmatpush1.msra.mxu0 %v452
    %533 = vmatprep.subr.mxu0 0.0
    %534 = vmatpush2.msra.mxu0 0.0
    %535 = vmatprep.subr.mxu0 0.0
    %536 = vmatpush2.msra.mxu0 0.0
    %537 = vmatprep.subr.mxu0 0.0
    %538 = vmatpush2.msra.mxu0 0.0
    %539 = vmatprep.subr.mxu0 0.0
    %540 = vmatpush2.msra.mxu0 0.0
    %541 = vmatprep.subr.mxu0 0.0
    %542 = vmatpush2.msra.mxu0 0.0
    %543 = vmatprep.subr.mxu0 0.0
    %544 = vmatpush2.msra.mxu0 0.0
    %545 = vmatprep.subr.mxu0 0.0
    %546 = vmatpush2.msra.mxu0 0.0
    %547 = vmatprep.subr.mxu0 0.0
    %548 = vmatpush2.msra.mxu0 0.0
    %549 = vmatprep.subr.mxu0 0.0
    %550 = vmatpush2.msra.mxu0 0.0
    %551 = vmatprep.subr.mxu0 0.0
    %552 = vmatpush2.msra.mxu0 0.0
    %553 = vmatprep.subr.mxu0 0.0
    %554 = vmatpush2.msra.mxu0 0.0
    %555 = vmatprep.subr.mxu0 0.0
    %556 = vmatpush2.msra.mxu0 0.0
    %557 = vmatprep.subr.mxu0 0.0
    %558 = vmatpush2.msra.mxu0 0.0
    %559 = vmatprep.subr.mxu0 0.0
    %560 = vmatpush2.msra.mxu0 0.0
    %561 = vmatprep.subr.mxu0 0.0
    %562 = vmatpush2.msra.mxu0 0.0
    %563 = vmatprep.subr.mxu0 0.0
    %564 = vmatpush2.msra.mxu0 0.0
    %565 = vmatprep.mubr.f32.mxu0 0.0
    %566 = vmatmul.mubr.f32.gmra.mxu0 %v497
    %v567 = vpop.f32.mrf.mxu0
    %v568 = vadd.f32 0.0, %v567
    %v569 = vpop.f32.mrf.mxu0
    %570 = vmatprep.mubr.f32.mxu0 0.0
    %571 = vmatmul.mubr.f32.gmra.mxu0 %v499
    %v572 = vpop.f32.mrf.mxu0
    %v573 = vadd.f32 0.0, %v572
    %v574 = vpop.f32.mrf.mxu0
    %575 = vdwg.mxu0
    %v576 = vcombine.low %v53, %v53
    %v577 = vcombine.high %v53, %v53
    %v579 = vunpack.c.l.s4 1983009808
    %v580 = vunpack.c.0.s8 %v579
    %v581 = vlaneseq
    %v582 = vshrl.u32 %v581, 7
    %v583 = vsub.s32 %v580, %v582
    %v584 = vrot.slane %v576, %v583
    %v586 = vunpack.c.l.s4 1983009808
    %v587 = vunpack.c.0.s8 %v586
    %v588 = vlaneseq
    %v589 = vshrl.u32 %v588, 7
    %v590 = vsub.s32 %v587, %v589
    %v591 = vrot.slane %v577, %v590
    %v592 = vcombine.low %v584, %v584
    %v593 = vcombine.high %v584, %v584
    %v595 = vunpack.c.l.s4 1934713408
    %v596 = vunpack.c.0.s8 %v595
    %v597 = vlaneseq
    %v598 = vshrl.u32 %v597, 7
    %v599 = vsub.s32 %v596, %v598
    %v600 = vrot.slane %v592, %v599
    %v602 = vunpack.c.l.s4 1934713408
    %v603 = vunpack.c.0.s8 %v602
    %v604 = vlaneseq
    %v605 = vshrl.u32 %v604, 7
    %v606 = vsub.s32 %v603, %v605
    %v607 = vrot.slane %v593, %v606
    %v608 = vcombine.low %v591, %v591
    %v609 = vcombine.high %v591, %v591
    %v611 = vunpack.c.l.s4 1934713408
    %v612 = vunpack.c.0.s8 %v611
    %v613 = vlaneseq
    %v614 = vshrl.u32 %v613, 7
    %v615 = vsub.s32 %v612, %v614
    %v616 = vrot.slane %v608, %v615
    %v618 = vunpack.c.l.s4 1934713408
    %v619 = vunpack.c.0.s8 %v618
    %v620 = vlaneseq
    %v621 = vshrl.u32 %v620, 7
    %v622 = vsub.s32 %v619, %v621
    %v623 = vrot.slane %v609, %v622
    %v624 = vcombine.low %v600, %v600
    %v625 = vcombine.high %v600, %v600
    %v626 = vcombine.low %v607, %v607
    %v627 = vcombine.high %v607, %v607
    %v628 = vcombine.low %v616, %v616
    %v629 = vcombine.high %v616, %v616
    %v630 = vcombine.low %v623, %v623
    %v631 = vcombine.high %v623, %v623
    %632 = vrot.lane.b32.xlu0 %v625, 2
    %v633 = vpop.permute.xlu0 %632
    %634 = vrot.lane.b32.xlu0 %v626, 4
    %v635 = vpop.permute.xlu0 %634
    %636 = vrot.lane.b32.xlu0 %v627, 6
    %v637 = vpop.permute.xlu0 %636
    %638 = vrot.lane.b32.xlu0 %v628, 8
    %v639 = vpop.permute.xlu0 %638
    %640 = vrot.lane.b32.xlu0 %v629, 10
    %v641 = vpop.permute.xlu0 %640
    %642 = vrot.lane.b32.xlu0 %v630, 12
    %v643 = vpop.permute.xlu0 %642
    %644 = vrot.lane.b32.xlu0 %v631, 14
    %v645 = vpop.permute.xlu0 %644
    %v646 = vsel %vm368, %v624, %v633
    %v647 = vsel %vm370, %v646, %v635
    %v648 = vsel %vm372, %v647, %v637
    %v649 = vsel %vm374, %v648, %v639
    %v650 = vsel %vm376, %v649, %v641
    %v651 = vsel %vm378, %v650, %v643
    %v652 = vsel %vm380, %v651, %v645
    %v653 = vcombine.high %v652, %v652
    %v655 = vunpack.c.l.s4 1983009808
    %v656 = vunpack.c.0.s8 %v655
    %v657 = vlaneseq
    %v658 = vshrl.u32 %v657, 7
    %v659 = vsub.s32 %v656, %v658
    %v660 = vrot.slane %v652, %v659
    %v662 = vunpack.c.l.s4 1983009808
    %v663 = vunpack.c.0.s8 %v662
    %v664 = vlaneseq
    %v665 = vshrl.u32 %v664, 7
    %v666 = vsub.s32 %v663, %v665
    %v667 = vrot.slane %v653, %v666
    %v668 = vcombine.high %v660, %v660
    %v669 = vcombine.high %v667, %v667
    %vm670 = vcmp.eq.s32.totalorder %v179, %v660
    %vm671 = vcmp.eq.s32.totalorder %v179, %v668
    %vm672 = vcmp.eq.s32.totalorder %v179, %v667
    %vm673 = vcmp.eq.s32.totalorder %v179, %v669
    %v676 = vcombine.high %v568, %v568
    %v678 = vunpack.c.l.s4 1983009808
    %v679 = vunpack.c.0.s8 %v678
    %v680 = vlaneseq
    %v681 = vshrl.u32 %v680, 7
    %v682 = vsub.s32 %v679, %v681
    %v683 = vrot.slane %v568, %v682
    %v685 = vunpack.c.l.s4 1983009808
    %v686 = vunpack.c.0.s8 %v685
    %v687 = vlaneseq
    %v688 = vshrl.u32 %v687, 7
    %v689 = vsub.s32 %v686, %v688
    %v690 = vrot.slane %v676, %v689
    %v691 = vcombine.high %v683, %v683
    %v692 = vcombine.high %v690, %v690
    %v693 = vcombine.high %v573, %v573
    %v695 = vunpack.c.l.s4 1983009808
    %v696 = vunpack.c.0.s8 %v695
    %v697 = vlaneseq
    %v698 = vshrl.u32 %v697, 7
    %v699 = vsub.s32 %v696, %v698
    %v700 = vrot.slane %v573, %v699
    %v702 = vunpack.c.l.s4 1983009808
    %v703 = vunpack.c.0.s8 %v702
    %v704 = vlaneseq
    %v705 = vshrl.u32 %v704, 7
    %v706 = vsub.s32 %v703, %v705
    %v707 = vrot.slane %v693, %v706
    %v708 = vcombine.high %v700, %v700
    %v709 = vcombine.high %v707, %v707
    %v718 = vsel %vm670, %v683, -1e+09
    %v719 = vsel %vm671, %v691, -1e+09
    %v720 = vsel %vm672, %v690, -1e+09
    %v721 = vsel %vm673, %v692, -1e+09
    %v722 = vsel %vm670, %v700, -1e+09
    %v723 = vsel %vm671, %v708, -1e+09
    %v724 = vsel %vm672, %v707, -1e+09
    %v725 = vsel %vm673, %v709, -1e+09
    %v726 = vld [vmem:[%s4] sm:$0xff]
    %v727 = vld [vmem:[#allocation5] sm:$0xf]
    %v728 = vld [vmem:[#allocation5 + $0x4] sm:$0xf]
    %v729 = vld [vmem:[#allocation5 + $0x8] sm:$0xf]
    %v730 = vld [vmem:[#allocation5 + $0xc] sm:$0xf]
    %v731 = vpack.c.bf16 %v151, %v150
    %v732 = vlaneseq
    %v733 = vshrl.u32 %v732, 7
    %v734 = vsub.s32 7, %v733
    %v735 = vrot.slane %v726, %v734
    %v740 = vunpack.c.l.b16 %v727
    %v741 = vunpack.c.l.b16 %v728
    %v742 = vunpack.c.l.b16 %v729
    %v743 = vunpack.c.l.b16 %v730
    %v744 = vpack.c.b16 %v741, %v740
    %v745 = vpack.c.b16 %v743, %v742
    %vm748 = vcmask 261120
    %v750 = vsel %vm748, %v731, 0
    %752 = vmatprep.subr.bf16.mxu0 0
    %753 = vmatpush1.bf16.msra.mxu0 0
    %754 = vmatprep.subr.bf16.mxu0 0
    %755 = vmatpush1.bf16.msra.mxu0 0
    %756 = vmatprep.subr.bf16.mxu0 0
    %757 = vmatpush1.bf16.msra.mxu0 0
    %758 = vmatprep.subr.bf16.mxu0 0
    %759 = vmatpush1.bf16.msra.mxu0 0
    %760 = vmatprep.subr.bf16.mxu0 0
    %761 = vmatpush1.bf16.msra.mxu0 0
    %762 = vmatprep.subr.bf16.mxu0 0
    %763 = vmatpush1.bf16.msra.mxu0 0
    %764 = vmatprep.subr.bf16.mxu0 0
    %765 = vmatpush1.bf16.msra.mxu0 %v745
    %766 = vmatprep.subr.bf16.mxu0 0
    %767 = vmatpush1.bf16.msra.mxu0 %v744
    %768 = vmatprep.subr.bf16.mxu0 0
    %769 = vmatpush2.bf16.msra.mxu0 0
    %770 = vmatprep.subr.bf16.mxu0 0
    %771 = vmatpush2.bf16.msra.mxu0 0
    %772 = vmatprep.subr.bf16.mxu0 0
    %773 = vmatpush2.bf16.msra.mxu0 0
    %774 = vmatprep.subr.bf16.mxu0 0
    %775 = vmatpush2.bf16.msra.mxu0 0
    %776 = vmatprep.subr.bf16.mxu0 0
    %777 = vmatpush2.bf16.msra.mxu0 0
    %778 = vmatprep.subr.bf16.mxu0 0
    %779 = vmatpush2.bf16.msra.mxu0 0
    %780 = vmatprep.subr.bf16.mxu0 0
    %781 = vmatpush2.bf16.msra.mxu0 0
    %782 = vmatprep.subr.bf16.mxu0 0
    %783 = vmatpush2.bf16.msra.mxu0 0
    %784 = vmatprep.mubr.bf16.mxu0 0
    %785 = vmatmul.mubr.bf16.gmra.mxu0 %v750
    %v786 = vpop.f32.mrf.mxu0
    %v787 = vadd.f32 %v735, %v786
    %v788 = vpop.f32.mrf.mxu0
    %v789 = vpop.f32.mrf.mxu0
    %v790 = vadd.f32 %v735, %v789
    %v791 = vpop.f32.mrf.mxu0
    %792 = vdwg.mxu0
    %795 = vrot.lane.b32.xlu0 %v787, 120
    %v796 = vpop.permute.xlu0 %795
    %797 = vrot.lane.b32.xlu0 %v790, 120
    %v798 = vpop.permute.xlu0 %797
    %801 = vrot.lane.b32.xlu0 %v787, 112
    %v802 = vpop.permute.xlu0 %801
    %803 = vrot.lane.b32.xlu0 %v790, 112
    %v804 = vpop.permute.xlu0 %803
    %807 = vrot.lane.b32.xlu0 %v787, 104
    %v808 = vpop.permute.xlu0 %807
    %809 = vrot.lane.b32.xlu0 %v790, 104
    %v810 = vpop.permute.xlu0 %809
    %v813 = vcombine.low %v787, %v802
    %v814 = vcombine.high %v787, %v802
    %v816 = vunpack.c.l.s4 1983009808
    %v817 = vunpack.c.0.s8 %v816
    %v818 = vlaneseq
    %v819 = vshrl.u32 %v818, 7
    %v820 = vsub.s32 %v817, %v819
    %v821 = vrot.slane %v813, %v820
    %v823 = vunpack.c.l.s4 1983009808
    %v824 = vunpack.c.0.s8 %v823
    %v825 = vlaneseq
    %v826 = vshrl.u32 %v825, 7
    %v827 = vsub.s32 %v824, %v826
    %v828 = vrot.slane %v814, %v827
    %v829 = vcombine.low %v796, %v808
    %v830 = vcombine.high %v796, %v808
    %v832 = vunpack.c.l.s4 1983009808
    %v833 = vunpack.c.0.s8 %v832
    %v834 = vlaneseq
    %v835 = vshrl.u32 %v834, 7
    %v836 = vsub.s32 %v833, %v835
    %v837 = vrot.slane %v829, %v836
    %v839 = vunpack.c.l.s4 1983009808
    %v840 = vunpack.c.0.s8 %v839
    %v841 = vlaneseq
    %v842 = vshrl.u32 %v841, 7
    %v843 = vsub.s32 %v840, %v842
    %v844 = vrot.slane %v830, %v843
    %v845 = vcombine.low %v821, %v837
    %v846 = vcombine.high %v821, %v837
    %v848 = vunpack.c.l.s4 1934713408
    %v849 = vunpack.c.0.s8 %v848
    %v850 = vlaneseq
    %v851 = vshrl.u32 %v850, 7
    %v852 = vsub.s32 %v849, %v851
    %v853 = vrot.slane %v845, %v852
    %v855 = vunpack.c.l.s4 1934713408
    %v856 = vunpack.c.0.s8 %v855
    %v857 = vlaneseq
    %v858 = vshrl.u32 %v857, 7
    %v859 = vsub.s32 %v856, %v858
    %v860 = vrot.slane %v846, %v859
    %v861 = vcombine.low %v828, %v844
    %v862 = vcombine.high %v828, %v844
    %v864 = vunpack.c.l.s4 1934713408
    %v865 = vunpack.c.0.s8 %v864
    %v866 = vlaneseq
    %v867 = vshrl.u32 %v866, 7
    %v868 = vsub.s32 %v865, %v867
    %v869 = vrot.slane %v861, %v868
    %v871 = vunpack.c.l.s4 1934713408
    %v872 = vunpack.c.0.s8 %v871
    %v873 = vlaneseq
    %v874 = vshrl.u32 %v873, 7
    %v875 = vsub.s32 %v872, %v874
    %v876 = vrot.slane %v862, %v875
    %v877 = vcombine.high %v853, 0.0
    %v878 = vcombine.high %v860, 0.0
    %v879 = vcombine.high %v869, 0.0
    %v880 = vcombine.high %v876, 0.0
    %v881 = vcombine.low %v790, %v804
    %v882 = vcombine.high %v790, %v804
    %v884 = vunpack.c.l.s4 1983009808
    %v885 = vunpack.c.0.s8 %v884
    %v886 = vlaneseq
    %v887 = vshrl.u32 %v886, 7
    %v888 = vsub.s32 %v885, %v887
    %v889 = vrot.slane %v881, %v888
    %v891 = vunpack.c.l.s4 1983009808
    %v892 = vunpack.c.0.s8 %v891
    %v893 = vlaneseq
    %v894 = vshrl.u32 %v893, 7
    %v895 = vsub.s32 %v892, %v894
    %v896 = vrot.slane %v882, %v895
    %v897 = vcombine.low %v798, %v810
    %v898 = vcombine.high %v798, %v810
    %v900 = vunpack.c.l.s4 1983009808
    %v901 = vunpack.c.0.s8 %v900
    %v902 = vlaneseq
    %v903 = vshrl.u32 %v902, 7
    %v904 = vsub.s32 %v901, %v903
    %v905 = vrot.slane %v897, %v904
    %v907 = vunpack.c.l.s4 1983009808
    %v908 = vunpack.c.0.s8 %v907
    %v909 = vlaneseq
    %v910 = vshrl.u32 %v909, 7
    %v911 = vsub.s32 %v908, %v910
    %v912 = vrot.slane %v898, %v911
    %v913 = vcombine.low %v889, %v905
    %v914 = vcombine.high %v889, %v905
    %v916 = vunpack.c.l.s4 1934713408
    %v917 = vunpack.c.0.s8 %v916
    %v918 = vlaneseq
    %v919 = vshrl.u32 %v918, 7
    %v920 = vsub.s32 %v917, %v919
    %v921 = vrot.slane %v913, %v920
    %v923 = vunpack.c.l.s4 1934713408
    %v924 = vunpack.c.0.s8 %v923
    %v925 = vlaneseq
    %v926 = vshrl.u32 %v925, 7
    %v927 = vsub.s32 %v924, %v926
    %v928 = vrot.slane %v914, %v927
    %v929 = vcombine.low %v896, %v912
    %v930 = vcombine.high %v896, %v912
    %v932 = vunpack.c.l.s4 1934713408
    %v933 = vunpack.c.0.s8 %v932
    %v934 = vlaneseq
    %v935 = vshrl.u32 %v934, 7
    %v936 = vsub.s32 %v933, %v935
    %v937 = vrot.slane %v929, %v936
    %v939 = vunpack.c.l.s4 1934713408
    %v940 = vunpack.c.0.s8 %v939
    %v941 = vlaneseq
    %v942 = vshrl.u32 %v941, 7
    %v943 = vsub.s32 %v940, %v942
    %v944 = vrot.slane %v930, %v943
    %v945 = vcombine.high %v921, 0.0
    %v946 = vcombine.high %v928, 0.0
    %v947 = vcombine.high %v937, 0.0
    %v948 = vcombine.high %v944, 0.0
    %v949 = vcombine.low %v853, %v860
    %v951 = vunpack.c.l.s4 1983009808
    %v952 = vunpack.c.0.s8 %v951
    %v953 = vlaneseq
    %v954 = vshrl.u32 %v953, 7
    %v955 = vsub.s32 %v952, %v954
    %v956 = vrot.slane %v949, %v955
    %v957 = vcombine.low %v877, %v878
    %v959 = vunpack.c.l.s4 1983009808
    %v960 = vunpack.c.0.s8 %v959
    %v961 = vlaneseq
    %v962 = vshrl.u32 %v961, 7
    %v963 = vsub.s32 %v960, %v962
    %v964 = vrot.slane %v957, %v963
    %v965 = vcombine.low %v869, %v876
    %v967 = vunpack.c.l.s4 1983009808
    %v968 = vunpack.c.0.s8 %v967
    %v969 = vlaneseq
    %v970 = vshrl.u32 %v969, 7
    %v971 = vsub.s32 %v968, %v970
    %v972 = vrot.slane %v965, %v971
    %v973 = vcombine.low %v879, %v880
    %v975 = vunpack.c.l.s4 1983009808
    %v976 = vunpack.c.0.s8 %v975
    %v977 = vlaneseq
    %v978 = vshrl.u32 %v977, 7
    %v979 = vsub.s32 %v976, %v978
    %v980 = vrot.slane %v973, %v979
    %v981 = vcombine.low %v956, %v964
    %v982 = vcombine.high %v956, %v964
    %v984 = vunpack.c.l.s4 1934713408
    %v985 = vunpack.c.0.s8 %v984
    %v986 = vlaneseq
    %v987 = vshrl.u32 %v986, 7
    %v988 = vsub.s32 %v985, %v987
    %v989 = vrot.slane %v981, %v988
    %v991 = vunpack.c.l.s4 1934713408
    %v992 = vunpack.c.0.s8 %v991
    %v993 = vlaneseq
    %v994 = vshrl.u32 %v993, 7
    %v995 = vsub.s32 %v992, %v994
    %v996 = vrot.slane %v982, %v995
    %v997 = vcombine.low %v972, %v980
    %v998 = vcombine.high %v972, %v980
    %v1000 = vunpack.c.l.s4 1934713408
    %v1001 = vunpack.c.0.s8 %v1000
    %v1002 = vlaneseq
    %v1003 = vshrl.u32 %v1002, 7
    %v1004 = vsub.s32 %v1001, %v1003
    %v1005 = vrot.slane %v997, %v1004
    %v1007 = vunpack.c.l.s4 1934713408
    %v1008 = vunpack.c.0.s8 %v1007
    %v1009 = vlaneseq
    %v1010 = vshrl.u32 %v1009, 7
    %v1011 = vsub.s32 %v1008, %v1010
    %v1012 = vrot.slane %v998, %v1011
    %v1013 = vcombine.low %v989, %v1005
    %v1014 = vcombine.high %v989, %v1005
    %v1015 = vcombine.low %v996, %v1012
    %v1016 = vcombine.high %v996, %v1012
    %v1017 = vcombine.low %v921, %v928
    %v1019 = vunpack.c.l.s4 1983009808
    %v1020 = vunpack.c.0.s8 %v1019
    %v1021 = vlaneseq
    %v1022 = vshrl.u32 %v1021, 7
    %v1023 = vsub.s32 %v1020, %v1022
    %v1024 = vrot.slane %v1017, %v1023
    %v1025 = vcombine.low %v945, %v946
    %v1027 = vunpack.c.l.s4 1983009808
    %v1028 = vunpack.c.0.s8 %v1027
    %v1029 = vlaneseq
    %v1030 = vshrl.u32 %v1029, 7
    %v1031 = vsub.s32 %v1028, %v1030
    %v1032 = vrot.slane %v1025, %v1031
    %v1033 = vcombine.low %v937, %v944
    %v1035 = vunpack.c.l.s4 1983009808
    %v1036 = vunpack.c.0.s8 %v1035
    %v1037 = vlaneseq
    %v1038 = vshrl.u32 %v1037, 7
    %v1039 = vsub.s32 %v1036, %v1038
    %v1040 = vrot.slane %v1033, %v1039
    %v1041 = vcombine.low %v947, %v948
    %v1043 = vunpack.c.l.s4 1983009808
    %v1044 = vunpack.c.0.s8 %v1043
    %v1045 = vlaneseq
    %v1046 = vshrl.u32 %v1045, 7
    %v1047 = vsub.s32 %v1044, %v1046
    %v1048 = vrot.slane %v1041, %v1047
    %v1049 = vcombine.low %v1024, %v1032
    %v1050 = vcombine.high %v1024, %v1032
    %v1052 = vunpack.c.l.s4 1934713408
    %v1053 = vunpack.c.0.s8 %v1052
    %v1054 = vlaneseq
    %v1055 = vshrl.u32 %v1054, 7
    %v1056 = vsub.s32 %v1053, %v1055
    %v1057 = vrot.slane %v1049, %v1056
    %v1059 = vunpack.c.l.s4 1934713408
    %v1060 = vunpack.c.0.s8 %v1059
    %v1061 = vlaneseq
    %v1062 = vshrl.u32 %v1061, 7
    %v1063 = vsub.s32 %v1060, %v1062
    %v1064 = vrot.slane %v1050, %v1063
    %v1065 = vcombine.low %v1040, %v1048
    %v1066 = vcombine.high %v1040, %v1048
    %v1068 = vunpack.c.l.s4 1934713408
    %v1069 = vunpack.c.0.s8 %v1068
    %v1070 = vlaneseq
    %v1071 = vshrl.u32 %v1070, 7
    %v1072 = vsub.s32 %v1069, %v1071
    %v1073 = vrot.slane %v1065, %v1072
    %v1075 = vunpack.c.l.s4 1934713408
    %v1076 = vunpack.c.0.s8 %v1075
    %v1077 = vlaneseq
    %v1078 = vshrl.u32 %v1077, 7
    %v1079 = vsub.s32 %v1076, %v1078
    %v1080 = vrot.slane %v1066, %v1079
    %v1081 = vcombine.low %v1057, %v1073
    %v1082 = vcombine.high %v1057, %v1073
    %v1083 = vcombine.low %v1064, %v1080
    %v1084 = vcombine.high %v1064, %v1080
    %1085 = vrot.lane.b32.xlu0 %v787, 96
    %v1086 = vpop.permute.xlu0 %1085
    %1087 = vrot.lane.b32.xlu0 %v790, 96
    %v1088 = vpop.permute.xlu0 %1087
    %1089 = vrot.lane.b32.xlu0 %v796, 96
    %v1090 = vpop.permute.xlu0 %1089
    %1091 = vrot.lane.b32.xlu0 %v798, 96
    %v1092 = vpop.permute.xlu0 %1091
    %1093 = vrot.lane.b32.xlu0 %v802, 96
    %v1094 = vpop.permute.xlu0 %1093
    %1095 = vrot.lane.b32.xlu0 %v804, 96
    %v1096 = vpop.permute.xlu0 %1095
    %1097 = vrot.lane.b32.xlu0 %v808, 96
    %v1098 = vpop.permute.xlu0 %1097
    %1099 = vrot.lane.b32.xlu0 %v810, 96
    %v1100 = vpop.permute.xlu0 %1099
    %v1109 = vcombine.low %v1086, %v1094
    %v1110 = vcombine.high %v1086, %v1094
    %v1112 = vunpack.c.l.s4 1983009808
    %v1113 = vunpack.c.0.s8 %v1112
    %v1114 = vlaneseq
    %v1115 = vshrl.u32 %v1114, 7
    %v1116 = vsub.s32 %v1113, %v1115
    %v1117 = vrot.slane %v1109, %v1116
    %v1119 = vunpack.c.l.s4 1983009808
    %v1120 = vunpack.c.0.s8 %v1119
    %v1121 = vlaneseq
    %v1122 = vshrl.u32 %v1121, 7
    %v1123 = vsub.s32 %v1120, %v1122
    %v1124 = vrot.slane %v1110, %v1123
    %v1125 = vcombine.low %v1090, %v1098
    %v1126 = vcombine.high %v1090, %v1098
    %v1128 = vunpack.c.l.s4 1983009808
    %v1129 = vunpack.c.0.s8 %v1128
    %v1130 = vlaneseq
    %v1131 = vshrl.u32 %v1130, 7
    %v1132 = vsub.s32 %v1129, %v1131
    %v1133 = vrot.slane %v1125, %v1132
    %v1135 = vunpack.c.l.s4 1983009808
    %v1136 = vunpack.c.0.s8 %v1135
    %v1137 = vlaneseq
    %v1138 = vshrl.u32 %v1137, 7
    %v1139 = vsub.s32 %v1136, %v1138
    %v1140 = vrot.slane %v1126, %v1139
    %v1141 = vcombine.low %v1117, %v1133
    %v1142 = vcombine.high %v1117, %v1133
    %v1144 = vunpack.c.l.s4 1934713408
    %v1145 = vunpack.c.0.s8 %v1144
    %v1146 = vlaneseq
    %v1147 = vshrl.u32 %v1146, 7
    %v1148 = vsub.s32 %v1145, %v1147
    %v1149 = vrot.slane %v1141, %v1148
    %v1151 = vunpack.c.l.s4 1934713408
    %v1152 = vunpack.c.0.s8 %v1151
    %v1153 = vlaneseq
    %v1154 = vshrl.u32 %v1153, 7
    %v1155 = vsub.s32 %v1152, %v1154
    %v1156 = vrot.slane %v1142, %v1155
    %v1157 = vcombine.low %v1124, %v1140
    %v1158 = vcombine.high %v1124, %v1140
    %v1160 = vunpack.c.l.s4 1934713408
    %v1161 = vunpack.c.0.s8 %v1160
    %v1162 = vlaneseq
    %v1163 = vshrl.u32 %v1162, 7
    %v1164 = vsub.s32 %v1161, %v1163
    %v1165 = vrot.slane %v1157, %v1164
    %v1167 = vunpack.c.l.s4 1934713408
    %v1168 = vunpack.c.0.s8 %v1167
    %v1169 = vlaneseq
    %v1170 = vshrl.u32 %v1169, 7
    %v1171 = vsub.s32 %v1168, %v1170
    %v1172 = vrot.slane %v1158, %v1171
    %v1173 = vcombine.high %v1149, 0.0
    %v1174 = vcombine.high %v1156, 0.0
    %v1175 = vcombine.high %v1165, 0.0
    %v1176 = vcombine.high %v1172, 0.0
    %v1177 = vcombine.low %v1088, %v1096
    %v1178 = vcombine.high %v1088, %v1096
    %v1180 = vunpack.c.l.s4 1983009808
    %v1181 = vunpack.c.0.s8 %v1180
    %v1182 = vlaneseq
    %v1183 = vshrl.u32 %v1182, 7
    %v1184 = vsub.s32 %v1181, %v1183
    %v1185 = vrot.slane %v1177, %v1184
    %v1187 = vunpack.c.l.s4 1983009808
    %v1188 = vunpack.c.0.s8 %v1187
    %v1189 = vlaneseq
    %v1190 = vshrl.u32 %v1189, 7
    %v1191 = vsub.s32 %v1188, %v1190
    %v1192 = vrot.slane %v1178, %v1191
    %v1193 = vcombine.low %v1092, %v1100
    %v1194 = vcombine.high %v1092, %v1100
    %v1196 = vunpack.c.l.s4 1983009808
    %v1197 = vunpack.c.0.s8 %v1196
    %v1198 = vlaneseq
    %v1199 = vshrl.u32 %v1198, 7
    %v1200 = vsub.s32 %v1197, %v1199
    %v1201 = vrot.slane %v1193, %v1200
    %v1203 = vunpack.c.l.s4 1983009808
    %v1204 = vunpack.c.0.s8 %v1203
    %v1205 = vlaneseq
    %v1206 = vshrl.u32 %v1205, 7
    %v1207 = vsub.s32 %v1204, %v1206
    %v1208 = vrot.slane %v1194, %v1207
    %v1209 = vcombine.low %v1185, %v1201
    %v1210 = vcombine.high %v1185, %v1201
    %v1212 = vunpack.c.l.s4 1934713408
    %v1213 = vunpack.c.0.s8 %v1212
    %v1214 = vlaneseq
    %v1215 = vshrl.u32 %v1214, 7
    %v1216 = vsub.s32 %v1213, %v1215
    %v1217 = vrot.slane %v1209, %v1216
    %v1219 = vunpack.c.l.s4 1934713408
    %v1220 = vunpack.c.0.s8 %v1219
    %v1221 = vlaneseq
    %v1222 = vshrl.u32 %v1221, 7
    %v1223 = vsub.s32 %v1220, %v1222
    %v1224 = vrot.slane %v1210, %v1223
    %v1225 = vcombine.low %v1192, %v1208
    %v1226 = vcombine.high %v1192, %v1208
    %v1228 = vunpack.c.l.s4 1934713408
    %v1229 = vunpack.c.0.s8 %v1228
    %v1230 = vlaneseq
    %v1231 = vshrl.u32 %v1230, 7
    %v1232 = vsub.s32 %v1229, %v1231
    %v1233 = vrot.slane %v1225, %v1232
    %v1235 = vunpack.c.l.s4 1934713408
    %v1236 = vunpack.c.0.s8 %v1235
    %v1237 = vlaneseq
    %v1238 = vshrl.u32 %v1237, 7
    %v1239 = vsub.s32 %v1236, %v1238
    %v1240 = vrot.slane %v1226, %v1239
    %v1241 = vcombine.high %v1217, 0.0
    %v1242 = vcombine.high %v1224, 0.0
    %v1243 = vcombine.high %v1233, 0.0
    %v1244 = vcombine.high %v1240, 0.0
    %v1245 = vcombine.low %v1149, %v1156
    %v1247 = vunpack.c.l.s4 1983009808
    %v1248 = vunpack.c.0.s8 %v1247
    %v1249 = vlaneseq
    %v1250 = vshrl.u32 %v1249, 7
    %v1251 = vsub.s32 %v1248, %v1250
    %v1252 = vrot.slane %v1245, %v1251
    %v1253 = vcombine.low %v1173, %v1174
    %v1255 = vunpack.c.l.s4 1983009808
    %v1256 = vunpack.c.0.s8 %v1255
    %v1257 = vlaneseq
    %v1258 = vshrl.u32 %v1257, 7
    %v1259 = vsub.s32 %v1256, %v1258
    %v1260 = vrot.slane %v1253, %v1259
    %v1261 = vcombine.low %v1165, %v1172
    %v1263 = vunpack.c.l.s4 1983009808
    %v1264 = vunpack.c.0.s8 %v1263
    %v1265 = vlaneseq
    %v1266 = vshrl.u32 %v1265, 7
    %v1267 = vsub.s32 %v1264, %v1266
    %v1268 = vrot.slane %v1261, %v1267
    %v1269 = vcombine.low %v1175, %v1176
    %v1271 = vunpack.c.l.s4 1983009808
    %v1272 = vunpack.c.0.s8 %v1271
    %v1273 = vlaneseq
    %v1274 = vshrl.u32 %v1273, 7
    %v1275 = vsub.s32 %v1272, %v1274
    %v1276 = vrot.slane %v1269, %v1275
    %v1277 = vcombine.low %v1252, %v1260
    %v1278 = vcombine.high %v1252, %v1260
    %v1280 = vunpack.c.l.s4 1934713408
    %v1281 = vunpack.c.0.s8 %v1280
    %v1282 = vlaneseq
    %v1283 = vshrl.u32 %v1282, 7
    %v1284 = vsub.s32 %v1281, %v1283
    %v1285 = vrot.slane %v1277, %v1284
    %v1287 = vunpack.c.l.s4 1934713408
    %v1288 = vunpack.c.0.s8 %v1287
    %v1289 = vlaneseq
    %v1290 = vshrl.u32 %v1289, 7
    %v1291 = vsub.s32 %v1288, %v1290
    %v1292 = vrot.slane %v1278, %v1291
    %v1293 = vcombine.low %v1268, %v1276
    %v1294 = vcombine.high %v1268, %v1276
    %v1296 = vunpack.c.l.s4 1934713408
    %v1297 = vunpack.c.0.s8 %v1296
    %v1298 = vlaneseq
    %v1299 = vshrl.u32 %v1298, 7
    %v1300 = vsub.s32 %v1297, %v1299
    %v1301 = vrot.slane %v1293, %v1300
    %v1303 = vunpack.c.l.s4 1934713408
    %v1304 = vunpack.c.0.s8 %v1303
    %v1305 = vlaneseq
    %v1306 = vshrl.u32 %v1305, 7
    %v1307 = vsub.s32 %v1304, %v1306
    %v1308 = vrot.slane %v1294, %v1307
    %v1309 = vcombine.low %v1285, %v1301
    %v1310 = vcombine.high %v1285, %v1301
    %v1311 = vcombine.low %v1292, %v1308
    %v1312 = vcombine.high %v1292, %v1308
    %v1313 = vcombine.low %v1217, %v1224
    %v1315 = vunpack.c.l.s4 1983009808
    %v1316 = vunpack.c.0.s8 %v1315
    %v1317 = vlaneseq
    %v1318 = vshrl.u32 %v1317, 7
    %v1319 = vsub.s32 %v1316, %v1318
    %v1320 = vrot.slane %v1313, %v1319
    %v1321 = vcombine.low %v1241, %v1242
    %v1323 = vunpack.c.l.s4 1983009808
    %v1324 = vunpack.c.0.s8 %v1323
    %v1325 = vlaneseq
    %v1326 = vshrl.u32 %v1325, 7
    %v1327 = vsub.s32 %v1324, %v1326
    %v1328 = vrot.slane %v1321, %v1327
    %v1329 = vcombine.low %v1233, %v1240
    %v1331 = vunpack.c.l.s4 1983009808
    %v1332 = vunpack.c.0.s8 %v1331
    %v1333 = vlaneseq
    %v1334 = vshrl.u32 %v1333, 7
    %v1335 = vsub.s32 %v1332, %v1334
    %v1336 = vrot.slane %v1329, %v1335
    %v1337 = vcombine.low %v1243, %v1244
    %v1339 = vunpack.c.l.s4 1983009808
    %v1340 = vunpack.c.0.s8 %v1339
    %v1341 = vlaneseq
    %v1342 = vshrl.u32 %v1341, 7
    %v1343 = vsub.s32 %v1340, %v1342
    %v1344 = vrot.slane %v1337, %v1343
    %v1345 = vcombine.low %v1320, %v1328
    %v1346 = vcombine.high %v1320, %v1328
    %v1348 = vunpack.c.l.s4 1934713408
    %v1349 = vunpack.c.0.s8 %v1348
    %v1350 = vlaneseq
    %v1351 = vshrl.u32 %v1350, 7
    %v1352 = vsub.s32 %v1349, %v1351
    %v1353 = vrot.slane %v1345, %v1352
    %v1355 = vunpack.c.l.s4 1934713408
    %v1356 = vunpack.c.0.s8 %v1355
    %v1357 = vlaneseq
    %v1358 = vshrl.u32 %v1357, 7
    %v1359 = vsub.s32 %v1356, %v1358
    %v1360 = vrot.slane %v1346, %v1359
    %v1361 = vcombine.low %v1336, %v1344
    %v1362 = vcombine.high %v1336, %v1344
    %v1364 = vunpack.c.l.s4 1934713408
    %v1365 = vunpack.c.0.s8 %v1364
    %v1366 = vlaneseq
    %v1367 = vshrl.u32 %v1366, 7
    %v1368 = vsub.s32 %v1365, %v1367
    %v1369 = vrot.slane %v1361, %v1368
    %v1371 = vunpack.c.l.s4 1934713408
    %v1372 = vunpack.c.0.s8 %v1371
    %v1373 = vlaneseq
    %v1374 = vshrl.u32 %v1373, 7
    %v1375 = vsub.s32 %v1372, %v1374
    %v1376 = vrot.slane %v1362, %v1375
    %v1377 = vcombine.low %v1353, %v1369
    %v1378 = vcombine.high %v1353, %v1369
    %v1379 = vcombine.low %v1360, %v1376
    %v1380 = vcombine.high %v1360, %v1376
    %1381 = vrot.lane.b32.xlu0 %v787, 64
    %v1382 = vpop.permute.xlu0 %1381
    %1383 = vrot.lane.b32.xlu0 %v790, 64
    %v1384 = vpop.permute.xlu0 %1383
    %1385 = vrot.lane.b32.xlu0 %v796, 64
    %v1386 = vpop.permute.xlu0 %1385
    %1387 = vrot.lane.b32.xlu0 %v798, 64
    %v1388 = vpop.permute.xlu0 %1387
    %1389 = vrot.lane.b32.xlu0 %v802, 64
    %v1390 = vpop.permute.xlu0 %1389
    %1391 = vrot.lane.b32.xlu0 %v804, 64
    %v1392 = vpop.permute.xlu0 %1391
    %1393 = vrot.lane.b32.xlu0 %v808, 64
    %v1394 = vpop.permute.xlu0 %1393
    %1395 = vrot.lane.b32.xlu0 %v810, 64
    %v1396 = vpop.permute.xlu0 %1395
    %v1405 = vcombine.low %v1382, %v1390
    %v1406 = vcombine.high %v1382, %v1390
    %v1408 = vunpack.c.l.s4 1983009808
    %v1409 = vunpack.c.0.s8 %v1408
    %v1410 = vlaneseq
    %v1411 = vshrl.u32 %v1410, 7
    %v1412 = vsub.s32 %v1409, %v1411
    %v1413 = vrot.slane %v1405, %v1412
    %v1415 = vunpack.c.l.s4 1983009808
    %v1416 = vunpack.c.0.s8 %v1415
    %v1417 = vlaneseq
    %v1418 = vshrl.u32 %v1417, 7
    %v1419 = vsub.s32 %v1416, %v1418
    %v1420 = vrot.slane %v1406, %v1419
    %v1421 = vcombine.low %v1386, %v1394
    %v1422 = vcombine.high %v1386, %v1394
    %v1424 = vunpack.c.l.s4 1983009808
    %v1425 = vunpack.c.0.s8 %v1424
    %v1426 = vlaneseq
    %v1427 = vshrl.u32 %v1426, 7
    %v1428 = vsub.s32 %v1425, %v1427
    %v1429 = vrot.slane %v1421, %v1428
    %v1431 = vunpack.c.l.s4 1983009808
    %v1432 = vunpack.c.0.s8 %v1431
    %v1433 = vlaneseq
    %v1434 = vshrl.u32 %v1433, 7
    %v1435 = vsub.s32 %v1432, %v1434
    %v1436 = vrot.slane %v1422, %v1435
    %v1437 = vcombine.low %v1413, %v1429
    %v1438 = vcombine.high %v1413, %v1429
    %v1440 = vunpack.c.l.s4 1934713408
    %v1441 = vunpack.c.0.s8 %v1440
    %v1442 = vlaneseq
    %v1443 = vshrl.u32 %v1442, 7
    %v1444 = vsub.s32 %v1441, %v1443
    %v1445 = vrot.slane %v1437, %v1444
    %v1447 = vunpack.c.l.s4 1934713408
    %v1448 = vunpack.c.0.s8 %v1447
    %v1449 = vlaneseq
    %v1450 = vshrl.u32 %v1449, 7
    %v1451 = vsub.s32 %v1448, %v1450
    %v1452 = vrot.slane %v1438, %v1451
    %v1453 = vcombine.low %v1420, %v1436
    %v1454 = vcombine.high %v1420, %v1436
    %v1456 = vunpack.c.l.s4 1934713408
    %v1457 = vunpack.c.0.s8 %v1456
    %v1458 = vlaneseq
    %v1459 = vshrl.u32 %v1458, 7
    %v1460 = vsub.s32 %v1457, %v1459
    %v1461 = vrot.slane %v1453, %v1460
    %v1463 = vunpack.c.l.s4 1934713408
    %v1464 = vunpack.c.0.s8 %v1463
    %v1465 = vlaneseq
    %v1466 = vshrl.u32 %v1465, 7
    %v1467 = vsub.s32 %v1464, %v1466
    %v1468 = vrot.slane %v1454, %v1467
    %v1469 = vcombine.high %v1445, 0.0
    %v1470 = vcombine.high %v1452, 0.0
    %v1471 = vcombine.high %v1461, 0.0
    %v1472 = vcombine.high %v1468, 0.0
    %v1473 = vcombine.low %v1384, %v1392
    %v1474 = vcombine.high %v1384, %v1392
    %v1476 = vunpack.c.l.s4 1983009808
    %v1477 = vunpack.c.0.s8 %v1476
    %v1478 = vlaneseq
    %v1479 = vshrl.u32 %v1478, 7
    %v1480 = vsub.s32 %v1477, %v1479
    %v1481 = vrot.slane %v1473, %v1480
    %v1483 = vunpack.c.l.s4 1983009808
    %v1484 = vunpack.c.0.s8 %v1483
    %v1485 = vlaneseq
    %v1486 = vshrl.u32 %v1485, 7
    %v1487 = vsub.s32 %v1484, %v1486
    %v1488 = vrot.slane %v1474, %v1487
    %v1489 = vcombine.low %v1388, %v1396
    %v1490 = vcombine.high %v1388, %v1396
    %v1492 = vunpack.c.l.s4 1983009808
    %v1493 = vunpack.c.0.s8 %v1492
    %v1494 = vlaneseq
    %v1495 = vshrl.u32 %v1494, 7
    %v1496 = vsub.s32 %v1493, %v1495
    %v1497 = vrot.slane %v1489, %v1496
    %v1499 = vunpack.c.l.s4 1983009808
    %v1500 = vunpack.c.0.s8 %v1499
    %v1501 = vlaneseq
    %v1502 = vshrl.u32 %v1501, 7
    %v1503 = vsub.s32 %v1500, %v1502
    %v1504 = vrot.slane %v1490, %v1503
    %v1505 = vcombine.low %v1481, %v1497
    %v1506 = vcombine.high %v1481, %v1497
    %v1508 = vunpack.c.l.s4 1934713408
    %v1509 = vunpack.c.0.s8 %v1508
    %v1510 = vlaneseq
    %v1511 = vshrl.u32 %v1510, 7
    %v1512 = vsub.s32 %v1509, %v1511
    %v1513 = vrot.slane %v1505, %v1512
    %v1515 = vunpack.c.l.s4 1934713408
    %v1516 = vunpack.c.0.s8 %v1515
    %v1517 = vlaneseq
    %v1518 = vshrl.u32 %v1517, 7
    %v1519 = vsub.s32 %v1516, %v1518
    %v1520 = vrot.slane %v1506, %v1519
    %v1521 = vcombine.low %v1488, %v1504
    %v1522 = vcombine.high %v1488, %v1504
    %v1524 = vunpack.c.l.s4 1934713408
    %v1525 = vunpack.c.0.s8 %v1524
    %v1526 = vlaneseq
    %v1527 = vshrl.u32 %v1526, 7
    %v1528 = vsub.s32 %v1525, %v1527
    %v1529 = vrot.slane %v1521, %v1528
    %v1531 = vunpack.c.l.s4 1934713408
    %v1532 = vunpack.c.0.s8 %v1531
    %v1533 = vlaneseq
    %v1534 = vshrl.u32 %v1533, 7
    %v1535 = vsub.s32 %v1532, %v1534
    %v1536 = vrot.slane %v1522, %v1535
    %v1537 = vcombine.high %v1513, 0.0
    %v1538 = vcombine.high %v1520, 0.0
    %v1539 = vcombine.high %v1529, 0.0
    %v1540 = vcombine.high %v1536, 0.0
    %v1541 = vcombine.low %v1445, %v1452
    %v1543 = vunpack.c.l.s4 1983009808
    %v1544 = vunpack.c.0.s8 %v1543
    %v1545 = vlaneseq
    %v1546 = vshrl.u32 %v1545, 7
    %v1547 = vsub.s32 %v1544, %v1546
    %v1548 = vrot.slane %v1541, %v1547
    %v1549 = vcombine.low %v1469, %v1470
    %v1551 = vunpack.c.l.s4 1983009808
    %v1552 = vunpack.c.0.s8 %v1551
    %v1553 = vlaneseq
    %v1554 = vshrl.u32 %v1553, 7
    %v1555 = vsub.s32 %v1552, %v1554
    %v1556 = vrot.slane %v1549, %v1555
    %v1557 = vcombine.low %v1461, %v1468
    %v1559 = vunpack.c.l.s4 1983009808
    %v1560 = vunpack.c.0.s8 %v1559
    %v1561 = vlaneseq
    %v1562 = vshrl.u32 %v1561, 7
    %v1563 = vsub.s32 %v1560, %v1562
    %v1564 = vrot.slane %v1557, %v1563
    %v1565 = vcombine.low %v1471, %v1472
    %v1567 = vunpack.c.l.s4 1983009808
    %v1568 = vunpack.c.0.s8 %v1567
    %v1569 = vlaneseq
    %v1570 = vshrl.u32 %v1569, 7
    %v1571 = vsub.s32 %v1568, %v1570
    %v1572 = vrot.slane %v1565, %v1571
    %v1573 = vcombine.low %v1548, %v1556
    %v1574 = vcombine.high %v1548, %v1556
    %v1576 = vunpack.c.l.s4 1934713408
    %v1577 = vunpack.c.0.s8 %v1576
    %v1578 = vlaneseq
    %v1579 = vshrl.u32 %v1578, 7
    %v1580 = vsub.s32 %v1577, %v1579
    %v1581 = vrot.slane %v1573, %v1580
    %v1583 = vunpack.c.l.s4 1934713408
    %v1584 = vunpack.c.0.s8 %v1583
    %v1585 = vlaneseq
    %v1586 = vshrl.u32 %v1585, 7
    %v1587 = vsub.s32 %v1584, %v1586
    %v1588 = vrot.slane %v1574, %v1587
    %v1589 = vcombine.low %v1564, %v1572
    %v1590 = vcombine.high %v1564, %v1572
    %v1592 = vunpack.c.l.s4 1934713408
    %v1593 = vunpack.c.0.s8 %v1592
    %v1594 = vlaneseq
    %v1595 = vshrl.u32 %v1594, 7
    %v1596 = vsub.s32 %v1593, %v1595
    %v1597 = vrot.slane %v1589, %v1596
    %v1599 = vunpack.c.l.s4 1934713408
    %v1600 = vunpack.c.0.s8 %v1599
    %v1601 = vlaneseq
    %v1602 = vshrl.u32 %v1601, 7
    %v1603 = vsub.s32 %v1600, %v1602
    %v1604 = vrot.slane %v1590, %v1603
    %v1605 = vcombine.low %v1581, %v1597
    %v1606 = vcombine.high %v1581, %v1597
    %v1607 = vcombine.low %v1588, %v1604
    %v1608 = vcombine.high %v1588, %v1604
    %v1609 = vcombine.low %v1513, %v1520
    %v1611 = vunpack.c.l.s4 1983009808
    %v1612 = vunpack.c.0.s8 %v1611
    %v1613 = vlaneseq
    %v1614 = vshrl.u32 %v1613, 7
    %v1615 = vsub.s32 %v1612, %v1614
    %v1616 = vrot.slane %v1609, %v1615
    %v1617 = vcombine.low %v1537, %v1538
    %v1619 = vunpack.c.l.s4 1983009808
    %v1620 = vunpack.c.0.s8 %v1619
    %v1621 = vlaneseq
    %v1622 = vshrl.u32 %v1621, 7
    %v1623 = vsub.s32 %v1620, %v1622
    %v1624 = vrot.slane %v1617, %v1623
    %v1625 = vcombine.low %v1529, %v1536
    %v1627 = vunpack.c.l.s4 1983009808
    %v1628 = vunpack.c.0.s8 %v1627
    %v1629 = vlaneseq
    %v1630 = vshrl.u32 %v1629, 7
    %v1631 = vsub.s32 %v1628, %v1630
    %v1632 = vrot.slane %v1625, %v1631
    %v1633 = vcombine.low %v1539, %v1540
    %v1635 = vunpack.c.l.s4 1983009808
    %v1636 = vunpack.c.0.s8 %v1635
    %v1637 = vlaneseq
    %v1638 = vshrl.u32 %v1637, 7
    %v1639 = vsub.s32 %v1636, %v1638
    %v1640 = vrot.slane %v1633, %v1639
    %v1641 = vcombine.low %v1616, %v1624
    %v1642 = vcombine.high %v1616, %v1624
    %v1644 = vunpack.c.l.s4 1934713408
    %v1645 = vunpack.c.0.s8 %v1644
    %v1646 = vlaneseq
    %v1647 = vshrl.u32 %v1646, 7
    %v1648 = vsub.s32 %v1645, %v1647
    %v1649 = vrot.slane %v1641, %v1648
    %v1651 = vunpack.c.l.s4 1934713408
    %v1652 = vunpack.c.0.s8 %v1651
    %v1653 = vlaneseq
    %v1654 = vshrl.u32 %v1653, 7
    %v1655 = vsub.s32 %v1652, %v1654
    %v1656 = vrot.slane %v1642, %v1655
    %v1657 = vcombine.low %v1632, %v1640
    %v1658 = vcombine.high %v1632, %v1640
    %v1660 = vunpack.c.l.s4 1934713408
    %v1661 = vunpack.c.0.s8 %v1660
    %v1662 = vlaneseq
    %v1663 = vshrl.u32 %v1662, 7
    %v1664 = vsub.s32 %v1661, %v1663
    %v1665 = vrot.slane %v1657, %v1664
    %v1667 = vunpack.c.l.s4 1934713408
    %v1668 = vunpack.c.0.s8 %v1667
    %v1669 = vlaneseq
    %v1670 = vshrl.u32 %v1669, 7
    %v1671 = vsub.s32 %v1668, %v1670
    %v1672 = vrot.slane %v1658, %v1671
    %v1673 = vcombine.low %v1649, %v1665
    %v1674 = vcombine.high %v1649, %v1665
    %v1675 = vcombine.low %v1656, %v1672
    %v1676 = vcombine.high %v1656, %v1672
    %v1678 = vsel %vm374, %v1013, 0
    %v1681 = vsel %vm374, %v1081, 0
    %v1684 = vsel %vm374, %v1309, 0
    %v1687 = vsel %vm374, %v1377, 0
    %1689 = vmatprep.subr.mxu0 0.0
    %1690 = vmatpush1.xpose.msra.mxu0 0.0
    %1691 = vmatprep.subr.mxu0 0.0
    %1692 = vmatpush1.xpose.msra.mxu0 0.0
    %1693 = vmatprep.subr.mxu0 0.0
    %1694 = vmatpush1.xpose.msra.mxu0 0.0
    %1695 = vmatprep.subr.mxu0 0.0
    %1696 = vmatpush1.xpose.msra.mxu0 0.0
    %1697 = vmatprep.subr.mxu0 0.0
    %1698 = vmatpush1.xpose.msra.mxu0 0.0
    %1699 = vmatprep.subr.mxu0 0.0
    %1700 = vmatpush1.xpose.msra.mxu0 0.0
    %1701 = vmatprep.subr.mxu0 0.0
    %1702 = vmatpush1.xpose.msra.mxu0 0.0
    %1703 = vmatprep.subr.mxu0 0.0
    %1704 = vmatpush1.xpose.msra.mxu0 0.0
    %1705 = vmatprep.subr.mxu0 0.0
    %1706 = vmatpush1.xpose.msra.mxu0 0.0
    %1707 = vmatprep.subr.mxu0 0.0
    %1708 = vmatpush1.xpose.msra.mxu0 0.0
    %1709 = vmatprep.subr.mxu0 0.0
    %1710 = vmatpush1.xpose.msra.mxu0 0.0
    %1711 = vmatprep.subr.mxu0 0.0
    %1712 = vmatpush1.xpose.msra.mxu0 0.0
    %1713 = vmatprep.subr.mxu0 0.0
    %1714 = vmatpush1.xpose.msra.mxu0 0.0
    %1715 = vmatprep.subr.mxu0 0.0
    %1716 = vmatpush1.xpose.msra.mxu0 0.0
    %1717 = vmatprep.subr.mxu0 0.0
    %1718 = vmatpush1.xpose.msra.mxu0 %v1687
    %1719 = vmatprep.subr.mxu0 0.0
    %1720 = vmatpush1.xpose.msra.mxu0 %v1684
    %1721 = vmatprep.subr.mxu0 0.0
    %1722 = vmatpush2.xpose.msra.mxu0 0.0
    %1723 = vmatprep.subr.mxu0 0.0
    %1724 = vmatpush2.xpose.msra.mxu0 0.0
    %1725 = vmatprep.subr.mxu0 0.0
    %1726 = vmatpush2.xpose.msra.mxu0 0.0
    %1727 = vmatprep.subr.mxu0 0.0
    %1728 = vmatpush2.xpose.msra.mxu0 0.0
    %1729 = vmatprep.subr.mxu0 0.0
    %1730 = vmatpush2.xpose.msra.mxu0 0.0
    %1731 = vmatprep.subr.mxu0 0.0
    %1732 = vmatpush2.xpose.msra.mxu0 0.0
    %1733 = vmatprep.subr.mxu0 0.0
    %1734 = vmatpush2.xpose.msra.mxu0 0.0
    %1735 = vmatprep.subr.mxu0 0.0
    %1736 = vmatpush2.xpose.msra.mxu0 0.0
    %1737 = vmatprep.subr.mxu0 0.0
    %1738 = vmatpush2.xpose.msra.mxu0 0.0
    %1739 = vmatprep.subr.mxu0 0.0
    %1740 = vmatpush2.xpose.msra.mxu0 0.0
    %1741 = vmatprep.subr.mxu0 0.0
    %1742 = vmatpush2.xpose.msra.mxu0 0.0
    %1743 = vmatprep.subr.mxu0 0.0
    %1744 = vmatpush2.xpose.msra.mxu0 0.0
    %1745 = vmatprep.subr.mxu0 0.0
    %1746 = vmatpush2.xpose.msra.mxu0 0.0
    %1747 = vmatprep.subr.mxu0 0.0
    %1748 = vmatpush2.xpose.msra.mxu0 0.0
    %1749 = vmatprep.subr.mxu0 0.0
    %1750 = vmatpush2.xpose.msra.mxu0 0.0
    %1751 = vmatprep.subr.mxu0 0.0
    %1752 = vmatpush2.xpose.msra.mxu0 0.0
    %1753 = vmatprep.mubr.f32.mxu0 0.0
    %1754 = vmatmul.mubr.f32.gmra.mxu0 %v1678
    %v1755 = vpop.f32.mrf.mxu0
    %v1756 = vadd.f32 0.0, %v1755
    %v1757 = vpop.f32.mrf.mxu0
    %1758 = vmatprep.mubr.f32.mxu0 0.0
    %1759 = vmatmul.mubr.f32.gmra.mxu0 %v1681
    %v1760 = vpop.f32.mrf.mxu0
    %v1761 = vadd.f32 0.0, %v1760
    %v1762 = vpop.f32.mrf.mxu0
    %1763 = vdwg.mxu0
    %v1765 = vsel %vm374, %v1014, 0
    %v1768 = vsel %vm374, %v1082, 0
    %v1771 = vsel %vm374, %v1310, 0
    %v1774 = vsel %vm374, %v1378, 0
    %1776 = vmatprep.subr.mxu0 0.0
    %1777 = vmatpush1.xpose.msra.mxu0 0.0
    %1778 = vmatprep.subr.mxu0 0.0
    %1779 = vmatpush1.xpose.msra.mxu0 0.0
    %1780 = vmatprep.subr.mxu0 0.0
    %1781 = vmatpush1.xpose.msra.mxu0 0.0
    %1782 = vmatprep.subr.mxu0 0.0
    %1783 = vmatpush1.xpose.msra.mxu0 0.0
    %1784 = vmatprep.subr.mxu0 0.0
    %1785 = vmatpush1.xpose.msra.mxu0 0.0
    %1786 = vmatprep.subr.mxu0 0.0
    %1787 = vmatpush1.xpose.msra.mxu0 0.0
    %1788 = vmatprep.subr.mxu0 0.0
    %1789 = vmatpush1.xpose.msra.mxu0 0.0
    %1790 = vmatprep.subr.mxu0 0.0
    %1791 = vmatpush1.xpose.msra.mxu0 0.0
    %1792 = vmatprep.subr.mxu0 0.0
    %1793 = vmatpush1.xpose.msra.mxu0 0.0
    %1794 = vmatprep.subr.mxu0 0.0
    %1795 = vmatpush1.xpose.msra.mxu0 0.0
    %1796 = vmatprep.subr.mxu0 0.0
    %1797 = vmatpush1.xpose.msra.mxu0 0.0
    %1798 = vmatprep.subr.mxu0 0.0
    %1799 = vmatpush1.xpose.msra.mxu0 0.0
    %1800 = vmatprep.subr.mxu0 0.0
    %1801 = vmatpush1.xpose.msra.mxu0 0.0
    %1802 = vmatprep.subr.mxu0 0.0
    %1803 = vmatpush1.xpose.msra.mxu0 0.0
    %1804 = vmatprep.subr.mxu0 0.0
    %1805 = vmatpush1.xpose.msra.mxu0 %v1774
    %1806 = vmatprep.subr.mxu0 0.0
    %1807 = vmatpush1.xpose.msra.mxu0 %v1771
    %1808 = vmatprep.subr.mxu0 0.0
    %1809 = vmatpush2.xpose.msra.mxu0 0.0
    %1810 = vmatprep.subr.mxu0 0.0
    %1811 = vmatpush2.xpose.msra.mxu0 0.0
    %1812 = vmatprep.subr.mxu0 0.0
    %1813 = vmatpush2.xpose.msra.mxu0 0.0
    %1814 = vmatprep.subr.mxu0 0.0
    %1815 = vmatpush2.xpose.msra.mxu0 0.0
    %1816 = vmatprep.subr.mxu0 0.0
    %1817 = vmatpush2.xpose.msra.mxu0 0.0
    %1818 = vmatprep.subr.mxu0 0.0
    %1819 = vmatpush2.xpose.msra.mxu0 0.0
    %1820 = vmatprep.subr.mxu0 0.0
    %1821 = vmatpush2.xpose.msra.mxu0 0.0
    %1822 = vmatprep.subr.mxu0 0.0
    %1823 = vmatpush2.xpose.msra.mxu0 0.0
    %1824 = vmatprep.subr.mxu0 0.0
    %1825 = vmatpush2.xpose.msra.mxu0 0.0
    %1826 = vmatprep.subr.mxu0 0.0
    %1827 = vmatpush2.xpose.msra.mxu0 0.0
    %1828 = vmatprep.subr.mxu0 0.0
    %1829 = vmatpush2.xpose.msra.mxu0 0.0
    %1830 = vmatprep.subr.mxu0 0.0
    %1831 = vmatpush2.xpose.msra.mxu0 0.0
    %1832 = vmatprep.subr.mxu0 0.0
    %1833 = vmatpush2.xpose.msra.mxu0 0.0
    %1834 = vmatprep.subr.mxu0 0.0
    %1835 = vmatpush2.xpose.msra.mxu0 0.0
    %1836 = vmatprep.subr.mxu0 0.0
    %1837 = vmatpush2.xpose.msra.mxu0 0.0
    %1838 = vmatprep.subr.mxu0 0.0
    %1839 = vmatpush2.xpose.msra.mxu0 0.0
    %1840 = vmatprep.mubr.f32.mxu0 0.0
    %1841 = vmatmul.mubr.f32.gmra.mxu0 %v1765
    %v1842 = vpop.f32.mrf.mxu0
    %v1843 = vadd.f32 0.0, %v1842
    %v1844 = vpop.f32.mrf.mxu0
    %1845 = vmatprep.mubr.f32.mxu0 0.0
    %1846 = vmatmul.mubr.f32.gmra.mxu0 %v1768
    %v1847 = vpop.f32.mrf.mxu0
    %v1848 = vadd.f32 0.0, %v1847
    %v1849 = vpop.f32.mrf.mxu0
    %1850 = vdwg.mxu0
    %v1852 = vsel %vm374, %v1015, 0
    %v1855 = vsel %vm374, %v1083, 0
    %v1858 = vsel %vm374, %v1311, 0
    %v1861 = vsel %vm374, %v1379, 0
    %1863 = vmatprep.subr.mxu0 0.0
    %1864 = vmatpush1.xpose.msra.mxu0 0.0
    %1865 = vmatprep.subr.mxu0 0.0
    %1866 = vmatpush1.xpose.msra.mxu0 0.0
    %1867 = vmatprep.subr.mxu0 0.0
    %1868 = vmatpush1.xpose.msra.mxu0 0.0
    %1869 = vmatprep.subr.mxu0 0.0
    %1870 = vmatpush1.xpose.msra.mxu0 0.0
    %1871 = vmatprep.subr.mxu0 0.0
    %1872 = vmatpush1.xpose.msra.mxu0 0.0
    %1873 = vmatprep.subr.mxu0 0.0
    %1874 = vmatpush1.xpose.msra.mxu0 0.0
    %1875 = vmatprep.subr.mxu0 0.0
    %1876 = vmatpush1.xpose.msra.mxu0 0.0
    %1877 = vmatprep.subr.mxu0 0.0
    %1878 = vmatpush1.xpose.msra.mxu0 0.0
    %1879 = vmatprep.subr.mxu0 0.0
    %1880 = vmatpush1.xpose.msra.mxu0 0.0
    %1881 = vmatprep.subr.mxu0 0.0
    %1882 = vmatpush1.xpose.msra.mxu0 0.0
    %1883 = vmatprep.subr.mxu0 0.0
    %1884 = vmatpush1.xpose.msra.mxu0 0.0
    %1885 = vmatprep.subr.mxu0 0.0
    %1886 = vmatpush1.xpose.msra.mxu0 0.0
    %1887 = vmatprep.subr.mxu0 0.0
    %1888 = vmatpush1.xpose.msra.mxu0 0.0
    %1889 = vmatprep.subr.mxu0 0.0
    %1890 = vmatpush1.xpose.msra.mxu0 0.0
    %1891 = vmatprep.subr.mxu0 0.0
    %1892 = vmatpush1.xpose.msra.mxu0 %v1861
    %1893 = vmatprep.subr.mxu0 0.0
    %1894 = vmatpush1.xpose.msra.mxu0 %v1858
    %1895 = vmatprep.subr.mxu0 0.0
    %1896 = vmatpush2.xpose.msra.mxu0 0.0
    %1897 = vmatprep.subr.mxu0 0.0
    %1898 = vmatpush2.xpose.msra.mxu0 0.0
    %1899 = vmatprep.subr.mxu0 0.0
    %1900 = vmatpush2.xpose.msra.mxu0 0.0
    %1901 = vmatprep.subr.mxu0 0.0
    %1902 = vmatpush2.xpose.msra.mxu0 0.0
    %1903 = vmatprep.subr.mxu0 0.0
    %1904 = vmatpush2.xpose.msra.mxu0 0.0
    %1905 = vmatprep.subr.mxu0 0.0
    %1906 = vmatpush2.xpose.msra.mxu0 0.0
    %1907 = vmatprep.subr.mxu0 0.0
    %1908 = vmatpush2.xpose.msra.mxu0 0.0
    %1909 = vmatprep.subr.mxu0 0.0
    %1910 = vmatpush2.xpose.msra.mxu0 0.0
    %1911 = vmatprep.subr.mxu0 0.0
    %1912 = vmatpush2.xpose.msra.mxu0 0.0
    %1913 = vmatprep.subr.mxu0 0.0
    %1914 = vmatpush2.xpose.msra.mxu0 0.0
    %1915 = vmatprep.subr.mxu0 0.0
    %1916 = vmatpush2.xpose.msra.mxu0 0.0
    %1917 = vmatprep.subr.mxu0 0.0
    %1918 = vmatpush2.xpose.msra.mxu0 0.0
    %1919 = vmatprep.subr.mxu0 0.0
    %1920 = vmatpush2.xpose.msra.mxu0 0.0
    %1921 = vmatprep.subr.mxu0 0.0
    %1922 = vmatpush2.xpose.msra.mxu0 0.0
    %1923 = vmatprep.subr.mxu0 0.0
    %1924 = vmatpush2.xpose.msra.mxu0 0.0
    %1925 = vmatprep.subr.mxu0 0.0
    %1926 = vmatpush2.xpose.msra.mxu0 0.0
    %1927 = vmatprep.mubr.f32.mxu0 0.0
    %1928 = vmatmul.mubr.f32.gmra.mxu0 %v1852
    %v1929 = vpop.f32.mrf.mxu0
    %v1930 = vadd.f32 0.0, %v1929
    %v1931 = vpop.f32.mrf.mxu0
    %1932 = vmatprep.mubr.f32.mxu0 0.0
    %1933 = vmatmul.mubr.f32.gmra.mxu0 %v1855
    %v1934 = vpop.f32.mrf.mxu0
    %v1935 = vadd.f32 0.0, %v1934
    %v1936 = vpop.f32.mrf.mxu0
    %1937 = vdwg.mxu0
    %v1939 = vsel %vm374, %v1016, 0
    %v1942 = vsel %vm374, %v1084, 0
    %v1945 = vsel %vm374, %v1312, 0
    %v1948 = vsel %vm374, %v1380, 0
    %1950 = vmatprep.subr.mxu0 0.0
    %1951 = vmatpush1.xpose.msra.mxu0 0.0
    %1952 = vmatprep.subr.mxu0 0.0
    %1953 = vmatpush1.xpose.msra.mxu0 0.0
    %1954 = vmatprep.subr.mxu0 0.0
    %1955 = vmatpush1.xpose.msra.mxu0 0.0
    %1956 = vmatprep.subr.mxu0 0.0
    %1957 = vmatpush1.xpose.msra.mxu0 0.0
    %1958 = vmatprep.subr.mxu0 0.0
    %1959 = vmatpush1.xpose.msra.mxu0 0.0
    %1960 = vmatprep.subr.mxu0 0.0
    %1961 = vmatpush1.xpose.msra.mxu0 0.0
    %1962 = vmatprep.subr.mxu0 0.0
    %1963 = vmatpush1.xpose.msra.mxu0 0.0
    %1964 = vmatprep.subr.mxu0 0.0
    %1965 = vmatpush1.xpose.msra.mxu0 0.0
    %1966 = vmatprep.subr.mxu0 0.0
    %1967 = vmatpush1.xpose.msra.mxu0 0.0
    %1968 = vmatprep.subr.mxu0 0.0
    %1969 = vmatpush1.xpose.msra.mxu0 0.0
    %1970 = vmatprep.subr.mxu0 0.0
    %1971 = vmatpush1.xpose.msra.mxu0 0.0
    %1972 = vmatprep.subr.mxu0 0.0
    %1973 = vmatpush1.xpose.msra.mxu0 0.0
    %1974 = vmatprep.subr.mxu0 0.0
    %1975 = vmatpush1.xpose.msra.mxu0 0.0
    %1976 = vmatprep.subr.mxu0 0.0
    %1977 = vmatpush1.xpose.msra.mxu0 0.0
    %1978 = vmatprep.subr.mxu0 0.0
    %1979 = vmatpush1.xpose.msra.mxu0 %v1948
    %1980 = vmatprep.subr.mxu0 0.0
    %1981 = vmatpush1.xpose.msra.mxu0 %v1945
    %1982 = vmatprep.subr.mxu0 0.0
    %1983 = vmatpush2.xpose.msra.mxu0 0.0
    %1984 = vmatprep.subr.mxu0 0.0
    %1985 = vmatpush2.xpose.msra.mxu0 0.0
    %1986 = vmatprep.subr.mxu0 0.0
    %1987 = vmatpush2.xpose.msra.mxu0 0.0
    %1988 = vmatprep.subr.mxu0 0.0
    %1989 = vmatpush2.xpose.msra.mxu0 0.0
    %1990 = vmatprep.subr.mxu0 0.0
    %1991 = vmatpush2.xpose.msra.mxu0 0.0
    %1992 = vmatprep.subr.mxu0 0.0
    %1993 = vmatpush2.xpose.msra.mxu0 0.0
    %1994 = vmatprep.subr.mxu0 0.0
    %1995 = vmatpush2.xpose.msra.mxu0 0.0
    %1996 = vmatprep.subr.mxu0 0.0
    %1997 = vmatpush2.xpose.msra.mxu0 0.0
    %1998 = vmatprep.subr.mxu0 0.0
    %1999 = vmatpush2.xpose.msra.mxu0 0.0
    %2000 = vmatprep.subr.mxu0 0.0
    %2001 = vmatpush2.xpose.msra.mxu0 0.0
    %2002 = vmatprep.subr.mxu0 0.0
    %2003 = vmatpush2.xpose.msra.mxu0 0.0
    %2004 = vmatprep.subr.mxu0 0.0
    %2005 = vmatpush2.xpose.msra.mxu0 0.0
    %2006 = vmatprep.subr.mxu0 0.0
    %2007 = vmatpush2.xpose.msra.mxu0 0.0
    %2008 = vmatprep.subr.mxu0 0.0
    %2009 = vmatpush2.xpose.msra.mxu0 0.0
    %2010 = vmatprep.subr.mxu0 0.0
    %2011 = vmatpush2.xpose.msra.mxu0 0.0
    %2012 = vmatprep.subr.mxu0 0.0
    %2013 = vmatpush2.xpose.msra.mxu0 0.0
    %2014 = vmatprep.mubr.f32.mxu0 0.0
    %2015 = vmatmul.mubr.f32.gmra.mxu0 %v1939
    %v2016 = vpop.f32.mrf.mxu0
    %v2017 = vadd.f32 0.0, %v2016
    %v2018 = vpop.f32.mrf.mxu0
    %2019 = vmatprep.mubr.f32.mxu0 0.0
    %2020 = vmatmul.mubr.f32.gmra.mxu0 %v1942
    %v2021 = vpop.f32.mrf.mxu0
    %v2022 = vadd.f32 0.0, %v2021
    %v2023 = vpop.f32.mrf.mxu0
    %2024 = vdwg.mxu0
    %v2025 = vmul.f32 %v1756, 0.35355338
    %v2026 = vmul.f32 %v1761, 0.35355338
    %v2027 = vmul.f32 %v1843, 0.35355338
    %v2028 = vmul.f32 %v1848, 0.35355338
    %v2029 = vmul.f32 %v1930, 0.35355338
    %v2030 = vmul.f32 %v1935, 0.35355338
    %v2031 = vmul.f32 %v2017, 0.35355338
    %v2032 = vmul.f32 %v2022, 0.35355338
    %v2041 = vcombine.low %v718, %v719
    %v2042 = vcombine.low %v720, %v721
    %v2044 = vunpack.c.l.s4 1983009808
    %v2045 = vunpack.c.0.s8 %v2044
    %v2046 = vlaneseq
    %v2047 = vshrl.u32 %v2046, 7
    %v2048 = vsub.s32 %v2045, %v2047
    %v2049 = vrot.slane %v2041, %v2048
    %v2051 = vunpack.c.l.s4 1983009808
    %v2052 = vunpack.c.0.s8 %v2051
    %v2053 = vlaneseq
    %v2054 = vshrl.u32 %v2053, 7
    %v2055 = vsub.s32 %v2052, %v2054
    %v2056 = vrot.slane %v2042, %v2055
    %v2057 = vcombine.low %v2049, %v2056
    %v2058 = vcombine.low %v722, %v723
    %v2059 = vcombine.low %v724, %v725
    %v2061 = vunpack.c.l.s4 1983009808
    %v2062 = vunpack.c.0.s8 %v2061
    %v2063 = vlaneseq
    %v2064 = vshrl.u32 %v2063, 7
    %v2065 = vsub.s32 %v2062, %v2064
    %v2066 = vrot.slane %v2058, %v2065
    %v2068 = vunpack.c.l.s4 1983009808
    %v2069 = vunpack.c.0.s8 %v2068
    %v2070 = vlaneseq
    %v2071 = vshrl.u32 %v2070, 7
    %v2072 = vsub.s32 %v2069, %v2071
    %v2073 = vrot.slane %v2059, %v2072
    %v2074 = vcombine.low %v2066, %v2073
    %v2077 = vadd.f32 %v2025, %v2057
    %v2078 = vadd.f32 %v2026, %v2074
    %v2079 = vadd.f32 %v2027, %v2057
    %v2080 = vadd.f32 %v2028, %v2074
    %v2081 = vadd.f32 %v2029, %v2057
    %v2082 = vadd.f32 %v2030, %v2074
    %v2083 = vadd.f32 %v2031, %v2057
    %v2084 = vadd.f32 %v2032, %v2074
    %vm2085 = vcmask 130048
    %v2086 = vsel %vm2085, %v2077, -inf
    %2087 = vmax.xlane.f32.xlu0 %v2086
    %v2088 = vpop.xlane.xlu0 %2087
    %v2089 = vsel %vm2085, %v2078, -inf
    %2090 = vmax.xlane.f32.xlu0 %v2089
    %v2091 = vpop.xlane.xlu0 %2090
    %v2092 = vsel %vm2085, %v2079, -inf
    %2093 = vmax.xlane.f32.xlu0 %v2092
    %v2094 = vpop.xlane.xlu0 %2093
    %v2095 = vsel %vm2085, %v2080, -inf
    %2096 = vmax.xlane.f32.xlu0 %v2095
    %v2097 = vpop.xlane.xlu0 %2096
    %v2098 = vsel %vm2085, %v2081, -inf
    %2099 = vmax.xlane.f32.xlu0 %v2098
    %v2100 = vpop.xlane.xlu0 %2099
    %v2101 = vsel %vm2085, %v2082, -inf
    %2102 = vmax.xlane.f32.xlu0 %v2101
    %v2103 = vpop.xlane.xlu0 %2102
    %v2104 = vsel %vm2085, %v2083, -inf
    %2105 = vmax.xlane.f32.xlu0 %v2104
    %v2106 = vpop.xlane.xlu0 %2105
    %v2107 = vsel %vm2085, %v2084, -inf
    %2108 = vmax.xlane.f32.xlu0 %v2107
    %v2109 = vpop.xlane.xlu0 %2108
    %v2110 = vsub.f32 %v2077, %v2088
    %v2111 = vsub.f32 %v2078, %v2091
    %v2112 = vsub.f32 %v2079, %v2094
    %v2113 = vsub.f32 %v2080, %v2097
    %v2114 = vsub.f32 %v2081, %v2100
    %v2115 = vsub.f32 %v2082, %v2103
    %v2116 = vsub.f32 %v2083, %v2106
    %v2117 = vsub.f32 %v2084, %v2109
    %v2118 = vmul.f32 %v2110, 1.442695
    %v2119 = vpow.pop %v2118
    %v2120 = vmul.f32 %v2111, 1.442695
    %v2121 = vpow.pop %v2120
    %v2122 = vmul.f32 %v2112, 1.442695
    %v2123 = vpow.pop %v2122
    %v2124 = vmul.f32 %v2113, 1.442695
    %v2125 = vpow.pop %v2124
    %v2126 = vmul.f32 %v2114, 1.442695
    %v2127 = vpow.pop %v2126
    %v2128 = vmul.f32 %v2115, 1.442695
    %v2129 = vpow.pop %v2128
    %v2130 = vmul.f32 %v2116, 1.442695
    %v2131 = vpow.pop %v2130
    %v2132 = vmul.f32 %v2117, 1.442695
    %v2133 = vpow.pop %v2132
    %v2134 = vsel %vm2085, %v2119, 0.0
    %2135 = vadd.xlane.f32.xlu0 %v2134
    %v2136 = vpop.xlane.xlu0 %2135
    %v2137 = vsel %vm2085, %v2121, 0.0
    %2138 = vadd.xlane.f32.xlu0 %v2137
    %v2139 = vpop.xlane.xlu0 %2138
    %v2140 = vsel %vm2085, %v2123, 0.0
    %2141 = vadd.xlane.f32.xlu0 %v2140
    %v2142 = vpop.xlane.xlu0 %2141
    %v2143 = vsel %vm2085, %v2125, 0.0
    %2144 = vadd.xlane.f32.xlu0 %v2143
    %v2145 = vpop.xlane.xlu0 %2144
    %v2146 = vsel %vm2085, %v2127, 0.0
    %2147 = vadd.xlane.f32.xlu0 %v2146
    %v2148 = vpop.xlane.xlu0 %2147
    %v2149 = vsel %vm2085, %v2129, 0.0
    %2150 = vadd.xlane.f32.xlu0 %v2149
    %v2151 = vpop.xlane.xlu0 %2150
    %v2152 = vsel %vm2085, %v2131, 0.0
    %2153 = vadd.xlane.f32.xlu0 %v2152
    %v2154 = vpop.xlane.xlu0 %2153
    %v2155 = vsel %vm2085, %v2133, 0.0
    %2156 = vadd.xlane.f32.xlu0 %v2155
    %v2157 = vpop.xlane.xlu0 %2156
    %v2158 = vrcp.pop %v2136
    %v2159 = vrcp.pop %v2139
    %v2160 = vrcp.pop %v2142
    %v2161 = vrcp.pop %v2145
    %v2162 = vrcp.pop %v2148
    %v2163 = vrcp.pop %v2151
    %v2164 = vrcp.pop %v2154
    %v2165 = vrcp.pop %v2157
    %v2166 = vmul.f32 %v2119, %v2158
    %v2167 = vmul.f32 %v2121, %v2159
    %v2168 = vmul.f32 %v2123, %v2160
    %v2169 = vmul.f32 %v2125, %v2161
    %v2170 = vmul.f32 %v2127, %v2162
    %v2171 = vmul.f32 %v2129, %v2163
    %v2172 = vmul.f32 %v2131, %v2164
    %v2173 = vmul.f32 %v2133, %v2165
    %v2175 = vsel %vm2085, %v2166, 0
    %v2178 = vsel %vm2085, %v2167, 0
    %2180 = vmatprep.subr.mxu0 0.0
    %2181 = vmatpush1.msra.mxu0 0.0
    %2182 = vmatprep.subr.mxu0 0.0
    %2183 = vmatpush1.msra.mxu0 0.0
    %2184 = vmatprep.subr.mxu0 0.0
    %2185 = vmatpush1.msra.mxu0 0.0
    %2186 = vmatprep.subr.mxu0 0.0
    %2187 = vmatpush1.msra.mxu0 0.0
    %2188 = vmatprep.subr.mxu0 0.0
    %2189 = vmatpush1.msra.mxu0 0.0
    %2190 = vmatprep.subr.mxu0 0.0
    %2191 = vmatpush1.msra.mxu0 0.0
    %2192 = vmatprep.subr.mxu0 0.0
    %2193 = vmatpush1.msra.mxu0 0.0
    %2194 = vmatprep.subr.mxu0 0.0
    %2195 = vmatpush1.msra.mxu0 0.0
    %2196 = vmatprep.subr.mxu0 0.0
    %2197 = vmatpush1.msra.mxu0 0.0
    %2198 = vmatprep.subr.mxu0 0.0
    %2199 = vmatpush1.msra.mxu0 0.0
    %2200 = vmatprep.subr.mxu0 0.0
    %2201 = vmatpush1.msra.mxu0 0.0
    %2202 = vmatprep.subr.mxu0 0.0
    %2203 = vmatpush1.msra.mxu0 0.0
    %2204 = vmatprep.subr.mxu0 0.0
    %2205 = vmatpush1.msra.mxu0 0.0
    %2206 = vmatprep.subr.mxu0 0.0
    %2207 = vmatpush1.msra.mxu0 0.0
    %2208 = vmatprep.subr.mxu0 0.0
    %2209 = vmatpush1.msra.mxu0 %v1673
    %2210 = vmatprep.subr.mxu0 0.0
    %2211 = vmatpush1.msra.mxu0 %v1605
    %2212 = vmatprep.subr.mxu0 0.0
    %2213 = vmatpush2.msra.mxu0 0.0
    %2214 = vmatprep.subr.mxu0 0.0
    %2215 = vmatpush2.msra.mxu0 0.0
    %2216 = vmatprep.subr.mxu0 0.0
    %2217 = vmatpush2.msra.mxu0 0.0
    %2218 = vmatprep.subr.mxu0 0.0
    %2219 = vmatpush2.msra.mxu0 0.0
    %2220 = vmatprep.subr.mxu0 0.0
    %2221 = vmatpush2.msra.mxu0 0.0
    %2222 = vmatprep.subr.mxu0 0.0
    %2223 = vmatpush2.msra.mxu0 0.0
    %2224 = vmatprep.subr.mxu0 0.0
    %2225 = vmatpush2.msra.mxu0 0.0
    %2226 = vmatprep.subr.mxu0 0.0
    %2227 = vmatpush2.msra.mxu0 0.0
    %2228 = vmatprep.subr.mxu0 0.0
    %2229 = vmatpush2.msra.mxu0 0.0
    %2230 = vmatprep.subr.mxu0 0.0
    %2231 = vmatpush2.msra.mxu0 0.0
    %2232 = vmatprep.subr.mxu0 0.0
    %2233 = vmatpush2.msra.mxu0 0.0
    %2234 = vmatprep.subr.mxu0 0.0
    %2235 = vmatpush2.msra.mxu0 0.0
    %2236 = vmatprep.subr.mxu0 0.0
    %2237 = vmatpush2.msra.mxu0 0.0
    %2238 = vmatprep.subr.mxu0 0.0
    %2239 = vmatpush2.msra.mxu0 0.0
    %2240 = vmatprep.subr.mxu0 0.0
    %2241 = vmatpush2.msra.mxu0 0.0
    %2242 = vmatprep.subr.mxu0 0.0
    %2243 = vmatpush2.msra.mxu0 0.0
    %2244 = vmatprep.mubr.f32.mxu0 0.0
    %2245 = vmatmul.mubr.f32.gmra.mxu0 %v2175
    %v2246 = vpop.f32.mrf.mxu0
    %v2247 = vadd.f32 0.0, %v2246
    %v2248 = vpop.f32.mrf.mxu0
    %2249 = vmatprep.mubr.f32.mxu0 0.0
    %2250 = vmatmul.mubr.f32.gmra.mxu0 %v2178
    %v2251 = vpop.f32.mrf.mxu0
    %v2252 = vadd.f32 0.0, %v2251
    %v2253 = vpop.f32.mrf.mxu0
    %2254 = vdwg.mxu0
    %v2256 = vsel %vm2085, %v2168, 0
    %v2259 = vsel %vm2085, %v2169, 0
    %2261 = vmatprep.subr.mxu0 0.0
    %2262 = vmatpush1.msra.mxu0 0.0
    %2263 = vmatprep.subr.mxu0 0.0
    %2264 = vmatpush1.msra.mxu0 0.0
    %2265 = vmatprep.subr.mxu0 0.0
    %2266 = vmatpush1.msra.mxu0 0.0
    %2267 = vmatprep.subr.mxu0 0.0
    %2268 = vmatpush1.msra.mxu0 0.0
    %2269 = vmatprep.subr.mxu0 0.0
    %2270 = vmatpush1.msra.mxu0 0.0
    %2271 = vmatprep.subr.mxu0 0.0
    %2272 = vmatpush1.msra.mxu0 0.0
    %2273 = vmatprep.subr.mxu0 0.0
    %2274 = vmatpush1.msra.mxu0 0.0
    %2275 = vmatprep.subr.mxu0 0.0
    %2276 = vmatpush1.msra.mxu0 0.0
    %2277 = vmatprep.subr.mxu0 0.0
    %2278 = vmatpush1.msra.mxu0 0.0
    %2279 = vmatprep.subr.mxu0 0.0
    %2280 = vmatpush1.msra.mxu0 0.0
    %2281 = vmatprep.subr.mxu0 0.0
    %2282 = vmatpush1.msra.mxu0 0.0
    %2283 = vmatprep.subr.mxu0 0.0
    %2284 = vmatpush1.msra.mxu0 0.0
    %2285 = vmatprep.subr.mxu0 0.0
    %2286 = vmatpush1.msra.mxu0 0.0
    %2287 = vmatprep.subr.mxu0 0.0
    %2288 = vmatpush1.msra.mxu0 0.0
    %2289 = vmatprep.subr.mxu0 0.0
    %2290 = vmatpush1.msra.mxu0 %v1674
    %2291 = vmatprep.subr.mxu0 0.0
    %2292 = vmatpush1.msra.mxu0 %v1606
    %2293 = vmatprep.subr.mxu0 0.0
    %2294 = vmatpush2.msra.mxu0 0.0
    %2295 = vmatprep.subr.mxu0 0.0
    %2296 = vmatpush2.msra.mxu0 0.0
    %2297 = vmatprep.subr.mxu0 0.0
    %2298 = vmatpush2.msra.mxu0 0.0
    %2299 = vmatprep.subr.mxu0 0.0
    %2300 = vmatpush2.msra.mxu0 0.0
    %2301 = vmatprep.subr.mxu0 0.0
    %2302 = vmatpush2.msra.mxu0 0.0
    %2303 = vmatprep.subr.mxu0 0.0
    %2304 = vmatpush2.msra.mxu0 0.0
    %2305 = vmatprep.subr.mxu0 0.0
    %2306 = vmatpush2.msra.mxu0 0.0
    %2307 = vmatprep.subr.mxu0 0.0
    %2308 = vmatpush2.msra.mxu0 0.0
    %2309 = vmatprep.subr.mxu0 0.0
    %2310 = vmatpush2.msra.mxu0 0.0
    %2311 = vmatprep.subr.mxu0 0.0
    %2312 = vmatpush2.msra.mxu0 0.0
    %2313 = vmatprep.subr.mxu0 0.0
    %2314 = vmatpush2.msra.mxu0 0.0
    %2315 = vmatprep.subr.mxu0 0.0
    %2316 = vmatpush2.msra.mxu0 0.0
    %2317 = vmatprep.subr.mxu0 0.0
    %2318 = vmatpush2.msra.mxu0 0.0
    %2319 = vmatprep.subr.mxu0 0.0
    %2320 = vmatpush2.msra.mxu0 0.0
    %2321 = vmatprep.subr.mxu0 0.0
    %2322 = vmatpush2.msra.mxu0 0.0
    %2323 = vmatprep.subr.mxu0 0.0
    %2324 = vmatpush2.msra.mxu0 0.0
    %2325 = vmatprep.mubr.f32.mxu0 0.0
    %2326 = vmatmul.mubr.f32.gmra.mxu0 %v2256
    %v2327 = vpop.f32.mrf.mxu0
    %v2328 = vadd.f32 0.0, %v2327
    %v2329 = vpop.f32.mrf.mxu0
    %2330 = vmatprep.mubr.f32.mxu0 0.0
    %2331 = vmatmul.mubr.f32.gmra.mxu0 %v2259
    %v2332 = vpop.f32.mrf.mxu0
    %v2333 = vadd.f32 0.0, %v2332
    %v2334 = vpop.f32.mrf.mxu0
    %2335 = vdwg.mxu0
    %v2337 = vsel %vm2085, %v2170, 0
    %v2340 = vsel %vm2085, %v2171, 0
    %2342 = vmatprep.subr.mxu0 0.0
    %2343 = vmatpush1.msra.mxu0 0.0
    %2344 = vmatprep.subr.mxu0 0.0
    %2345 = vmatpush1.msra.mxu0 0.0
    %2346 = vmatprep.subr.mxu0 0.0
    %2347 = vmatpush1.msra.mxu0 0.0
    %2348 = vmatprep.subr.mxu0 0.0
    %2349 = vmatpush1.msra.mxu0 0.0
    %2350 = vmatprep.subr.mxu0 0.0
    %2351 = vmatpush1.msra.mxu0 0.0
    %2352 = vmatprep.subr.mxu0 0.0
    %2353 = vmatpush1.msra.mxu0 0.0
    %2354 = vmatprep.subr.mxu0 0.0
    %2355 = vmatpush1.msra.mxu0 0.0
    %2356 = vmatprep.subr.mxu0 0.0
    %2357 = vmatpush1.msra.mxu0 0.0
    %2358 = vmatprep.subr.mxu0 0.0
    %2359 = vmatpush1.msra.mxu0 0.0
    %2360 = vmatprep.subr.mxu0 0.0
    %2361 = vmatpush1.msra.mxu0 0.0
    %2362 = vmatprep.subr.mxu0 0.0
    %2363 = vmatpush1.msra.mxu0 0.0
    %2364 = vmatprep.subr.mxu0 0.0
    %2365 = vmatpush1.msra.mxu0 0.0
    %2366 = vmatprep.subr.mxu0 0.0
    %2367 = vmatpush1.msra.mxu0 0.0
    %2368 = vmatprep.subr.mxu0 0.0
    %2369 = vmatpush1.msra.mxu0 0.0
    %2370 = vmatprep.subr.mxu0 0.0
    %2371 = vmatpush1.msra.mxu0 %v1675
    %2372 = vmatprep.subr.mxu0 0.0
    %2373 = vmatpush1.msra.mxu0 %v1607
    %2374 = vmatprep.subr.mxu0 0.0
    %2375 = vmatpush2.msra.mxu0 0.0
    %2376 = vmatprep.subr.mxu0 0.0
    %2377 = vmatpush2.msra.mxu0 0.0
    %2378 = vmatprep.subr.mxu0 0.0
    %2379 = vmatpush2.msra.mxu0 0.0
    %2380 = vmatprep.subr.mxu0 0.0
    %2381 = vmatpush2.msra.mxu0 0.0
    %2382 = vmatprep.subr.mxu0 0.0
    %2383 = vmatpush2.msra.mxu0 0.0
    %2384 = vmatprep.subr.mxu0 0.0
    %2385 = vmatpush2.msra.mxu0 0.0
    %2386 = vmatprep.subr.mxu0 0.0
    %2387 = vmatpush2.msra.mxu0 0.0
    %2388 = vmatprep.subr.mxu0 0.0
    %2389 = vmatpush2.msra.mxu0 0.0
    %2390 = vmatprep.subr.mxu0 0.0
    %2391 = vmatpush2.msra.mxu0 0.0
    %2392 = vmatprep.subr.mxu0 0.0
    %2393 = vmatpush2.msra.mxu0 0.0
    %2394 = vmatprep.subr.mxu0 0.0
    %2395 = vmatpush2.msra.mxu0 0.0
    %2396 = vmatprep.subr.mxu0 0.0
    %2397 = vmatpush2.msra.mxu0 0.0
    %2398 = vmatprep.subr.mxu0 0.0
    %2399 = vmatpush2.msra.mxu0 0.0
    %2400 = vmatprep.subr.mxu0 0.0
    %2401 = vmatpush2.msra.mxu0 0.0
    %2402 = vmatprep.subr.mxu0 0.0
    %2403 = vmatpush2.msra.mxu0 0.0
    %2404 = vmatprep.subr.mxu0 0.0
    %2405 = vmatpush2.msra.mxu0 0.0
    %2406 = vmatprep.mubr.f32.mxu0 0.0
    %2407 = vmatmul.mubr.f32.gmra.mxu0 %v2337
    %v2408 = vpop.f32.mrf.mxu0
    %v2409 = vadd.f32 0.0, %v2408
    %v2410 = vpop.f32.mrf.mxu0
    %2411 = vmatprep.mubr.f32.mxu0 0.0
    %2412 = vmatmul.mubr.f32.gmra.mxu0 %v2340
    %v2413 = vpop.f32.mrf.mxu0
    %v2414 = vadd.f32 0.0, %v2413
    %v2415 = vpop.f32.mrf.mxu0
    %2416 = vdwg.mxu0
    %v2418 = vsel %vm2085, %v2172, 0
    %v2421 = vsel %vm2085, %v2173, 0
    %2423 = vmatprep.subr.mxu0 0.0
    %2424 = vmatpush1.msra.mxu0 0.0
    %2425 = vmatprep.subr.mxu0 0.0
    %2426 = vmatpush1.msra.mxu0 0.0
    %2427 = vmatprep.subr.mxu0 0.0
    %2428 = vmatpush1.msra.mxu0 0.0
    %2429 = vmatprep.subr.mxu0 0.0
    %2430 = vmatpush1.msra.mxu0 0.0
    %2431 = vmatprep.subr.mxu0 0.0
    %2432 = vmatpush1.msra.mxu0 0.0
    %2433 = vmatprep.subr.mxu0 0.0
    %2434 = vmatpush1.msra.mxu0 0.0
    %2435 = vmatprep.subr.mxu0 0.0
    %2436 = vmatpush1.msra.mxu0 0.0
    %2437 = vmatprep.subr.mxu0 0.0
    %2438 = vmatpush1.msra.mxu0 0.0
    %2439 = vmatprep.subr.mxu0 0.0
    %2440 = vmatpush1.msra.mxu0 0.0
    %2441 = vmatprep.subr.mxu0 0.0
    %2442 = vmatpush1.msra.mxu0 0.0
    %2443 = vmatprep.subr.mxu0 0.0
    %2444 = vmatpush1.msra.mxu0 0.0
    %2445 = vmatprep.subr.mxu0 0.0
    %2446 = vmatpush1.msra.mxu0 0.0
    %2447 = vmatprep.subr.mxu0 0.0
    %2448 = vmatpush1.msra.mxu0 0.0
    %2449 = vmatprep.subr.mxu0 0.0
    %2450 = vmatpush1.msra.mxu0 0.0
    %2451 = vmatprep.subr.mxu0 0.0
    %2452 = vmatpush1.msra.mxu0 %v1676
    %2453 = vmatprep.subr.mxu0 0.0
    %2454 = vmatpush1.msra.mxu0 %v1608
    %2455 = vmatprep.subr.mxu0 0.0
    %2456 = vmatpush2.msra.mxu0 0.0
    %2457 = vmatprep.subr.mxu0 0.0
    %2458 = vmatpush2.msra.mxu0 0.0
    %2459 = vmatprep.subr.mxu0 0.0
    %2460 = vmatpush2.msra.mxu0 0.0
    %2461 = vmatprep.subr.mxu0 0.0
    %2462 = vmatpush2.msra.mxu0 0.0
    %2463 = vmatprep.subr.mxu0 0.0
    %2464 = vmatpush2.msra.mxu0 0.0
    %2465 = vmatprep.subr.mxu0 0.0
    %2466 = vmatpush2.msra.mxu0 0.0
    %2467 = vmatprep.subr.mxu0 0.0
    %2468 = vmatpush2.msra.mxu0 0.0
    %2469 = vmatprep.subr.mxu0 0.0
    %2470 = vmatpush2.msra.mxu0 0.0
    %2471 = vmatprep.subr.mxu0 0.0
    %2472 = vmatpush2.msra.mxu0 0.0
    %2473 = vmatprep.subr.mxu0 0.0
    %2474 = vmatpush2.msra.mxu0 0.0
    %2475 = vmatprep.subr.mxu0 0.0
    %2476 = vmatpush2.msra.mxu0 0.0
    %2477 = vmatprep.subr.mxu0 0.0
    %2478 = vmatpush2.msra.mxu0 0.0
    %2479 = vmatprep.subr.mxu0 0.0
    %2480 = vmatpush2.msra.mxu0 0.0
    %2481 = vmatprep.subr.mxu0 0.0
    %2482 = vmatpush2.msra.mxu0 0.0
    %2483 = vmatprep.subr.mxu0 0.0
    %2484 = vmatpush2.msra.mxu0 0.0
    %2485 = vmatprep.subr.mxu0 0.0
    %2486 = vmatpush2.msra.mxu0 0.0
    %2487 = vmatprep.mubr.f32.mxu0 0.0
    %2488 = vmatmul.mubr.f32.gmra.mxu0 %v2418
    %v2489 = vpop.f32.mrf.mxu0
    %v2490 = vadd.f32 0.0, %v2489
    %v2491 = vpop.f32.mrf.mxu0
    %2492 = vmatprep.mubr.f32.mxu0 0.0
    %2493 = vmatmul.mubr.f32.gmra.mxu0 %v2421
    %v2494 = vpop.f32.mrf.mxu0
    %v2495 = vadd.f32 0.0, %v2494
    %v2496 = vpop.f32.mrf.mxu0
    %2497 = vdwg.mxu0
    %v2498 = vcombine.low %v2247, %v2409
    %v2499 = vcombine.high %v2247, %v2409
    %v2501 = vunpack.c.l.s4 1983009808
    %v2502 = vunpack.c.0.s8 %v2501
    %v2503 = vlaneseq
    %v2504 = vshrl.u32 %v2503, 7
    %v2505 = vsub.s32 %v2502, %v2504
    %v2506 = vrot.slane %v2498, %v2505
    %v2508 = vunpack.c.l.s4 1983009808
    %v2509 = vunpack.c.0.s8 %v2508
    %v2510 = vlaneseq
    %v2511 = vshrl.u32 %v2510, 7
    %v2512 = vsub.s32 %v2509, %v2511
    %v2513 = vrot.slane %v2499, %v2512
    %v2514 = vcombine.low %v2328, %v2490
    %v2515 = vcombine.high %v2328, %v2490
    %v2517 = vunpack.c.l.s4 1983009808
    %v2518 = vunpack.c.0.s8 %v2517
    %v2519 = vlaneseq
    %v2520 = vshrl.u32 %v2519, 7
    %v2521 = vsub.s32 %v2518, %v2520
    %v2522 = vrot.slane %v2514, %v2521
    %v2524 = vunpack.c.l.s4 1983009808
    %v2525 = vunpack.c.0.s8 %v2524
    %v2526 = vlaneseq
    %v2527 = vshrl.u32 %v2526, 7
    %v2528 = vsub.s32 %v2525, %v2527
    %v2529 = vrot.slane %v2515, %v2528
    %v2530 = vcombine.low %v2506, %v2522
    %v2531 = vcombine.high %v2506, %v2522
    %v2533 = vunpack.c.l.s4 1934713408
    %v2534 = vunpack.c.0.s8 %v2533
    %v2535 = vlaneseq
    %v2536 = vshrl.u32 %v2535, 7
    %v2537 = vsub.s32 %v2534, %v2536
    %v2538 = vrot.slane %v2530, %v2537
    %v2540 = vunpack.c.l.s4 1934713408
    %v2541 = vunpack.c.0.s8 %v2540
    %v2542 = vlaneseq
    %v2543 = vshrl.u32 %v2542, 7
    %v2544 = vsub.s32 %v2541, %v2543
    %v2545 = vrot.slane %v2531, %v2544
    %v2546 = vcombine.low %v2513, %v2529
    %v2547 = vcombine.high %v2513, %v2529
    %v2549 = vunpack.c.l.s4 1934713408
    %v2550 = vunpack.c.0.s8 %v2549
    %v2551 = vlaneseq
    %v2552 = vshrl.u32 %v2551, 7
    %v2553 = vsub.s32 %v2550, %v2552
    %v2554 = vrot.slane %v2546, %v2553
    %v2556 = vunpack.c.l.s4 1934713408
    %v2557 = vunpack.c.0.s8 %v2556
    %v2558 = vlaneseq
    %v2559 = vshrl.u32 %v2558, 7
    %v2560 = vsub.s32 %v2557, %v2559
    %v2561 = vrot.slane %v2547, %v2560
    %v2562 = vcombine.high %v2538, 0.0
    %v2563 = vcombine.high %v2545, 0.0
    %v2564 = vcombine.high %v2554, 0.0
    %v2565 = vcombine.high %v2561, 0.0
    %v2566 = vcombine.low %v2252, %v2414
    %v2567 = vcombine.high %v2252, %v2414
    %v2569 = vunpack.c.l.s4 1983009808
    %v2570 = vunpack.c.0.s8 %v2569
    %v2571 = vlaneseq
    %v2572 = vshrl.u32 %v2571, 7
    %v2573 = vsub.s32 %v2570, %v2572
    %v2574 = vrot.slane %v2566, %v2573
    %v2576 = vunpack.c.l.s4 1983009808
    %v2577 = vunpack.c.0.s8 %v2576
    %v2578 = vlaneseq
    %v2579 = vshrl.u32 %v2578, 7
    %v2580 = vsub.s32 %v2577, %v2579
    %v2581 = vrot.slane %v2567, %v2580
    %v2582 = vcombine.low %v2333, %v2495
    %v2583 = vcombine.high %v2333, %v2495
    %v2585 = vunpack.c.l.s4 1983009808
    %v2586 = vunpack.c.0.s8 %v2585
    %v2587 = vlaneseq
    %v2588 = vshrl.u32 %v2587, 7
    %v2589 = vsub.s32 %v2586, %v2588
    %v2590 = vrot.slane %v2582, %v2589
    %v2592 = vunpack.c.l.s4 1983009808
    %v2593 = vunpack.c.0.s8 %v2592
    %v2594 = vlaneseq
    %v2595 = vshrl.u32 %v2594, 7
    %v2596 = vsub.s32 %v2593, %v2595
    %v2597 = vrot.slane %v2583, %v2596
    %v2598 = vcombine.low %v2574, %v2590
    %v2599 = vcombine.high %v2574, %v2590
    %v2601 = vunpack.c.l.s4 1934713408
    %v2602 = vunpack.c.0.s8 %v2601
    %v2603 = vlaneseq
    %v2604 = vshrl.u32 %v2603, 7
    %v2605 = vsub.s32 %v2602, %v2604
    %v2606 = vrot.slane %v2598, %v2605
    %v2608 = vunpack.c.l.s4 1934713408
    %v2609 = vunpack.c.0.s8 %v2608
    %v2610 = vlaneseq
    %v2611 = vshrl.u32 %v2610, 7
    %v2612 = vsub.s32 %v2609, %v2611
    %v2613 = vrot.slane %v2599, %v2612
    %v2614 = vcombine.low %v2581, %v2597
    %v2615 = vcombine.high %v2581, %v2597
    %v2617 = vunpack.c.l.s4 1934713408
    %v2618 = vunpack.c.0.s8 %v2617
    %v2619 = vlaneseq
    %v2620 = vshrl.u32 %v2619, 7
    %v2621 = vsub.s32 %v2618, %v2620
    %v2622 = vrot.slane %v2614, %v2621
    %v2624 = vunpack.c.l.s4 1934713408
    %v2625 = vunpack.c.0.s8 %v2624
    %v2626 = vlaneseq
    %v2627 = vshrl.u32 %v2626, 7
    %v2628 = vsub.s32 %v2625, %v2627
    %v2629 = vrot.slane %v2615, %v2628
    %v2630 = vcombine.high %v2606, 0.0
    %v2631 = vcombine.high %v2613, 0.0
    %v2632 = vcombine.high %v2622, 0.0
    %v2633 = vcombine.high %v2629, 0.0
    %v2634 = vcombine.low %v2538, %v2545
    %v2636 = vunpack.c.l.s4 1983009808
    %v2637 = vunpack.c.0.s8 %v2636
    %v2638 = vlaneseq
    %v2639 = vshrl.u32 %v2638, 7
    %v2640 = vsub.s32 %v2637, %v2639
    %v2641 = vrot.slane %v2634, %v2640
    %v2642 = vcombine.low %v2562, %v2563
    %v2644 = vunpack.c.l.s4 1983009808
    %v2645 = vunpack.c.0.s8 %v2644
    %v2646 = vlaneseq
    %v2647 = vshrl.u32 %v2646, 7
    %v2648 = vsub.s32 %v2645, %v2647
    %v2649 = vrot.slane %v2642, %v2648
    %v2650 = vcombine.low %v2554, %v2561
    %v2652 = vunpack.c.l.s4 1983009808
    %v2653 = vunpack.c.0.s8 %v2652
    %v2654 = vlaneseq
    %v2655 = vshrl.u32 %v2654, 7
    %v2656 = vsub.s32 %v2653, %v2655
    %v2657 = vrot.slane %v2650, %v2656
    %v2658 = vcombine.low %v2564, %v2565
    %v2660 = vunpack.c.l.s4 1983009808
    %v2661 = vunpack.c.0.s8 %v2660
    %v2662 = vlaneseq
    %v2663 = vshrl.u32 %v2662, 7
    %v2664 = vsub.s32 %v2661, %v2663
    %v2665 = vrot.slane %v2658, %v2664
    %v2666 = vcombine.low %v2641, %v2649
    %v2667 = vcombine.high %v2641, %v2649
    %v2669 = vunpack.c.l.s4 1934713408
    %v2670 = vunpack.c.0.s8 %v2669
    %v2671 = vlaneseq
    %v2672 = vshrl.u32 %v2671, 7
    %v2673 = vsub.s32 %v2670, %v2672
    %v2674 = vrot.slane %v2666, %v2673
    %v2676 = vunpack.c.l.s4 1934713408
    %v2677 = vunpack.c.0.s8 %v2676
    %v2678 = vlaneseq
    %v2679 = vshrl.u32 %v2678, 7
    %v2680 = vsub.s32 %v2677, %v2679
    %v2681 = vrot.slane %v2667, %v2680
    %v2682 = vcombine.low %v2657, %v2665
    %v2683 = vcombine.high %v2657, %v2665
    %v2685 = vunpack.c.l.s4 1934713408
    %v2686 = vunpack.c.0.s8 %v2685
    %v2687 = vlaneseq
    %v2688 = vshrl.u32 %v2687, 7
    %v2689 = vsub.s32 %v2686, %v2688
    %v2690 = vrot.slane %v2682, %v2689
    %v2692 = vunpack.c.l.s4 1934713408
    %v2693 = vunpack.c.0.s8 %v2692
    %v2694 = vlaneseq
    %v2695 = vshrl.u32 %v2694, 7
    %v2696 = vsub.s32 %v2693, %v2695
    %v2697 = vrot.slane %v2683, %v2696
    %v2698 = vcombine.low %v2674, %v2690
    %v2699 = vcombine.high %v2674, %v2690
    %v2700 = vcombine.low %v2681, %v2697
    %v2701 = vcombine.high %v2681, %v2697
    %v2702 = vcombine.low %v2606, %v2613
    %v2704 = vunpack.c.l.s4 1983009808
    %v2705 = vunpack.c.0.s8 %v2704
    %v2706 = vlaneseq
    %v2707 = vshrl.u32 %v2706, 7
    %v2708 = vsub.s32 %v2705, %v2707
    %v2709 = vrot.slane %v2702, %v2708
    %v2710 = vcombine.low %v2630, %v2631
    %v2712 = vunpack.c.l.s4 1983009808
    %v2713 = vunpack.c.0.s8 %v2712
    %v2714 = vlaneseq
    %v2715 = vshrl.u32 %v2714, 7
    %v2716 = vsub.s32 %v2713, %v2715
    %v2717 = vrot.slane %v2710, %v2716
    %v2718 = vcombine.low %v2622, %v2629
    %v2720 = vunpack.c.l.s4 1983009808
    %v2721 = vunpack.c.0.s8 %v2720
    %v2722 = vlaneseq
    %v2723 = vshrl.u32 %v2722, 7
    %v2724 = vsub.s32 %v2721, %v2723
    %v2725 = vrot.slane %v2718, %v2724
    %v2726 = vcombine.low %v2632, %v2633
    %v2728 = vunpack.c.l.s4 1983009808
    %v2729 = vunpack.c.0.s8 %v2728
    %v2730 = vlaneseq
    %v2731 = vshrl.u32 %v2730, 7
    %v2732 = vsub.s32 %v2729, %v2731
    %v2733 = vrot.slane %v2726, %v2732
    %v2734 = vcombine.low %v2709, %v2717
    %v2735 = vcombine.high %v2709, %v2717
    %v2737 = vunpack.c.l.s4 1934713408
    %v2738 = vunpack.c.0.s8 %v2737
    %v2739 = vlaneseq
    %v2740 = vshrl.u32 %v2739, 7
    %v2741 = vsub.s32 %v2738, %v2740
    %v2742 = vrot.slane %v2734, %v2741
    %v2744 = vunpack.c.l.s4 1934713408
    %v2745 = vunpack.c.0.s8 %v2744
    %v2746 = vlaneseq
    %v2747 = vshrl.u32 %v2746, 7
    %v2748 = vsub.s32 %v2745, %v2747
    %v2749 = vrot.slane %v2735, %v2748
    %v2750 = vcombine.low %v2725, %v2733
    %v2751 = vcombine.high %v2725, %v2733
    %v2753 = vunpack.c.l.s4 1934713408
    %v2754 = vunpack.c.0.s8 %v2753
    %v2755 = vlaneseq
    %v2756 = vshrl.u32 %v2755, 7
    %v2757 = vsub.s32 %v2754, %v2756
    %v2758 = vrot.slane %v2750, %v2757
    %v2760 = vunpack.c.l.s4 1934713408
    %v2761 = vunpack.c.0.s8 %v2760
    %v2762 = vlaneseq
    %v2763 = vshrl.u32 %v2762, 7
    %v2764 = vsub.s32 %v2761, %v2763
    %v2765 = vrot.slane %v2751, %v2764
    %v2766 = vcombine.low %v2742, %v2758
    %v2767 = vcombine.high %v2742, %v2758
    %v2768 = vcombine.low %v2749, %v2765
    %v2769 = vcombine.high %v2749, %v2765
    %2772 = vrot.lane.b32.xlu0 %v2699, 8
    %v2773 = vpop.permute.xlu0 %2772
    %2774 = vrot.lane.b32.xlu0 %v2767, 8
    %v2775 = vpop.permute.xlu0 %2774
    %2780 = vrot.lane.b32.xlu0 %v2700, 16
    %v2781 = vpop.permute.xlu0 %2780
    %2782 = vrot.lane.b32.xlu0 %v2768, 16
    %v2783 = vpop.permute.xlu0 %2782
    %2788 = vrot.lane.b32.xlu0 %v2701, 24
    %v2789 = vpop.permute.xlu0 %2788
    %2790 = vrot.lane.b32.xlu0 %v2769, 24
    %v2791 = vpop.permute.xlu0 %2790
    %v2794 = vsel %vm374, %v2698, %v2773
    %v2795 = vsel %vm374, %v2766, %v2775
    %v2796 = vsel %vm2085, %v2794, %v2781
    %v2797 = vsel %vm2085, %v2795, %v2783
    %vm2798 = vcmask 195584
    %v2799 = vsel %vm2798, %v2796, %v2789
    %v2800 = vsel %vm2798, %v2797, %v2791
    %v2801 = vld [vmem:[#allocation5 + $0x30] sm:$0xf]
    %v2802 = vld [vmem:[#allocation5 + $0x34] sm:$0xf]
    %v2803 = vld [vmem:[#allocation5 + $0x38] sm:$0xf]
    %v2804 = vld [vmem:[#allocation5 + $0x3c] sm:$0xf]
    %v2805 = vpack.c.bf16 %v2800, %v2799
    %v2806 = vlaneseq
    %v2807 = vshrl.u32 %v2806, 7
    %v2808 = vsub.s32 0, %v2807
    %v2809 = vrot.slane %v726, %v2808
    %v2814 = vunpack.c.l.b16 %v2801
    %v2815 = vunpack.c.l.b16 %v2802
    %v2816 = vunpack.c.l.b16 %v2803
    %v2817 = vunpack.c.l.b16 %v2804
    %v2818 = vpack.c.b16 %v2815, %v2814
    %v2819 = vpack.c.b16 %v2817, %v2816
    %v2823 = vsel %vm748, %v2805, 0
    %2825 = vmatprep.subr.bf16.mxu0 0
    %2826 = vmatpush1.bf16.msra.mxu0 0
    %2827 = vmatprep.subr.bf16.mxu0 0
    %2828 = vmatpush1.bf16.msra.mxu0 0
    %2829 = vmatprep.subr.bf16.mxu0 0
    %2830 = vmatpush1.bf16.msra.mxu0 0
    %2831 = vmatprep.subr.bf16.mxu0 0
    %2832 = vmatpush1.bf16.msra.mxu0 0
    %2833 = vmatprep.subr.bf16.mxu0 0
    %2834 = vmatpush1.bf16.msra.mxu0 0
    %2835 = vmatprep.subr.bf16.mxu0 0
    %2836 = vmatpush1.bf16.msra.mxu0 0
    %2837 = vmatprep.subr.bf16.mxu0 0
    %2838 = vmatpush1.bf16.msra.mxu0 %v2819
    %2839 = vmatprep.subr.bf16.mxu0 0
    %2840 = vmatpush1.bf16.msra.mxu0 %v2818
    %2841 = vmatprep.subr.bf16.mxu0 0
    %2842 = vmatpush2.bf16.msra.mxu0 0
    %2843 = vmatprep.subr.bf16.mxu0 0
    %2844 = vmatpush2.bf16.msra.mxu0 0
    %2845 = vmatprep.subr.bf16.mxu0 0
    %2846 = vmatpush2.bf16.msra.mxu0 0
    %2847 = vmatprep.subr.bf16.mxu0 0
    %2848 = vmatpush2.bf16.msra.mxu0 0
    %2849 = vmatprep.subr.bf16.mxu0 0
    %2850 = vmatpush2.bf16.msra.mxu0 0
    %2851 = vmatprep.subr.bf16.mxu0 0
    %2852 = vmatpush2.bf16.msra.mxu0 0
    %2853 = vmatprep.subr.bf16.mxu0 0
    %2854 = vmatpush2.bf16.msra.mxu0 0
    %2855 = vmatprep.subr.bf16.mxu0 0
    %2856 = vmatpush2.bf16.msra.mxu0 0
    %2857 = vmatprep.mubr.bf16.mxu0 0
    %2858 = vmatmul.mubr.bf16.gmra.mxu0 %v2823
    %v2859 = vpop.f32.mrf.mxu0
    %v2860 = vadd.f32 %v2809, %v2859
    %v2861 = vpop.f32.mrf.mxu0
    %v2862 = vpop.f32.mrf.mxu0
    %v2863 = vadd.f32 %v2809, %v2862
    %v2864 = vpop.f32.mrf.mxu0
    %2865 = vdwg.mxu0
    %v2866 = vadd.f32 %v150, %v2860
    %v2867 = vadd.f32 %v151, %v2863
    %v2868 = vsel %vm748, %v2866, 0.0
    %2869 = vadd.xlane.f32.xlu0 %v2868
    %v2870 = vpop.xlane.xlu0 %2869
    %v2871 = vsel %vm748, %v2867, 0.0
    %2872 = vadd.xlane.f32.xlu0 %v2871
    %v2873 = vpop.xlane.xlu0 %2872
    %v2874 = vrcp.pop 32.0
    %v2875 = vmul.f32 %v2870, %v2874
    %v2876 = vmul.f32 %v2873, %v2874
    %v2877 = vsub.f32 %v2866, %v2875
    %v2878 = vsub.f32 %v2867, %v2876
    %v2879 = vmul.f32 %v2877, %v2877
    %v2880 = vmul.f32 %v2878, %v2878
    %v2881 = vsel %vm748, %v2879, 0.0
    %2882 = vadd.xlane.f32.xlu0 %v2881
    %v2883 = vpop.xlane.xlu0 %2882
    %v2884 = vsel %vm748, %v2880, 0.0
    %2885 = vadd.xlane.f32.xlu0 %v2884
    %v2886 = vpop.xlane.xlu0 %2885
    %v2887 = vmul.f32 %v2883, %v2874
    %v2888 = vmul.f32 %v2886, %v2874
    %v2889 = vadd.f32 %v2887, 1e-05
    %v2890 = vadd.f32 %v2888, 1e-05
    %v2891 = vrsqrt.pop %v2889
    %v2892 = vrsqrt.pop %v2890
    %v2893 = vmul.f32 %v2877, %v2891
    %v2894 = vmul.f32 %v2878, %v2892
    %v2895 = vlaneseq
    %v2896 = vshrl.u32 %v2895, 7
    %v2897 = vsub.s32 1, %v2896
    %v2898 = vrot.slane %v726, %v2897
    %v2899 = vmul.f32 %v2893, %v2898
    %v2900 = vmul.f32 %v2894, %v2898
    %v2901 = vlaneseq
    %v2902 = vshrl.u32 %v2901, 7
    %v2903 = vsub.s32 2, %v2902
    %v2904 = vrot.slane %v726, %v2903
    %v2905 = vadd.f32 %v2899, %v2904
    %v2906 = vadd.f32 %v2900, %v2904
    %v2907 = vld [vmem:[#allocation5 + $0x40] sm:$0xf]
    %v2908 = vld [vmem:[#allocation5 + $0x44] sm:$0xf]
    %v2909 = vld [vmem:[#allocation5 + $0x48] sm:$0xf]
    %v2910 = vld [vmem:[#allocation5 + $0x4c] sm:$0xf]
    %v2911 = vld [vmem:[#allocation5 + $0x10] sm:$0xf]
    %v2912 = vld [vmem:[#allocation5 + $0x14] sm:$0xf]
    %v2913 = vld [vmem:[#allocation5 + $0x18] sm:$0xf]
    %v2914 = vld [vmem:[#allocation5 + $0x1c] sm:$0xf]
    %v2915 = vld [vmem:[#allocation5 + $0x20] sm:$0xf]
    %v2916 = vld [vmem:[#allocation5 + $0x24] sm:$0xf]
    %v2917 = vld [vmem:[#allocation5 + $0x28] sm:$0xf]
    %v2918 = vld [vmem:[#allocation5 + $0x2c] sm:$0xf]
    %v2919 = vpack.c.bf16 %v2906, %v2905
    %v2920 = vlaneseq
    %v2921 = vshrl.u32 %v2920, 7
    %v2922 = vsub.s32 3, %v2921
    %v2923 = vrot.slane %v726, %v2922
    %v2928 = vunpack.c.l.b16 %v2907
    %v2929 = vunpack.c.l.b16 %v2908
    %v2930 = vunpack.c.l.b16 %v2909
    %v2931 = vunpack.c.l.b16 %v2910
    %v2932 = vpack.c.b16 %v2929, %v2928
    %v2933 = vpack.c.b16 %v2931, %v2930
    %v2937 = vsel %vm748, %v2919, 0
    %2939 = vmatprep.subr.bf16.mxu0 0
    %2940 = vmatpush1.bf16.msra.mxu0 0
    %2941 = vmatprep.subr.bf16.mxu0 0
    %2942 = vmatpush1.bf16.msra.mxu0 0
    %2943 = vmatprep.subr.bf16.mxu0 0
    %2944 = vmatpush1.bf16.msra.mxu0 0
    %2945 = vmatprep.subr.bf16.mxu0 0
    %2946 = vmatpush1.bf16.msra.mxu0 0
    %2947 = vmatprep.subr.bf16.mxu0 0
    %2948 = vmatpush1.bf16.msra.mxu0 0
    %2949 = vmatprep.subr.bf16.mxu0 0
    %2950 = vmatpush1.bf16.msra.mxu0 0
    %2951 = vmatprep.subr.bf16.mxu0 0
    %2952 = vmatpush1.bf16.msra.mxu0 %v2933
    %2953 = vmatprep.subr.bf16.mxu0 0
    %2954 = vmatpush1.bf16.msra.mxu0 %v2932
    %2955 = vmatprep.subr.bf16.mxu0 0
    %2956 = vmatpush2.bf16.msra.mxu0 0
    %2957 = vmatprep.subr.bf16.mxu0 0
    %2958 = vmatpush2.bf16.msra.mxu0 0
    %2959 = vmatprep.subr.bf16.mxu0 0
    %2960 = vmatpush2.bf16.msra.mxu0 0
    %2961 = vmatprep.subr.bf16.mxu0 0
    %2962 = vmatpush2.bf16.msra.mxu0 0
    %2963 = vmatprep.subr.bf16.mxu0 0
    %2964 = vmatpush2.bf16.msra.mxu0 0
    %2965 = vmatprep.subr.bf16.mxu0 0
    %2966 = vmatpush2.bf16.msra.mxu0 0
    %2967 = vmatprep.subr.bf16.mxu0 0
    %2968 = vmatpush2.bf16.msra.mxu0 0
    %2969 = vmatprep.subr.bf16.mxu0 0
    %2970 = vmatpush2.bf16.msra.mxu0 0
    %2971 = vmatprep.mubr.bf16.mxu0 0
    %2972 = vmatmul.mubr.bf16.gmra.mxu0 %v2937
    %v2973 = vpop.f32.mrf.mxu0
    %v2974 = vadd.f32 %v2923, %v2973
    %v2975 = vpop.f32.mrf.mxu0
    %v2976 = vpop.f32.mrf.mxu0
    %v2977 = vadd.f32 %v2923, %v2976
    %v2978 = vpop.f32.mrf.mxu0
    %2979 = vdwg.mxu0
    %v2980 = vmax.f32 %v2974, 0.0
    %v2981 = vmax.f32 %v2977, 0.0
    %v2982 = vpack.c.bf16 %v2981, %v2980
    %v2983 = vlaneseq
    %v2984 = vshrl.u32 %v2983, 7
    %v2985 = vsub.s32 4, %v2984
    %v2986 = vrot.slane %v726, %v2985
    %v2995 = vunpack.c.l.b16 %v2911
    %v2996 = vunpack.c.l.b16 %v2912
    %v2997 = vunpack.c.l.b16 %v2913
    %v2998 = vunpack.c.l.b16 %v2914
    %v2999 = vunpack.c.l.b16 %v2915
    %v3000 = vunpack.c.l.b16 %v2916
    %v3001 = vunpack.c.l.b16 %v2917
    %v3002 = vunpack.c.l.b16 %v2918
    %v3003 = vpack.c.b16 %v2996, %v2995
    %v3004 = vpack.c.b16 %v2998, %v2997
    %v3005 = vpack.c.b16 %v3000, %v2999
    %v3006 = vpack.c.b16 %v3002, %v3001
    %v3012 = vsel %vm99, %v2982, 0
    %3014 = vmatprep.subr.bf16.mxu0 0
    %3015 = vmatpush1.bf16.msra.mxu0 0
    %3016 = vmatprep.subr.bf16.mxu0 0
    %3017 = vmatpush1.bf16.msra.mxu0 0
    %3018 = vmatprep.subr.bf16.mxu0 0
    %3019 = vmatpush1.bf16.msra.mxu0 0
    %3020 = vmatprep.subr.bf16.mxu0 0
    %3021 = vmatpush1.bf16.msra.mxu0 0
    %3022 = vmatprep.subr.bf16.mxu0 0
    %3023 = vmatpush1.bf16.msra.mxu0 %v3006
    %3024 = vmatprep.subr.bf16.mxu0 0
    %3025 = vmatpush1.bf16.msra.mxu0 %v3005
    %3026 = vmatprep.subr.bf16.mxu0 0
    %3027 = vmatpush1.bf16.msra.mxu0 %v3004
    %3028 = vmatprep.subr.bf16.mxu0 0
    %3029 = vmatpush1.bf16.msra.mxu0 %v3003
    %3030 = vmatprep.subr.bf16.mxu0 0
    %3031 = vmatpush2.bf16.msra.mxu0 0
    %3032 = vmatprep.subr.bf16.mxu0 0
    %3033 = vmatpush2.bf16.msra.mxu0 0
    %3034 = vmatprep.subr.bf16.mxu0 0
    %3035 = vmatpush2.bf16.msra.mxu0 0
    %3036 = vmatprep.subr.bf16.mxu0 0
    %3037 = vmatpush2.bf16.msra.mxu0 0
    %3038 = vmatprep.subr.bf16.mxu0 0
    %3039 = vmatpush2.bf16.msra.mxu0 0
    %3040 = vmatprep.subr.bf16.mxu0 0
    %3041 = vmatpush2.bf16.msra.mxu0 0
    %3042 = vmatprep.subr.bf16.mxu0 0
    %3043 = vmatpush2.bf16.msra.mxu0 0
    %3044 = vmatprep.subr.bf16.mxu0 0
    %3045 = vmatpush2.bf16.msra.mxu0 0
    %3046 = vmatprep.mubr.bf16.mxu0 0
    %3047 = vmatmul.mubr.bf16.gmra.mxu0 %v3012
    %v3048 = vpop.f32.mrf.mxu0
    %v3049 = vadd.f32 %v2986, %v3048
    %v3050 = vpop.f32.mrf.mxu0
    %v3051 = vpop.f32.mrf.mxu0
    %v3052 = vadd.f32 %v2986, %v3051
    %v3053 = vpop.f32.mrf.mxu0
    %3054 = vdwg.mxu0
    %v3055 = vadd.f32 %v2905, %v3049
    %v3056 = vadd.f32 %v2906, %v3052
    %v3057 = vsel %vm748, %v3055, 0.0
    %3058 = vadd.xlane.f32.xlu0 %v3057
    %v3059 = vpop.xlane.xlu0 %3058
    %v3060 = vsel %vm748, %v3056, 0.0
    %3061 = vadd.xlane.f32.xlu0 %v3060
    %v3062 = vpop.xlane.xlu0 %3061
    %v3063 = vmul.f32 %v3059, %v2874
    %v3064 = vmul.f32 %v3062, %v2874
    %v3065 = vsub.f32 %v3055, %v3063
    %v3066 = vsub.f32 %v3056, %v3064
    %v3067 = vmul.f32 %v3065, %v3065
    %v3068 = vmul.f32 %v3066, %v3066
    %v3069 = vsel %vm748, %v3067, 0.0
    %3070 = vadd.xlane.f32.xlu0 %v3069
    %v3071 = vpop.xlane.xlu0 %3070
    %v3072 = vsel %vm748, %v3068, 0.0
    %3073 = vadd.xlane.f32.xlu0 %v3072
    %v3074 = vpop.xlane.xlu0 %3073
    %v3075 = vmul.f32 %v3071, %v2874
    %v3076 = vmul.f32 %v3074, %v2874
    %v3077 = vadd.f32 %v3075, 1e-05
    %v3078 = vadd.f32 %v3076, 1e-05
    %v3079 = vrsqrt.pop %v3077
    %v3080 = vrsqrt.pop %v3078
    %v3081 = vmul.f32 %v3065, %v3079
    %v3082 = vmul.f32 %v3066, %v3080
    %v3083 = vlaneseq
    %v3084 = vshrl.u32 %v3083, 7
    %v3085 = vsub.s32 5, %v3084
    %v3086 = vrot.slane %v726, %v3085
    %v3087 = vmul.f32 %v3081, %v3086
    %v3088 = vmul.f32 %v3082, %v3086
    %v3089 = vlaneseq
    %v3090 = vshrl.u32 %v3089, 7
    %v3091 = vsub.s32 6, %v3090
    %v3092 = vrot.slane %v726, %v3091
    %v3093 = vadd.f32 %v3087, %v3092
    %v3094 = vadd.f32 %v3088, %v3092
    %s3095 = scalar_lea.vmem %s4, 8
    %v3096 = vld [vmem:[%s3095] sm:$0xff]
    %s3097 = scalar_lea.vmem [#allocation5], 80
    %v3098 = vld [vmem:[%s3097] sm:$0xf]
    %v3099 = vld [vmem:[%s3097 + $0x4] sm:$0xf]
    %v3100 = vld [vmem:[%s3097 + $0x8] sm:$0xf]
    %v3101 = vld [vmem:[%s3097 + $0xc] sm:$0xf]
    %v3102 = vpack.c.bf16 %v3094, %v3093
    %v3103 = vlaneseq
    %v3104 = vshrl.u32 %v3103, 7
    %v3105 = vsub.s32 7, %v3104
    %v3106 = vrot.slane %v3096, %v3105
    %v3111 = vunpack.c.l.b16 %v3098
    %v3112 = vunpack.c.l.b16 %v3099
    %v3113 = vunpack.c.l.b16 %v3100
    %v3114 = vunpack.c.l.b16 %v3101
    %v3115 = vpack.c.b16 %v3112, %v3111
    %v3116 = vpack.c.b16 %v3114, %v3113
    %v3120 = vsel %vm748, %v3102, 0
    %3122 = vmatprep.subr.bf16.mxu0 0
    %3123 = vmatpush1.bf16.msra.mxu0 0
    %3124 = vmatprep.subr.bf16.mxu0 0
    %3125 = vmatpush1.bf16.msra.mxu0 0
    %3126 = vmatprep.subr.bf16.mxu0 0
    %3127 = vmatpush1.bf16.msra.mxu0 0
    %3128 = vmatprep.subr.bf16.mxu0 0
    %3129 = vmatpush1.bf16.msra.mxu0 0
    %3130 = vmatprep.subr.bf16.mxu0 0
    %3131 = vmatpush1.bf16.msra.mxu0 0
    %3132 = vmatprep.subr.bf16.mxu0 0
    %3133 = vmatpush1.bf16.msra.mxu0 0
    %3134 = vmatprep.subr.bf16.mxu0 0
    %3135 = vmatpush1.bf16.msra.mxu0 %v3116
    %3136 = vmatprep.subr.bf16.mxu0 0
    %3137 = vmatpush1.bf16.msra.mxu0 %v3115
    %3138 = vmatprep.subr.bf16.mxu0 0
    %3139 = vmatpush2.bf16.msra.mxu0 0
    %3140 = vmatprep.subr.bf16.mxu0 0
    %3141 = vmatpush2.bf16.msra.mxu0 0
    %3142 = vmatprep.subr.bf16.mxu0 0
    %3143 = vmatpush2.bf16.msra.mxu0 0
    %3144 = vmatprep.subr.bf16.mxu0 0
    %3145 = vmatpush2.bf16.msra.mxu0 0
    %3146 = vmatprep.subr.bf16.mxu0 0
    %3147 = vmatpush2.bf16.msra.mxu0 0
    %3148 = vmatprep.subr.bf16.mxu0 0
    %3149 = vmatpush2.bf16.msra.mxu0 0
    %3150 = vmatprep.subr.bf16.mxu0 0
    %3151 = vmatpush2.bf16.msra.mxu0 0
    %3152 = vmatprep.subr.bf16.mxu0 0
    %3153 = vmatpush2.bf16.msra.mxu0 0
    %3154 = vmatprep.mubr.bf16.mxu0 0
    %3155 = vmatmul.mubr.bf16.gmra.mxu0 %v3120
    %v3156 = vpop.f32.mrf.mxu0
    %v3157 = vadd.f32 %v3106, %v3156
    %v3158 = vpop.f32.mrf.mxu0
    %v3159 = vpop.f32.mrf.mxu0
    %v3160 = vadd.f32 %v3106, %v3159
    %v3161 = vpop.f32.mrf.mxu0
    %3162 = vdwg.mxu0
    %3165 = vrot.lane.b32.xlu0 %v3157, 120
    %v3166 = vpop.permute.xlu0 %3165
    %3167 = vrot.lane.b32.xlu0 %v3160, 120
    %v3168 = vpop.permute.xlu0 %3167
    %3171 = vrot.lane.b32.xlu0 %v3157, 112
    %v3172 = vpop.permute.xlu0 %3171
    %3173 = vrot.lane.b32.xlu0 %v3160, 112
    %v3174 = vpop.permute.xlu0 %3173
    %3177 = vrot.lane.b32.xlu0 %v3157, 104
    %v3178 = vpop.permute.xlu0 %3177
    %3179 = vrot.lane.b32.xlu0 %v3160, 104
    %v3180 = vpop.permute.xlu0 %3179
    %v3183 = vcombine.low %v3157, %v3172
    %v3184 = vcombine.high %v3157, %v3172
    %v3186 = vunpack.c.l.s4 1983009808
    %v3187 = vunpack.c.0.s8 %v3186
    %v3188 = vlaneseq
    %v3189 = vshrl.u32 %v3188, 7
    %v3190 = vsub.s32 %v3187, %v3189
    %v3191 = vrot.slane %v3183, %v3190
    %v3193 = vunpack.c.l.s4 1983009808
    %v3194 = vunpack.c.0.s8 %v3193
    %v3195 = vlaneseq
    %v3196 = vshrl.u32 %v3195, 7
    %v3197 = vsub.s32 %v3194, %v3196
    %v3198 = vrot.slane %v3184, %v3197
    %v3199 = vcombine.low %v3166, %v3178
    %v3200 = vcombine.high %v3166, %v3178
    %v3202 = vunpack.c.l.s4 1983009808
    %v3203 = vunpack.c.0.s8 %v3202
    %v3204 = vlaneseq
    %v3205 = vshrl.u32 %v3204, 7
    %v3206 = vsub.s32 %v3203, %v3205
    %v3207 = vrot.slane %v3199, %v3206
    %v3209 = vunpack.c.l.s4 1983009808
    %v3210 = vunpack.c.0.s8 %v3209
    %v3211 = vlaneseq
    %v3212 = vshrl.u32 %v3211, 7
    %v3213 = vsub.s32 %v3210, %v3212
    %v3214 = vrot.slane %v3200, %v3213
    %v3215 = vcombine.low %v3191, %v3207
    %v3216 = vcombine.high %v3191, %v3207
    %v3218 = vunpack.c.l.s4 1934713408
    %v3219 = vunpack.c.0.s8 %v3218
    %v3220 = vlaneseq
    %v3221 = vshrl.u32 %v3220, 7
    %v3222 = vsub.s32 %v3219, %v3221
    %v3223 = vrot.slane %v3215, %v3222
    %v3225 = vunpack.c.l.s4 1934713408
    %v3226 = vunpack.c.0.s8 %v3225
    %v3227 = vlaneseq
    %v3228 = vshrl.u32 %v3227, 7
    %v3229 = vsub.s32 %v3226, %v3228
    %v3230 = vrot.slane %v3216, %v3229
    %v3231 = vcombine.low %v3198, %v3214
    %v3232 = vcombine.high %v3198, %v3214
    %v3234 = vunpack.c.l.s4 1934713408
    %v3235 = vunpack.c.0.s8 %v3234
    %v3236 = vlaneseq
    %v3237 = vshrl.u32 %v3236, 7
    %v3238 = vsub.s32 %v3235, %v3237
    %v3239 = vrot.slane %v3231, %v3238
    %v3241 = vunpack.c.l.s4 1934713408
    %v3242 = vunpack.c.0.s8 %v3241
    %v3243 = vlaneseq
    %v3244 = vshrl.u32 %v3243, 7
    %v3245 = vsub.s32 %v3242, %v3244
    %v3246 = vrot.slane %v3232, %v3245
    %v3247 = vcombine.high %v3223, 0.0
    %v3248 = vcombine.high %v3230, 0.0
    %v3249 = vcombine.high %v3239, 0.0
    %v3250 = vcombine.high %v3246, 0.0
    %v3251 = vcombine.low %v3160, %v3174
    %v3252 = vcombine.high %v3160, %v3174
    %v3254 = vunpack.c.l.s4 1983009808
    %v3255 = vunpack.c.0.s8 %v3254
    %v3256 = vlaneseq
    %v3257 = vshrl.u32 %v3256, 7
    %v3258 = vsub.s32 %v3255, %v3257
    %v3259 = vrot.slane %v3251, %v3258
    %v3261 = vunpack.c.l.s4 1983009808
    %v3262 = vunpack.c.0.s8 %v3261
    %v3263 = vlaneseq
    %v3264 = vshrl.u32 %v3263, 7
    %v3265 = vsub.s32 %v3262, %v3264
    %v3266 = vrot.slane %v3252, %v3265
    %v3267 = vcombine.low %v3168, %v3180
    %v3268 = vcombine.high %v3168, %v3180
    %v3270 = vunpack.c.l.s4 1983009808
    %v3271 = vunpack.c.0.s8 %v3270
    %v3272 = vlaneseq
    %v3273 = vshrl.u32 %v3272, 7
    %v3274 = vsub.s32 %v3271, %v3273
    %v3275 = vrot.slane %v3267, %v3274
    %v3277 = vunpack.c.l.s4 1983009808
    %v3278 = vunpack.c.0.s8 %v3277
    %v3279 = vlaneseq
    %v3280 = vshrl.u32 %v3279, 7
    %v3281 = vsub.s32 %v3278, %v3280
    %v3282 = vrot.slane %v3268, %v3281
    %v3283 = vcombine.low %v3259, %v3275
    %v3284 = vcombine.high %v3259, %v3275
    %v3286 = vunpack.c.l.s4 1934713408
    %v3287 = vunpack.c.0.s8 %v3286
    %v3288 = vlaneseq
    %v3289 = vshrl.u32 %v3288, 7
    %v3290 = vsub.s32 %v3287, %v3289
    %v3291 = vrot.slane %v3283, %v3290
    %v3293 = vunpack.c.l.s4 1934713408
    %v3294 = vunpack.c.0.s8 %v3293
    %v3295 = vlaneseq
    %v3296 = vshrl.u32 %v3295, 7
    %v3297 = vsub.s32 %v3294, %v3296
    %v3298 = vrot.slane %v3284, %v3297
    %v3299 = vcombine.low %v3266, %v3282
    %v3300 = vcombine.high %v3266, %v3282
    %v3302 = vunpack.c.l.s4 1934713408
    %v3303 = vunpack.c.0.s8 %v3302
    %v3304 = vlaneseq
    %v3305 = vshrl.u32 %v3304, 7
    %v3306 = vsub.s32 %v3303, %v3305
    %v3307 = vrot.slane %v3299, %v3306
    %v3309 = vunpack.c.l.s4 1934713408
    %v3310 = vunpack.c.0.s8 %v3309
    %v3311 = vlaneseq
    %v3312 = vshrl.u32 %v3311, 7
    %v3313 = vsub.s32 %v3310, %v3312
    %v3314 = vrot.slane %v3300, %v3313
    %v3315 = vcombine.high %v3291, 0.0
    %v3316 = vcombine.high %v3298, 0.0
    %v3317 = vcombine.high %v3307, 0.0
    %v3318 = vcombine.high %v3314, 0.0
    %v3319 = vcombine.low %v3223, %v3230
    %v3321 = vunpack.c.l.s4 1983009808
    %v3322 = vunpack.c.0.s8 %v3321
    %v3323 = vlaneseq
    %v3324 = vshrl.u32 %v3323, 7
    %v3325 = vsub.s32 %v3322, %v3324
    %v3326 = vrot.slane %v3319, %v3325
    %v3327 = vcombine.low %v3247, %v3248
    %v3329 = vunpack.c.l.s4 1983009808
    %v3330 = vunpack.c.0.s8 %v3329
    %v3331 = vlaneseq
    %v3332 = vshrl.u32 %v3331, 7
    %v3333 = vsub.s32 %v3330, %v3332
    %v3334 = vrot.slane %v3327, %v3333
    %v3335 = vcombine.low %v3239, %v3246
    %v3337 = vunpack.c.l.s4 1983009808
    %v3338 = vunpack.c.0.s8 %v3337
    %v3339 = vlaneseq
    %v3340 = vshrl.u32 %v3339, 7
    %v3341 = vsub.s32 %v3338, %v3340
    %v3342 = vrot.slane %v3335, %v3341
    %v3343 = vcombine.low %v3249, %v3250
    %v3345 = vunpack.c.l.s4 1983009808
    %v3346 = vunpack.c.0.s8 %v3345
    %v3347 = vlaneseq
    %v3348 = vshrl.u32 %v3347, 7
    %v3349 = vsub.s32 %v3346, %v3348
    %v3350 = vrot.slane %v3343, %v3349
    %v3351 = vcombine.low %v3326, %v3334
    %v3352 = vcombine.high %v3326, %v3334
    %v3354 = vunpack.c.l.s4 1934713408
    %v3355 = vunpack.c.0.s8 %v3354
    %v3356 = vlaneseq
    %v3357 = vshrl.u32 %v3356, 7
    %v3358 = vsub.s32 %v3355, %v3357
    %v3359 = vrot.slane %v3351, %v3358
    %v3361 = vunpack.c.l.s4 1934713408
    %v3362 = vunpack.c.0.s8 %v3361
    %v3363 = vlaneseq
    %v3364 = vshrl.u32 %v3363, 7
    %v3365 = vsub.s32 %v3362, %v3364
    %v3366 = vrot.slane %v3352, %v3365
    %v3367 = vcombine.low %v3342, %v3350
    %v3368 = vcombine.high %v3342, %v3350
    %v3370 = vunpack.c.l.s4 1934713408
    %v3371 = vunpack.c.0.s8 %v3370
    %v3372 = vlaneseq
    %v3373 = vshrl.u32 %v3372, 7
    %v3374 = vsub.s32 %v3371, %v3373
    %v3375 = vrot.slane %v3367, %v3374
    %v3377 = vunpack.c.l.s4 1934713408
    %v3378 = vunpack.c.0.s8 %v3377
    %v3379 = vlaneseq
    %v3380 = vshrl.u32 %v3379, 7
    %v3381 = vsub.s32 %v3378, %v3380
    %v3382 = vrot.slane %v3368, %v3381
    %v3383 = vcombine.low %v3359, %v3375
    %v3384 = vcombine.high %v3359, %v3375
    %v3385 = vcombine.low %v3366, %v3382
    %v3386 = vcombine.high %v3366, %v3382
    %v3387 = vcombine.low %v3291, %v3298
    %v3389 = vunpack.c.l.s4 1983009808
    %v3390 = vunpack.c.0.s8 %v3389
    %v3391 = vlaneseq
    %v3392 = vshrl.u32 %v3391, 7
    %v3393 = vsub.s32 %v3390, %v3392
    %v3394 = vrot.slane %v3387, %v3393
    %v3395 = vcombine.low %v3315, %v3316
    %v3397 = vunpack.c.l.s4 1983009808
    %v3398 = vunpack.c.0.s8 %v3397
    %v3399 = vlaneseq
    %v3400 = vshrl.u32 %v3399, 7
    %v3401 = vsub.s32 %v3398, %v3400
    %v3402 = vrot.slane %v3395, %v3401
    %v3403 = vcombine.low %v3307, %v3314
    %v3405 = vunpack.c.l.s4 1983009808
    %v3406 = vunpack.c.0.s8 %v3405
    %v3407 = vlaneseq
    %v3408 = vshrl.u32 %v3407, 7
    %v3409 = vsub.s32 %v3406, %v3408
    %v3410 = vrot.slane %v3403, %v3409
    %v3411 = vcombine.low %v3317, %v3318
    %v3413 = vunpack.c.l.s4 1983009808
    %v3414 = vunpack.c.0.s8 %v3413
    %v3415 = vlaneseq
    %v3416 = vshrl.u32 %v3415, 7
    %v3417 = vsub.s32 %v3414, %v3416
    %v3418 = vrot.slane %v3411, %v3417
    %v3419 = vcombine.low %v3394, %v3402
    %v3420 = vcombine.high %v3394, %v3402
    %v3422 = vunpack.c.l.s4 1934713408
    %v3423 = vunpack.c.0.s8 %v3422
    %v3424 = vlaneseq
    %v3425 = vshrl.u32 %v3424, 7
    %v3426 = vsub.s32 %v3423, %v3425
    %v3427 = vrot.slane %v3419, %v3426
    %v3429 = vunpack.c.l.s4 1934713408
    %v3430 = vunpack.c.0.s8 %v3429
    %v3431 = vlaneseq
    %v3432 = vshrl.u32 %v3431, 7
    %v3433 = vsub.s32 %v3430, %v3432
    %v3434 = vrot.slane %v3420, %v3433
    %v3435 = vcombine.low %v3410, %v3418
    %v3436 = vcombine.high %v3410, %v3418
    %v3438 = vunpack.c.l.s4 1934713408
    %v3439 = vunpack.c.0.s8 %v3438
    %v3440 = vlaneseq
    %v3441 = vshrl.u32 %v3440, 7
    %v3442 = vsub.s32 %v3439, %v3441
    %v3443 = vrot.slane %v3435, %v3442
    %v3445 = vunpack.c.l.s4 1934713408
    %v3446 = vunpack.c.0.s8 %v3445
    %v3447 = vlaneseq
    %v3448 = vshrl.u32 %v3447, 7
    %v3449 = vsub.s32 %v3446, %v3448
    %v3450 = vrot.slane %v3436, %v3449
    %v3451 = vcombine.low %v3427, %v3443
    %v3452 = vcombine.high %v3427, %v3443
    %v3453 = vcombine.low %v3434, %v3450
    %v3454 = vcombine.high %v3434, %v3450
    %3455 = vrot.lane.b32.xlu0 %v3157, 96
    %v3456 = vpop.permute.xlu0 %3455
    %3457 = vrot.lane.b32.xlu0 %v3160, 96
    %v3458 = vpop.permute.xlu0 %3457
    %3459 = vrot.lane.b32.xlu0 %v3166, 96
    %v3460 = vpop.permute.xlu0 %3459
    %3461 = vrot.lane.b32.xlu0 %v3168, 96
    %v3462 = vpop.permute.xlu0 %3461
    %3463 = vrot.lane.b32.xlu0 %v3172, 96
    %v3464 = vpop.permute.xlu0 %3463
    %3465 = vrot.lane.b32.xlu0 %v3174, 96
    %v3466 = vpop.permute.xlu0 %3465
    %3467 = vrot.lane.b32.xlu0 %v3178, 96
    %v3468 = vpop.permute.xlu0 %3467
    %3469 = vrot.lane.b32.xlu0 %v3180, 96
    %v3470 = vpop.permute.xlu0 %3469
    %v3479 = vcombine.low %v3456, %v3464
    %v3480 = vcombine.high %v3456, %v3464
    %v3482 = vunpack.c.l.s4 1983009808
    %v3483 = vunpack.c.0.s8 %v3482
    %v3484 = vlaneseq
    %v3485 = vshrl.u32 %v3484, 7
    %v3486 = vsub.s32 %v3483, %v3485
    %v3487 = vrot.slane %v3479, %v3486
    %v3489 = vunpack.c.l.s4 1983009808
    %v3490 = vunpack.c.0.s8 %v3489
    %v3491 = vlaneseq
    %v3492 = vshrl.u32 %v3491, 7
    %v3493 = vsub.s32 %v3490, %v3492
    %v3494 = vrot.slane %v3480, %v3493
    %v3495 = vcombine.low %v3460, %v3468
    %v3496 = vcombine.high %v3460, %v3468
    %v3498 = vunpack.c.l.s4 1983009808
    %v3499 = vunpack.c.0.s8 %v3498
    %v3500 = vlaneseq
    %v3501 = vshrl.u32 %v3500, 7
    %v3502 = vsub.s32 %v3499, %v3501
    %v3503 = vrot.slane %v3495, %v3502
    %v3505 = vunpack.c.l.s4 1983009808
    %v3506 = vunpack.c.0.s8 %v3505
    %v3507 = vlaneseq
    %v3508 = vshrl.u32 %v3507, 7
    %v3509 = vsub.s32 %v3506, %v3508
    %v3510 = vrot.slane %v3496, %v3509
    %v3511 = vcombine.low %v3487, %v3503
    %v3512 = vcombine.high %v3487, %v3503
    %v3514 = vunpack.c.l.s4 1934713408
    %v3515 = vunpack.c.0.s8 %v3514
    %v3516 = vlaneseq
    %v3517 = vshrl.u32 %v3516, 7
    %v3518 = vsub.s32 %v3515, %v3517
    %v3519 = vrot.slane %v3511, %v3518
    %v3521 = vunpack.c.l.s4 1934713408
    %v3522 = vunpack.c.0.s8 %v3521
    %v3523 = vlaneseq
    %v3524 = vshrl.u32 %v3523, 7
    %v3525 = vsub.s32 %v3522, %v3524
    %v3526 = vrot.slane %v3512, %v3525
    %v3527 = vcombine.low %v3494, %v3510
    %v3528 = vcombine.high %v3494, %v3510
    %v3530 = vunpack.c.l.s4 1934713408
    %v3531 = vunpack.c.0.s8 %v3530
    %v3532 = vlaneseq
    %v3533 = vshrl.u32 %v3532, 7
    %v3534 = vsub.s32 %v3531, %v3533
    %v3535 = vrot.slane %v3527, %v3534
    %v3537 = vunpack.c.l.s4 1934713408
    %v3538 = vunpack.c.0.s8 %v3537
    %v3539 = vlaneseq
    %v3540 = vshrl.u32 %v3539, 7
    %v3541 = vsub.s32 %v3538, %v3540
    %v3542 = vrot.slane %v3528, %v3541
    %v3543 = vcombine.high %v3519, 0.0
    %v3544 = vcombine.high %v3526, 0.0
    %v3545 = vcombine.high %v3535, 0.0
    %v3546 = vcombine.high %v3542, 0.0
    %v3547 = vcombine.low %v3458, %v3466
    %v3548 = vcombine.high %v3458, %v3466
    %v3550 = vunpack.c.l.s4 1983009808
    %v3551 = vunpack.c.0.s8 %v3550
    %v3552 = vlaneseq
    %v3553 = vshrl.u32 %v3552, 7
    %v3554 = vsub.s32 %v3551, %v3553
    %v3555 = vrot.slane %v3547, %v3554
    %v3557 = vunpack.c.l.s4 1983009808
    %v3558 = vunpack.c.0.s8 %v3557
    %v3559 = vlaneseq
    %v3560 = vshrl.u32 %v3559, 7
    %v3561 = vsub.s32 %v3558, %v3560
    %v3562 = vrot.slane %v3548, %v3561
    %v3563 = vcombine.low %v3462, %v3470
    %v3564 = vcombine.high %v3462, %v3470
    %v3566 = vunpack.c.l.s4 1983009808
    %v3567 = vunpack.c.0.s8 %v3566
    %v3568 = vlaneseq
    %v3569 = vshrl.u32 %v3568, 7
    %v3570 = vsub.s32 %v3567, %v3569
    %v3571 = vrot.slane %v3563, %v3570
    %v3573 = vunpack.c.l.s4 1983009808
    %v3574 = vunpack.c.0.s8 %v3573
    %v3575 = vlaneseq
    %v3576 = vshrl.u32 %v3575, 7
    %v3577 = vsub.s32 %v3574, %v3576
    %v3578 = vrot.slane %v3564, %v3577
    %v3579 = vcombine.low %v3555, %v3571
    %v3580 = vcombine.high %v3555, %v3571
    %v3582 = vunpack.c.l.s4 1934713408
    %v3583 = vunpack.c.0.s8 %v3582
    %v3584 = vlaneseq
    %v3585 = vshrl.u32 %v3584, 7
    %v3586 = vsub.s32 %v3583, %v3585
    %v3587 = vrot.slane %v3579, %v3586
    %v3589 = vunpack.c.l.s4 1934713408
    %v3590 = vunpack.c.0.s8 %v3589
    %v3591 = vlaneseq
    %v3592 = vshrl.u32 %v3591, 7
    %v3593 = vsub.s32 %v3590, %v3592
    %v3594 = vrot.slane %v3580, %v3593
    %v3595 = vcombine.low %v3562, %v3578
    %v3596 = vcombine.high %v3562, %v3578
    %v3598 = vunpack.c.l.s4 1934713408
    %v3599 = vunpack.c.0.s8 %v3598
    %v3600 = vlaneseq
    %v3601 = vshrl.u32 %v3600, 7
    %v3602 = vsub.s32 %v3599, %v3601
    %v3603 = vrot.slane %v3595, %v3602
    %v3605 = vunpack.c.l.s4 1934713408
    %v3606 = vunpack.c.0.s8 %v3605
    %v3607 = vlaneseq
    %v3608 = vshrl.u32 %v3607, 7
    %v3609 = vsub.s32 %v3606, %v3608
    %v3610 = vrot.slane %v3596, %v3609
    %v3611 = vcombine.high %v3587, 0.0
    %v3612 = vcombine.high %v3594, 0.0
    %v3613 = vcombine.high %v3603, 0.0
    %v3614 = vcombine.high %v3610, 0.0
    %v3615 = vcombine.low %v3519, %v3526
    %v3617 = vunpack.c.l.s4 1983009808
    %v3618 = vunpack.c.0.s8 %v3617
    %v3619 = vlaneseq
    %v3620 = vshrl.u32 %v3619, 7
    %v3621 = vsub.s32 %v3618, %v3620
    %v3622 = vrot.slane %v3615, %v3621
    %v3623 = vcombine.low %v3543, %v3544
    %v3625 = vunpack.c.l.s4 1983009808
    %v3626 = vunpack.c.0.s8 %v3625
    %v3627 = vlaneseq
    %v3628 = vshrl.u32 %v3627, 7
    %v3629 = vsub.s32 %v3626, %v3628
    %v3630 = vrot.slane %v3623, %v3629
    %v3631 = vcombine.low %v3535, %v3542
    %v3633 = vunpack.c.l.s4 1983009808
    %v3634 = vunpack.c.0.s8 %v3633
    %v3635 = vlaneseq
    %v3636 = vshrl.u32 %v3635, 7
    %v3637 = vsub.s32 %v3634, %v3636
    %v3638 = vrot.slane %v3631, %v3637
    %v3639 = vcombine.low %v3545, %v3546
    %v3641 = vunpack.c.l.s4 1983009808
    %v3642 = vunpack.c.0.s8 %v3641
    %v3643 = vlaneseq
    %v3644 = vshrl.u32 %v3643, 7
    %v3645 = vsub.s32 %v3642, %v3644
    %v3646 = vrot.slane %v3639, %v3645
    %v3647 = vcombine.low %v3622, %v3630
    %v3648 = vcombine.high %v3622, %v3630
    %v3650 = vunpack.c.l.s4 1934713408
    %v3651 = vunpack.c.0.s8 %v3650
    %v3652 = vlaneseq
    %v3653 = vshrl.u32 %v3652, 7
    %v3654 = vsub.s32 %v3651, %v3653
    %v3655 = vrot.slane %v3647, %v3654
    %v3657 = vunpack.c.l.s4 1934713408
    %v3658 = vunpack.c.0.s8 %v3657
    %v3659 = vlaneseq
    %v3660 = vshrl.u32 %v3659, 7
    %v3661 = vsub.s32 %v3658, %v3660
    %v3662 = vrot.slane %v3648, %v3661
    %v3663 = vcombine.low %v3638, %v3646
    %v3664 = vcombine.high %v3638, %v3646
    %v3666 = vunpack.c.l.s4 1934713408
    %v3667 = vunpack.c.0.s8 %v3666
    %v3668 = vlaneseq
    %v3669 = vshrl.u32 %v3668, 7
    %v3670 = vsub.s32 %v3667, %v3669
    %v3671 = vrot.slane %v3663, %v3670
    %v3673 = vunpack.c.l.s4 1934713408
    %v3674 = vunpack.c.0.s8 %v3673
    %v3675 = vlaneseq
    %v3676 = vshrl.u32 %v3675, 7
    %v3677 = vsub.s32 %v3674, %v3676
    %v3678 = vrot.slane %v3664, %v3677
    %v3679 = vcombine.low %v3655, %v3671
    %v3680 = vcombine.high %v3655, %v3671
    %v3681 = vcombine.low %v3662, %v3678
    %v3682 = vcombine.high %v3662, %v3678
    %v3683 = vcombine.low %v3587, %v3594
    %v3685 = vunpack.c.l.s4 1983009808
    %v3686 = vunpack.c.0.s8 %v3685
    %v3687 = vlaneseq
    %v3688 = vshrl.u32 %v3687, 7
    %v3689 = vsub.s32 %v3686, %v3688
    %v3690 = vrot.slane %v3683, %v3689
    %v3691 = vcombine.low %v3611, %v3612
    %v3693 = vunpack.c.l.s4 1983009808
    %v3694 = vunpack.c.0.s8 %v3693
    %v3695 = vlaneseq
    %v3696 = vshrl.u32 %v3695, 7
    %v3697 = vsub.s32 %v3694, %v3696
    %v3698 = vrot.slane %v3691, %v3697
    %v3699 = vcombine.low %v3603, %v3610
    %v3701 = vunpack.c.l.s4 1983009808
    %v3702 = vunpack.c.0.s8 %v3701
    %v3703 = vlaneseq
    %v3704 = vshrl.u32 %v3703, 7
    %v3705 = vsub.s32 %v3702, %v3704
    %v3706 = vrot.slane %v3699, %v3705
    %v3707 = vcombine.low %v3613, %v3614
    %v3709 = vunpack.c.l.s4 1983009808
    %v3710 = vunpack.c.0.s8 %v3709
    %v3711 = vlaneseq
    %v3712 = vshrl.u32 %v3711, 7
    %v3713 = vsub.s32 %v3710, %v3712
    %v3714 = vrot.slane %v3707, %v3713
    %v3715 = vcombine.low %v3690, %v3698
    %v3716 = vcombine.high %v3690, %v3698
    %v3718 = vunpack.c.l.s4 1934713408
    %v3719 = vunpack.c.0.s8 %v3718
    %v3720 = vlaneseq
    %v3721 = vshrl.u32 %v3720, 7
    %v3722 = vsub.s32 %v3719, %v3721
    %v3723 = vrot.slane %v3715, %v3722
    %v3725 = vunpack.c.l.s4 1934713408
    %v3726 = vunpack.c.0.s8 %v3725
    %v3727 = vlaneseq
    %v3728 = vshrl.u32 %v3727, 7
    %v3729 = vsub.s32 %v3726, %v3728
    %v3730 = vrot.slane %v3716, %v3729
    %v3731 = vcombine.low %v3706, %v3714
    %v3732 = vcombine.high %v3706, %v3714
    %v3734 = vunpack.c.l.s4 1934713408
    %v3735 = vunpack.c.0.s8 %v3734
    %v3736 = vlaneseq
    %v3737 = vshrl.u32 %v3736, 7
    %v3738 = vsub.s32 %v3735, %v3737
    %v3739 = vrot.slane %v3731, %v3738
    %v3741 = vunpack.c.l.s4 1934713408
    %v3742 = vunpack.c.0.s8 %v3741
    %v3743 = vlaneseq
    %v3744 = vshrl.u32 %v3743, 7
    %v3745 = vsub.s32 %v3742, %v3744
    %v3746 = vrot.slane %v3732, %v3745
    %v3747 = vcombine.low %v3723, %v3739
    %v3748 = vcombine.high %v3723, %v3739
    %v3749 = vcombine.low %v3730, %v3746
    %v3750 = vcombine.high %v3730, %v3746
    %3751 = vrot.lane.b32.xlu0 %v3157, 64
    %v3752 = vpop.permute.xlu0 %3751
    %3753 = vrot.lane.b32.xlu0 %v3160, 64
    %v3754 = vpop.permute.xlu0 %3753
    %3755 = vrot.lane.b32.xlu0 %v3166, 64
    %v3756 = vpop.permute.xlu0 %3755
    %3757 = vrot.lane.b32.xlu0 %v3168, 64
    %v3758 = vpop.permute.xlu0 %3757
    %3759 = vrot.lane.b32.xlu0 %v3172, 64
    %v3760 = vpop.permute.xlu0 %3759
    %3761 = vrot.lane.b32.xlu0 %v3174, 64
    %v3762 = vpop.permute.xlu0 %3761
    %3763 = vrot.lane.b32.xlu0 %v3178, 64
    %v3764 = vpop.permute.xlu0 %3763
    %3765 = vrot.lane.b32.xlu0 %v3180, 64
    %v3766 = vpop.permute.xlu0 %3765
    %v3775 = vcombine.low %v3752, %v3760
    %v3776 = vcombine.high %v3752, %v3760
    %v3778 = vunpack.c.l.s4 1983009808
    %v3779 = vunpack.c.0.s8 %v3778
    %v3780 = vlaneseq
    %v3781 = vshrl.u32 %v3780, 7
    %v3782 = vsub.s32 %v3779, %v3781
    %v3783 = vrot.slane %v3775, %v3782
    %v3785 = vunpack.c.l.s4 1983009808
    %v3786 = vunpack.c.0.s8 %v3785
    %v3787 = vlaneseq
    %v3788 = vshrl.u32 %v3787, 7
    %v3789 = vsub.s32 %v3786, %v3788
    %v3790 = vrot.slane %v3776, %v3789
    %v3791 = vcombine.low %v3756, %v3764
    %v3792 = vcombine.high %v3756, %v3764
    %v3794 = vunpack.c.l.s4 1983009808
    %v3795 = vunpack.c.0.s8 %v3794
    %v3796 = vlaneseq
    %v3797 = vshrl.u32 %v3796, 7
    %v3798 = vsub.s32 %v3795, %v3797
    %v3799 = vrot.slane %v3791, %v3798
    %v3801 = vunpack.c.l.s4 1983009808
    %v3802 = vunpack.c.0.s8 %v3801
    %v3803 = vlaneseq
    %v3804 = vshrl.u32 %v3803, 7
    %v3805 = vsub.s32 %v3802, %v3804
    %v3806 = vrot.slane %v3792, %v3805
    %v3807 = vcombine.low %v3783, %v3799
    %v3808 = vcombine.high %v3783, %v3799
    %v3810 = vunpack.c.l.s4 1934713408
    %v3811 = vunpack.c.0.s8 %v3810
    %v3812 = vlaneseq
    %v3813 = vshrl.u32 %v3812, 7
    %v3814 = vsub.s32 %v3811, %v3813
    %v3815 = vrot.slane %v3807, %v3814
    %v3817 = vunpack.c.l.s4 1934713408
    %v3818 = vunpack.c.0.s8 %v3817
    %v3819 = vlaneseq
    %v3820 = vshrl.u32 %v3819, 7
    %v3821 = vsub.s32 %v3818, %v3820
    %v3822 = vrot.slane %v3808, %v3821
    %v3823 = vcombine.low %v3790, %v3806
    %v3824 = vcombine.high %v3790, %v3806
    %v3826 = vunpack.c.l.s4 1934713408
    %v3827 = vunpack.c.0.s8 %v3826
    %v3828 = vlaneseq
    %v3829 = vshrl.u32 %v3828, 7
    %v3830 = vsub.s32 %v3827, %v3829
    %v3831 = vrot.slane %v3823, %v3830
    %v3833 = vunpack.c.l.s4 1934713408
    %v3834 = vunpack.c.0.s8 %v3833
    %v3835 = vlaneseq
    %v3836 = vshrl.u32 %v3835, 7
    %v3837 = vsub.s32 %v3834, %v3836
    %v3838 = vrot.slane %v3824, %v3837
    %v3839 = vcombine.high %v3815, 0.0
    %v3840 = vcombine.high %v3822, 0.0
    %v3841 = vcombine.high %v3831, 0.0
    %v3842 = vcombine.high %v3838, 0.0
    %v3843 = vcombine.low %v3754, %v3762
    %v3844 = vcombine.high %v3754, %v3762
    %v3846 = vunpack.c.l.s4 1983009808
    %v3847 = vunpack.c.0.s8 %v3846
    %v3848 = vlaneseq
    %v3849 = vshrl.u32 %v3848, 7
    %v3850 = vsub.s32 %v3847, %v3849
    %v3851 = vrot.slane %v3843, %v3850
    %v3853 = vunpack.c.l.s4 1983009808
    %v3854 = vunpack.c.0.s8 %v3853
    %v3855 = vlaneseq
    %v3856 = vshrl.u32 %v3855, 7
    %v3857 = vsub.s32 %v3854, %v3856
    %v3858 = vrot.slane %v3844, %v3857
    %v3859 = vcombine.low %v3758, %v3766
    %v3860 = vcombine.high %v3758, %v3766
    %v3862 = vunpack.c.l.s4 1983009808
    %v3863 = vunpack.c.0.s8 %v3862
    %v3864 = vlaneseq
    %v3865 = vshrl.u32 %v3864, 7
    %v3866 = vsub.s32 %v3863, %v3865
    %v3867 = vrot.slane %v3859, %v3866
    %v3869 = vunpack.c.l.s4 1983009808
    %v3870 = vunpack.c.0.s8 %v3869
    %v3871 = vlaneseq
    %v3872 = vshrl.u32 %v3871, 7
    %v3873 = vsub.s32 %v3870, %v3872
    %v3874 = vrot.slane %v3860, %v3873
    %v3875 = vcombine.low %v3851, %v3867
    %v3876 = vcombine.high %v3851, %v3867
    %v3878 = vunpack.c.l.s4 1934713408
    %v3879 = vunpack.c.0.s8 %v3878
    %v3880 = vlaneseq
    %v3881 = vshrl.u32 %v3880, 7
    %v3882 = vsub.s32 %v3879, %v3881
    %v3883 = vrot.slane %v3875, %v3882
    %v3885 = vunpack.c.l.s4 1934713408
    %v3886 = vunpack.c.0.s8 %v3885
    %v3887 = vlaneseq
    %v3888 = vshrl.u32 %v3887, 7
    %v3889 = vsub.s32 %v3886, %v3888
    %v3890 = vrot.slane %v3876, %v3889
    %v3891 = vcombine.low %v3858, %v3874
    %v3892 = vcombine.high %v3858, %v3874
    %v3894 = vunpack.c.l.s4 1934713408
    %v3895 = vunpack.c.0.s8 %v3894
    %v3896 = vlaneseq
    %v3897 = vshrl.u32 %v3896, 7
    %v3898 = vsub.s32 %v3895, %v3897
    %v3899 = vrot.slane %v3891, %v3898
    %v3901 = vunpack.c.l.s4 1934713408
    %v3902 = vunpack.c.0.s8 %v3901
    %v3903 = vlaneseq
    %v3904 = vshrl.u32 %v3903, 7
    %v3905 = vsub.s32 %v3902, %v3904
    %v3906 = vrot.slane %v3892, %v3905
    %v3907 = vcombine.high %v3883, 0.0
    %v3908 = vcombine.high %v3890, 0.0
    %v3909 = vcombine.high %v3899, 0.0
    %v3910 = vcombine.high %v3906, 0.0
    %v3911 = vcombine.low %v3815, %v3822
    %v3913 = vunpack.c.l.s4 1983009808
    %v3914 = vunpack.c.0.s8 %v3913
    %v3915 = vlaneseq
    %v3916 = vshrl.u32 %v3915, 7
    %v3917 = vsub.s32 %v3914, %v3916
    %v3918 = vrot.slane %v3911, %v3917
    %v3919 = vcombine.low %v3839, %v3840
    %v3921 = vunpack.c.l.s4 1983009808
    %v3922 = vunpack.c.0.s8 %v3921
    %v3923 = vlaneseq
    %v3924 = vshrl.u32 %v3923, 7
    %v3925 = vsub.s32 %v3922, %v3924
    %v3926 = vrot.slane %v3919, %v3925
    %v3927 = vcombine.low %v3831, %v3838
    %v3929 = vunpack.c.l.s4 1983009808
    %v3930 = vunpack.c.0.s8 %v3929
    %v3931 = vlaneseq
    %v3932 = vshrl.u32 %v3931, 7
    %v3933 = vsub.s32 %v3930, %v3932
    %v3934 = vrot.slane %v3927, %v3933
    %v3935 = vcombine.low %v3841, %v3842
    %v3937 = vunpack.c.l.s4 1983009808
    %v3938 = vunpack.c.0.s8 %v3937
    %v3939 = vlaneseq
    %v3940 = vshrl.u32 %v3939, 7
    %v3941 = vsub.s32 %v3938, %v3940
    %v3942 = vrot.slane %v3935, %v3941
    %v3943 = vcombine.low %v3918, %v3926
    %v3944 = vcombine.high %v3918, %v3926
    %v3946 = vunpack.c.l.s4 1934713408
    %v3947 = vunpack.c.0.s8 %v3946
    %v3948 = vlaneseq
    %v3949 = vshrl.u32 %v3948, 7
    %v3950 = vsub.s32 %v3947, %v3949
    %v3951 = vrot.slane %v3943, %v3950
    %v3953 = vunpack.c.l.s4 1934713408
    %v3954 = vunpack.c.0.s8 %v3953
    %v3955 = vlaneseq
    %v3956 = vshrl.u32 %v3955, 7
    %v3957 = vsub.s32 %v3954, %v3956
    %v3958 = vrot.slane %v3944, %v3957
    %v3959 = vcombine.low %v3934, %v3942
    %v3960 = vcombine.high %v3934, %v3942
    %v3962 = vunpack.c.l.s4 1934713408
    %v3963 = vunpack.c.0.s8 %v3962
    %v3964 = vlaneseq
    %v3965 = vshrl.u32 %v3964, 7
    %v3966 = vsub.s32 %v3963, %v3965
    %v3967 = vrot.slane %v3959, %v3966
    %v3969 = vunpack.c.l.s4 1934713408
    %v3970 = vunpack.c.0.s8 %v3969
    %v3971 = vlaneseq
    %v3972 = vshrl.u32 %v3971, 7
    %v3973 = vsub.s32 %v3970, %v3972
    %v3974 = vrot.slane %v3960, %v3973
    %v3975 = vcombine.low %v3951, %v3967
    %v3976 = vcombine.high %v3951, %v3967
    %v3977 = vcombine.low %v3958, %v3974
    %v3978 = vcombine.high %v3958, %v3974
    %v3979 = vcombine.low %v3883, %v3890
    %v3981 = vunpack.c.l.s4 1983009808
    %v3982 = vunpack.c.0.s8 %v3981
    %v3983 = vlaneseq
    %v3984 = vshrl.u32 %v3983, 7
    %v3985 = vsub.s32 %v3982, %v3984
    %v3986 = vrot.slane %v3979, %v3985
    %v3987 = vcombine.low %v3907, %v3908
    %v3989 = vunpack.c.l.s4 1983009808
    %v3990 = vunpack.c.0.s8 %v3989
    %v3991 = vlaneseq
    %v3992 = vshrl.u32 %v3991, 7
    %v3993 = vsub.s32 %v3990, %v3992
    %v3994 = vrot.slane %v3987, %v3993
    %v3995 = vcombine.low %v3899, %v3906
    %v3997 = vunpack.c.l.s4 1983009808
    %v3998 = vunpack.c.0.s8 %v3997
    %v3999 = vlaneseq
    %v4000 = vshrl.u32 %v3999, 7
    %v4001 = vsub.s32 %v3998, %v4000
    %v4002 = vrot.slane %v3995, %v4001
    %v4003 = vcombine.low %v3909, %v3910
    %v4005 = vunpack.c.l.s4 1983009808
    %v4006 = vunpack.c.0.s8 %v4005
    %v4007 = vlaneseq
    %v4008 = vshrl.u32 %v4007, 7
    %v4009 = vsub.s32 %v4006, %v4008
    %v4010 = vrot.slane %v4003, %v4009
    %v4011 = vcombine.low %v3986, %v3994
    %v4012 = vcombine.high %v3986, %v3994
    %v4014 = vunpack.c.l.s4 1934713408
    %v4015 = vunpack.c.0.s8 %v4014
    %v4016 = vlaneseq
    %v4017 = vshrl.u32 %v4016, 7
    %v4018 = vsub.s32 %v4015, %v4017
    %v4019 = vrot.slane %v4011, %v4018
    %v4021 = vunpack.c.l.s4 1934713408
    %v4022 = vunpack.c.0.s8 %v4021
    %v4023 = vlaneseq
    %v4024 = vshrl.u32 %v4023, 7
    %v4025 = vsub.s32 %v4022, %v4024
    %v4026 = vrot.slane %v4012, %v4025
    %v4027 = vcombine.low %v4002, %v4010
    %v4028 = vcombine.high %v4002, %v4010
    %v4030 = vunpack.c.l.s4 1934713408
    %v4031 = vunpack.c.0.s8 %v4030
    %v4032 = vlaneseq
    %v4033 = vshrl.u32 %v4032, 7
    %v4034 = vsub.s32 %v4031, %v4033
    %v4035 = vrot.slane %v4027, %v4034
    %v4037 = vunpack.c.l.s4 1934713408
    %v4038 = vunpack.c.0.s8 %v4037
    %v4039 = vlaneseq
    %v4040 = vshrl.u32 %v4039, 7
    %v4041 = vsub.s32 %v4038, %v4040
    %v4042 = vrot.slane %v4028, %v4041
    %v4043 = vcombine.low %v4019, %v4035
    %v4044 = vcombine.high %v4019, %v4035
    %v4045 = vcombine.low %v4026, %v4042
    %v4046 = vcombine.high %v4026, %v4042
    %v4048 = vsel %vm374, %v3383, 0
    %v4051 = vsel %vm374, %v3451, 0
    %v4054 = vsel %vm374, %v3679, 0
    %v4057 = vsel %vm374, %v3747, 0
    %4059 = vmatprep.subr.mxu0 0.0
    %4060 = vmatpush1.xpose.msra.mxu0 0.0
    %4061 = vmatprep.subr.mxu0 0.0
    %4062 = vmatpush1.xpose.msra.mxu0 0.0
    %4063 = vmatprep.subr.mxu0 0.0
    %4064 = vmatpush1.xpose.msra.mxu0 0.0
    %4065 = vmatprep.subr.mxu0 0.0
    %4066 = vmatpush1.xpose.msra.mxu0 0.0
    %4067 = vmatprep.subr.mxu0 0.0
    %4068 = vmatpush1.xpose.msra.mxu0 0.0
    %4069 = vmatprep.subr.mxu0 0.0
    %4070 = vmatpush1.xpose.msra.mxu0 0.0
    %4071 = vmatprep.subr.mxu0 0.0
    %4072 = vmatpush1.xpose.msra.mxu0 0.0
    %4073 = vmatprep.subr.mxu0 0.0
    %4074 = vmatpush1.xpose.msra.mxu0 0.0
    %4075 = vmatprep.subr.mxu0 0.0
    %4076 = vmatpush1.xpose.msra.mxu0 0.0
    %4077 = vmatprep.subr.mxu0 0.0
    %4078 = vmatpush1.xpose.msra.mxu0 0.0
    %4079 = vmatprep.subr.mxu0 0.0
    %4080 = vmatpush1.xpose.msra.mxu0 0.0
    %4081 = vmatprep.subr.mxu0 0.0
    %4082 = vmatpush1.xpose.msra.mxu0 0.0
    %4083 = vmatprep.subr.mxu0 0.0
    %4084 = vmatpush1.xpose.msra.mxu0 0.0
    %4085 = vmatprep.subr.mxu0 0.0
    %4086 = vmatpush1.xpose.msra.mxu0 0.0
    %4087 = vmatprep.subr.mxu0 0.0
    %4088 = vmatpush1.xpose.msra.mxu0 %v4057
    %4089 = vmatprep.subr.mxu0 0.0
    %4090 = vmatpush1.xpose.msra.mxu0 %v4054
    %4091 = vmatprep.subr.mxu0 0.0
    %4092 = vmatpush2.xpose.msra.mxu0 0.0
    %4093 = vmatprep.subr.mxu0 0.0
    %4094 = vmatpush2.xpose.msra.mxu0 0.0
    %4095 = vmatprep.subr.mxu0 0.0
    %4096 = vmatpush2.xpose.msra.mxu0 0.0
    %4097 = vmatprep.subr.mxu0 0.0
    %4098 = vmatpush2.xpose.msra.mxu0 0.0
    %4099 = vmatprep.subr.mxu0 0.0
    %4100 = vmatpush2.xpose.msra.mxu0 0.0
    %4101 = vmatprep.subr.mxu0 0.0
    %4102 = vmatpush2.xpose.msra.mxu0 0.0
    %4103 = vmatprep.subr.mxu0 0.0
    %4104 = vmatpush2.xpose.msra.mxu0 0.0
    %4105 = vmatprep.subr.mxu0 0.0
    %4106 = vmatpush2.xpose.msra.mxu0 0.0
    %4107 = vmatprep.subr.mxu0 0.0
    %4108 = vmatpush2.xpose.msra.mxu0 0.0
    %4109 = vmatprep.subr.mxu0 0.0
    %4110 = vmatpush2.xpose.msra.mxu0 0.0
    %4111 = vmatprep.subr.mxu0 0.0
    %4112 = vmatpush2.xpose.msra.mxu0 0.0
    %4113 = vmatprep.subr.mxu0 0.0
    %4114 = vmatpush2.xpose.msra.mxu0 0.0
    %4115 = vmatprep.subr.mxu0 0.0
    %4116 = vmatpush2.xpose.msra.mxu0 0.0
    %4117 = vmatprep.subr.mxu0 0.0
    %4118 = vmatpush2.xpose.msra.mxu0 0.0
    %4119 = vmatprep.subr.mxu0 0.0
    %4120 = vmatpush2.xpose.msra.mxu0 0.0
    %4121 = vmatprep.subr.mxu0 0.0
    %4122 = vmatpush2.xpose.msra.mxu0 0.0
    %4123 = vmatprep.mubr.f32.mxu0 0.0
    %4124 = vmatmul.mubr.f32.gmra.mxu0 %v4048
    %v4125 = vpop.f32.mrf.mxu0
    %v4126 = vadd.f32 0.0, %v4125
    %v4127 = vpop.f32.mrf.mxu0
    %4128 = vmatprep.mubr.f32.mxu0 0.0
    %4129 = vmatmul.mubr.f32.gmra.mxu0 %v4051
    %v4130 = vpop.f32.mrf.mxu0
    %v4131 = vadd.f32 0.0, %v4130
    %v4132 = vpop.f32.mrf.mxu0
    %4133 = vdwg.mxu0
    %v4135 = vsel %vm374, %v3384, 0
    %v4138 = vsel %vm374, %v3452, 0
    %v4141 = vsel %vm374, %v3680, 0
    %v4144 = vsel %vm374, %v3748, 0
    %4146 = vmatprep.subr.mxu0 0.0
    %4147 = vmatpush1.xpose.msra.mxu0 0.0
    %4148 = vmatprep.subr.mxu0 0.0
    %4149 = vmatpush1.xpose.msra.mxu0 0.0
    %4150 = vmatprep.subr.mxu0 0.0
    %4151 = vmatpush1.xpose.msra.mxu0 0.0
    %4152 = vmatprep.subr.mxu0 0.0
    %4153 = vmatpush1.xpose.msra.mxu0 0.0
    %4154 = vmatprep.subr.mxu0 0.0
    %4155 = vmatpush1.xpose.msra.mxu0 0.0
    %4156 = vmatprep.subr.mxu0 0.0
    %4157 = vmatpush1.xpose.msra.mxu0 0.0
    %4158 = vmatprep.subr.mxu0 0.0
    %4159 = vmatpush1.xpose.msra.mxu0 0.0
    %4160 = vmatprep.subr.mxu0 0.0
    %4161 = vmatpush1.xpose.msra.mxu0 0.0
    %4162 = vmatprep.subr.mxu0 0.0
    %4163 = vmatpush1.xpose.msra.mxu0 0.0
    %4164 = vmatprep.subr.mxu0 0.0
    %4165 = vmatpush1.xpose.msra.mxu0 0.0
    %4166 = vmatprep.subr.mxu0 0.0
    %4167 = vmatpush1.xpose.msra.mxu0 0.0
    %4168 = vmatprep.subr.mxu0 0.0
    %4169 = vmatpush1.xpose.msra.mxu0 0.0
    %4170 = vmatprep.subr.mxu0 0.0
    %4171 = vmatpush1.xpose.msra.mxu0 0.0
    %4172 = vmatprep.subr.mxu0 0.0
    %4173 = vmatpush1.xpose.msra.mxu0 0.0
    %4174 = vmatprep.subr.mxu0 0.0
    %4175 = vmatpush1.xpose.msra.mxu0 %v4144
    %4176 = vmatprep.subr.mxu0 0.0
    %4177 = vmatpush1.xpose.msra.mxu0 %v4141
    %4178 = vmatprep.subr.mxu0 0.0
    %4179 = vmatpush2.xpose.msra.mxu0 0.0
    %4180 = vmatprep.subr.mxu0 0.0
    %4181 = vmatpush2.xpose.msra.mxu0 0.0
    %4182 = vmatprep.subr.mxu0 0.0
    %4183 = vmatpush2.xpose.msra.mxu0 0.0
    %4184 = vmatprep.subr.mxu0 0.0
    %4185 = vmatpush2.xpose.msra.mxu0 0.0
    %4186 = vmatprep.subr.mxu0 0.0
    %4187 = vmatpush2.xpose.msra.mxu0 0.0
    %4188 = vmatprep.subr.mxu0 0.0
    %4189 = vmatpush2.xpose.msra.mxu0 0.0
    %4190 = vmatprep.subr.mxu0 0.0
    %4191 = vmatpush2.xpose.msra.mxu0 0.0
    %4192 = vmatprep.subr.mxu0 0.0
    %4193 = vmatpush2.xpose.msra.mxu0 0.0
    %4194 = vmatprep.subr.mxu0 0.0
    %4195 = vmatpush2.xpose.msra.mxu0 0.0
    %4196 = vmatprep.subr.mxu0 0.0
    %4197 = vmatpush2.xpose.msra.mxu0 0.0
    %4198 = vmatprep.subr.mxu0 0.0
    %4199 = vmatpush2.xpose.msra.mxu0 0.0
    %4200 = vmatprep.subr.mxu0 0.0
    %4201 = vmatpush2.xpose.msra.mxu0 0.0
    %4202 = vmatprep.subr.mxu0 0.0
    %4203 = vmatpush2.xpose.msra.mxu0 0.0
    %4204 = vmatprep.subr.mxu0 0.0
    %4205 = vmatpush2.xpose.msra.mxu0 0.0
    %4206 = vmatprep.subr.mxu0 0.0
    %4207 = vmatpush2.xpose.msra.mxu0 0.0
    %4208 = vmatprep.subr.mxu0 0.0
    %4209 = vmatpush2.xpose.msra.mxu0 0.0
    %4210 = vmatprep.mubr.f32.mxu0 0.0
    %4211 = vmatmul.mubr.f32.gmra.mxu0 %v4135
    %v4212 = vpop.f32.mrf.mxu0
    %v4213 = vadd.f32 0.0, %v4212
    %v4214 = vpop.f32.mrf.mxu0
    %4215 = vmatprep.mubr.f32.mxu0 0.0
    %4216 = vmatmul.mubr.f32.gmra.mxu0 %v4138
    %v4217 = vpop.f32.mrf.mxu0
    %v4218 = vadd.f32 0.0, %v4217
    %v4219 = vpop.f32.mrf.mxu0
    %4220 = vdwg.mxu0
    %v4222 = vsel %vm374, %v3385, 0
    %v4225 = vsel %vm374, %v3453, 0
    %v4228 = vsel %vm374, %v3681, 0
    %v4231 = vsel %vm374, %v3749, 0
    %4233 = vmatprep.subr.mxu0 0.0
    %4234 = vmatpush1.xpose.msra.mxu0 0.0
    %4235 = vmatprep.subr.mxu0 0.0
    %4236 = vmatpush1.xpose.msra.mxu0 0.0
    %4237 = vmatprep.subr.mxu0 0.0
    %4238 = vmatpush1.xpose.msra.mxu0 0.0
    %4239 = vmatprep.subr.mxu0 0.0
    %4240 = vmatpush1.xpose.msra.mxu0 0.0
    %4241 = vmatprep.subr.mxu0 0.0
    %4242 = vmatpush1.xpose.msra.mxu0 0.0
    %4243 = vmatprep.subr.mxu0 0.0
    %4244 = vmatpush1.xpose.msra.mxu0 0.0
    %4245 = vmatprep.subr.mxu0 0.0
    %4246 = vmatpush1.xpose.msra.mxu0 0.0
    %4247 = vmatprep.subr.mxu0 0.0
    %4248 = vmatpush1.xpose.msra.mxu0 0.0
    %4249 = vmatprep.subr.mxu0 0.0
    %4250 = vmatpush1.xpose.msra.mxu0 0.0
    %4251 = vmatprep.subr.mxu0 0.0
    %4252 = vmatpush1.xpose.msra.mxu0 0.0
    %4253 = vmatprep.subr.mxu0 0.0
    %4254 = vmatpush1.xpose.msra.mxu0 0.0
    %4255 = vmatprep.subr.mxu0 0.0
    %4256 = vmatpush1.xpose.msra.mxu0 0.0
    %4257 = vmatprep.subr.mxu0 0.0
    %4258 = vmatpush1.xpose.msra.mxu0 0.0
    %4259 = vmatprep.subr.mxu0 0.0
    %4260 = vmatpush1.xpose.msra.mxu0 0.0
    %4261 = vmatprep.subr.mxu0 0.0
    %4262 = vmatpush1.xpose.msra.mxu0 %v4231
    %4263 = vmatprep.subr.mxu0 0.0
    %4264 = vmatpush1.xpose.msra.mxu0 %v4228
    %4265 = vmatprep.subr.mxu0 0.0
    %4266 = vmatpush2.xpose.msra.mxu0 0.0
    %4267 = vmatprep.subr.mxu0 0.0
    %4268 = vmatpush2.xpose.msra.mxu0 0.0
    %4269 = vmatprep.subr.mxu0 0.0
    %4270 = vmatpush2.xpose.msra.mxu0 0.0
    %4271 = vmatprep.subr.mxu0 0.0
    %4272 = vmatpush2.xpose.msra.mxu0 0.0
    %4273 = vmatprep.subr.mxu0 0.0
    %4274 = vmatpush2.xpose.msra.mxu0 0.0
    %4275 = vmatprep.subr.mxu0 0.0
    %4276 = vmatpush2.xpose.msra.mxu0 0.0
    %4277 = vmatprep.subr.mxu0 0.0
    %4278 = vmatpush2.xpose.msra.mxu0 0.0
    %4279 = vmatprep.subr.mxu0 0.0
    %4280 = vmatpush2.xpose.msra.mxu0 0.0
    %4281 = vmatprep.subr.mxu0 0.0
    %4282 = vmatpush2.xpose.msra.mxu0 0.0
    %4283 = vmatprep.subr.mxu0 0.0
    %4284 = vmatpush2.xpose.msra.mxu0 0.0
    %4285 = vmatprep.subr.mxu0 0.0
    %4286 = vmatpush2.xpose.msra.mxu0 0.0
    %4287 = vmatprep.subr.mxu0 0.0
    %4288 = vmatpush2.xpose.msra.mxu0 0.0
    %4289 = vmatprep.subr.mxu0 0.0
    %4290 = vmatpush2.xpose.msra.mxu0 0.0
    %4291 = vmatprep.subr.mxu0 0.0
    %4292 = vmatpush2.xpose.msra.mxu0 0.0
    %4293 = vmatprep.subr.mxu0 0.0
    %4294 = vmatpush2.xpose.msra.mxu0 0.0
    %4295 = vmatprep.subr.mxu0 0.0
    %4296 = vmatpush2.xpose.msra.mxu0 0.0
    %4297 = vmatprep.mubr.f32.mxu0 0.0
    %4298 = vmatmul.mubr.f32.gmra.mxu0 %v4222
    %v4299 = vpop.f32.mrf.mxu0
    %v4300 = vadd.f32 0.0, %v4299
    %v4301 = vpop.f32.mrf.mxu0
    %4302 = vmatprep.mubr.f32.mxu0 0.0
    %4303 = vmatmul.mubr.f32.gmra.mxu0 %v4225
    %v4304 = vpop.f32.mrf.mxu0
    %v4305 = vadd.f32 0.0, %v4304
    %v4306 = vpop.f32.mrf.mxu0
    %4307 = vdwg.mxu0
    %v4309 = vsel %vm374, %v3386, 0
    %v4312 = vsel %vm374, %v3454, 0
    %v4315 = vsel %vm374, %v3682, 0
    %v4318 = vsel %vm374, %v3750, 0
    %4320 = vmatprep.subr.mxu0 0.0
    %4321 = vmatpush1.xpose.msra.mxu0 0.0
    %4322 = vmatprep.subr.mxu0 0.0
    %4323 = vmatpush1.xpose.msra.mxu0 0.0
    %4324 = vmatprep.subr.mxu0 0.0
    %4325 = vmatpush1.xpose.msra.mxu0 0.0
    %4326 = vmatprep.subr.mxu0 0.0
    %4327 = vmatpush1.xpose.msra.mxu0 0.0
    %4328 = vmatprep.subr.mxu0 0.0
    %4329 = vmatpush1.xpose.msra.mxu0 0.0
    %4330 = vmatprep.subr.mxu0 0.0
    %4331 = vmatpush1.xpose.msra.mxu0 0.0
    %4332 = vmatprep.subr.mxu0 0.0
    %4333 = vmatpush1.xpose.msra.mxu0 0.0
    %4334 = vmatprep.subr.mxu0 0.0
    %4335 = vmatpush1.xpose.msra.mxu0 0.0
    %4336 = vmatprep.subr.mxu0 0.0
    %4337 = vmatpush1.xpose.msra.mxu0 0.0
    %4338 = vmatprep.subr.mxu0 0.0
    %4339 = vmatpush1.xpose.msra.mxu0 0.0
    %4340 = vmatprep.subr.mxu0 0.0
    %4341 = vmatpush1.xpose.msra.mxu0 0.0
    %4342 = vmatprep.subr.mxu0 0.0
    %4343 = vmatpush1.xpose.msra.mxu0 0.0
    %4344 = vmatprep.subr.mxu0 0.0
    %4345 = vmatpush1.xpose.msra.mxu0 0.0
    %4346 = vmatprep.subr.mxu0 0.0
    %4347 = vmatpush1.xpose.msra.mxu0 0.0
    %4348 = vmatprep.subr.mxu0 0.0
    %4349 = vmatpush1.xpose.msra.mxu0 %v4318
    %4350 = vmatprep.subr.mxu0 0.0
    %4351 = vmatpush1.xpose.msra.mxu0 %v4315
    %4352 = vmatprep.subr.mxu0 0.0
    %4353 = vmatpush2.xpose.msra.mxu0 0.0
    %4354 = vmatprep.subr.mxu0 0.0
    %4355 = vmatpush2.xpose.msra.mxu0 0.0
    %4356 = vmatprep.subr.mxu0 0.0
    %4357 = vmatpush2.xpose.msra.mxu0 0.0
    %4358 = vmatprep.subr.mxu0 0.0
    %4359 = vmatpush2.xpose.msra.mxu0 0.0
    %4360 = vmatprep.subr.mxu0 0.0
    %4361 = vmatpush2.xpose.msra.mxu0 0.0
    %4362 = vmatprep.subr.mxu0 0.0
    %4363 = vmatpush2.xpose.msra.mxu0 0.0
    %4364 = vmatprep.subr.mxu0 0.0
    %4365 = vmatpush2.xpose.msra.mxu0 0.0
    %4366 = vmatprep.subr.mxu0 0.0
    %4367 = vmatpush2.xpose.msra.mxu0 0.0
    %4368 = vmatprep.subr.mxu0 0.0
    %4369 = vmatpush2.xpose.msra.mxu0 0.0
    %4370 = vmatprep.subr.mxu0 0.0
    %4371 = vmatpush2.xpose.msra.mxu0 0.0
    %4372 = vmatprep.subr.mxu0 0.0
    %4373 = vmatpush2.xpose.msra.mxu0 0.0
    %4374 = vmatprep.subr.mxu0 0.0
    %4375 = vmatpush2.xpose.msra.mxu0 0.0
    %4376 = vmatprep.subr.mxu0 0.0
    %4377 = vmatpush2.xpose.msra.mxu0 0.0
    %4378 = vmatprep.subr.mxu0 0.0
    %4379 = vmatpush2.xpose.msra.mxu0 0.0
    %4380 = vmatprep.subr.mxu0 0.0
    %4381 = vmatpush2.xpose.msra.mxu0 0.0
    %4382 = vmatprep.subr.mxu0 0.0
    %4383 = vmatpush2.xpose.msra.mxu0 0.0
    %4384 = vmatprep.mubr.f32.mxu0 0.0
    %4385 = vmatmul.mubr.f32.gmra.mxu0 %v4309
    %v4386 = vpop.f32.mrf.mxu0
    %v4387 = vadd.f32 0.0, %v4386
    %v4388 = vpop.f32.mrf.mxu0
    %4389 = vmatprep.mubr.f32.mxu0 0.0
    %4390 = vmatmul.mubr.f32.gmra.mxu0 %v4312
    %v4391 = vpop.f32.mrf.mxu0
    %v4392 = vadd.f32 0.0, %v4391
    %v4393 = vpop.f32.mrf.mxu0
    %4394 = vdwg.mxu0
    %v4395 = vmul.f32 %v4126, 0.35355338
    %v4396 = vmul.f32 %v4131, 0.35355338
    %v4397 = vmul.f32 %v4213, 0.35355338
    %v4398 = vmul.f32 %v4218, 0.35355338
    %v4399 = vmul.f32 %v4300, 0.35355338
    %v4400 = vmul.f32 %v4305, 0.35355338
    %v4401 = vmul.f32 %v4387, 0.35355338
    %v4402 = vmul.f32 %v4392, 0.35355338
    %v4403 = vadd.f32 %v4395, %v2057
    %v4404 = vadd.f32 %v4396, %v2074
    %v4405 = vadd.f32 %v4397, %v2057
    %v4406 = vadd.f32 %v4398, %v2074
    %v4407 = vadd.f32 %v4399, %v2057
    %v4408 = vadd.f32 %v4400, %v2074
    %v4409 = vadd.f32 %v4401, %v2057
    %v4410 = vadd.f32 %v4402, %v2074
    %v4411 = vsel %vm2085, %v4403, -inf
    %4412 = vmax.xlane.f32.xlu0 %v4411
    %v4413 = vpop.xlane.xlu0 %4412
    %v4414 = vsel %vm2085, %v4404, -inf
    %4415 = vmax.xlane.f32.xlu0 %v4414
    %v4416 = vpop.xlane.xlu0 %4415
    %v4417 = vsel %vm2085, %v4405, -inf
    %4418 = vmax.xlane.f32.xlu0 %v4417
    %v4419 = vpop.xlane.xlu0 %4418
    %v4420 = vsel %vm2085, %v4406, -inf
    %4421 = vmax.xlane.f32.xlu0 %v4420
    %v4422 = vpop.xlane.xlu0 %4421
    %v4423 = vsel %vm2085, %v4407, -inf
    %4424 = vmax.xlane.f32.xlu0 %v4423
    %v4425 = vpop.xlane.xlu0 %4424
    %v4426 = vsel %vm2085, %v4408, -inf
    %4427 = vmax.xlane.f32.xlu0 %v4426
    %v4428 = vpop.xlane.xlu0 %4427
    %v4429 = vsel %vm2085, %v4409, -inf
    %4430 = vmax.xlane.f32.xlu0 %v4429
    %v4431 = vpop.xlane.xlu0 %4430
    %v4432 = vsel %vm2085, %v4410, -inf
    %4433 = vmax.xlane.f32.xlu0 %v4432
    %v4434 = vpop.xlane.xlu0 %4433
    %v4435 = vsub.f32 %v4403, %v4413
    %v4436 = vsub.f32 %v4404, %v4416
    %v4437 = vsub.f32 %v4405, %v4419
    %v4438 = vsub.f32 %v4406, %v4422
    %v4439 = vsub.f32 %v4407, %v4425
    %v4440 = vsub.f32 %v4408, %v4428
    %v4441 = vsub.f32 %v4409, %v4431
    %v4442 = vsub.f32 %v4410, %v4434
    %v4443 = vmul.f32 %v4435, 1.442695
    %v4444 = vpow.pop %v4443
    %v4445 = vmul.f32 %v4436, 1.442695
    %v4446 = vpow.pop %v4445
    %v4447 = vmul.f32 %v4437, 1.442695
    %v4448 = vpow.pop %v4447
    %v4449 = vmul.f32 %v4438, 1.442695
    %v4450 = vpow.pop %v4449
    %v4451 = vmul.f32 %v4439, 1.442695
    %v4452 = vpow.pop %v4451
    %v4453 = vmul.f32 %v4440, 1.442695
    %v4454 = vpow.pop %v4453
    %v4455 = vmul.f32 %v4441, 1.442695
    %v4456 = vpow.pop %v4455
    %v4457 = vmul.f32 %v4442, 1.442695
    %v4458 = vpow.pop %v4457
    %v4459 = vsel %vm2085, %v4444, 0.0
    %4460 = vadd.xlane.f32.xlu0 %v4459
    %v4461 = vpop.xlane.xlu0 %4460
    %v4462 = vsel %vm2085, %v4446, 0.0
    %4463 = vadd.xlane.f32.xlu0 %v4462
    %v4464 = vpop.xlane.xlu0 %4463
    %v4465 = vsel %vm2085, %v4448, 0.0
    %4466 = vadd.xlane.f32.xlu0 %v4465
    %v4467 = vpop.xlane.xlu0 %4466
    %v4468 = vsel %vm2085, %v4450, 0.0
    %4469 = vadd.xlane.f32.xlu0 %v4468
    %v4470 = vpop.xlane.xlu0 %4469
    %v4471 = vsel %vm2085, %v4452, 0.0
    %4472 = vadd.xlane.f32.xlu0 %v4471
    %v4473 = vpop.xlane.xlu0 %4472
    %v4474 = vsel %vm2085, %v4454, 0.0
    %4475 = vadd.xlane.f32.xlu0 %v4474
    %v4476 = vpop.xlane.xlu0 %4475
    %v4477 = vsel %vm2085, %v4456, 0.0
    %4478 = vadd.xlane.f32.xlu0 %v4477
    %v4479 = vpop.xlane.xlu0 %4478
    %v4480 = vsel %vm2085, %v4458, 0.0
    %4481 = vadd.xlane.f32.xlu0 %v4480
    %v4482 = vpop.xlane.xlu0 %4481
    %v4483 = vrcp.pop %v4461
    %v4484 = vrcp.pop %v4464
    %v4485 = vrcp.pop %v4467
    %v4486 = vrcp.pop %v4470
    %v4487 = vrcp.pop %v4473
    %v4488 = vrcp.pop %v4476
    %v4489 = vrcp.pop %v4479
    %v4490 = vrcp.pop %v4482
    %v4491 = vmul.f32 %v4444, %v4483
    %v4492 = vmul.f32 %v4446, %v4484
    %v4493 = vmul.f32 %v4448, %v4485
    %v4494 = vmul.f32 %v4450, %v4486
    %v4495 = vmul.f32 %v4452, %v4487
    %v4496 = vmul.f32 %v4454, %v4488
    %v4497 = vmul.f32 %v4456, %v4489
    %v4498 = vmul.f32 %v4458, %v4490
    %v4500 = vsel %vm2085, %v4491, 0
    %v4503 = vsel %vm2085, %v4492, 0
    %4505 = vmatprep.subr.mxu0 0.0
    %4506 = vmatpush1.msra.mxu0 0.0
    %4507 = vmatprep.subr.mxu0 0.0
    %4508 = vmatpush1.msra.mxu0 0.0
    %4509 = vmatprep.subr.mxu0 0.0
    %4510 = vmatpush1.msra.mxu0 0.0
    %4511 = vmatprep.subr.mxu0 0.0
    %4512 = vmatpush1.msra.mxu0 0.0
    %4513 = vmatprep.subr.mxu0 0.0
    %4514 = vmatpush1.msra.mxu0 0.0
    %4515 = vmatprep.subr.mxu0 0.0
    %4516 = vmatpush1.msra.mxu0 0.0
    %4517 = vmatprep.subr.mxu0 0.0
    %4518 = vmatpush1.msra.mxu0 0.0
    %4519 = vmatprep.subr.mxu0 0.0
    %4520 = vmatpush1.msra.mxu0 0.0
    %4521 = vmatprep.subr.mxu0 0.0
    %4522 = vmatpush1.msra.mxu0 0.0
    %4523 = vmatprep.subr.mxu0 0.0
    %4524 = vmatpush1.msra.mxu0 0.0
    %4525 = vmatprep.subr.mxu0 0.0
    %4526 = vmatpush1.msra.mxu0 0.0
    %4527 = vmatprep.subr.mxu0 0.0
    %4528 = vmatpush1.msra.mxu0 0.0
    %4529 = vmatprep.subr.mxu0 0.0
    %4530 = vmatpush1.msra.mxu0 0.0
    %4531 = vmatprep.subr.mxu0 0.0
    %4532 = vmatpush1.msra.mxu0 0.0
    %4533 = vmatprep.subr.mxu0 0.0
    %4534 = vmatpush1.msra.mxu0 %v4043
    %4535 = vmatprep.subr.mxu0 0.0
    %4536 = vmatpush1.msra.mxu0 %v3975
    %4537 = vmatprep.subr.mxu0 0.0
    %4538 = vmatpush2.msra.mxu0 0.0
    %4539 = vmatprep.subr.mxu0 0.0
    %4540 = vmatpush2.msra.mxu0 0.0
    %4541 = vmatprep.subr.mxu0 0.0
    %4542 = vmatpush2.msra.mxu0 0.0
    %4543 = vmatprep.subr.mxu0 0.0
    %4544 = vmatpush2.msra.mxu0 0.0
    %4545 = vmatprep.subr.mxu0 0.0
    %4546 = vmatpush2.msra.mxu0 0.0
    %4547 = vmatprep.subr.mxu0 0.0
    %4548 = vmatpush2.msra.mxu0 0.0
    %4549 = vmatprep.subr.mxu0 0.0
    %4550 = vmatpush2.msra.mxu0 0.0
    %4551 = vmatprep.subr.mxu0 0.0
    %4552 = vmatpush2.msra.mxu0 0.0
    %4553 = vmatprep.subr.mxu0 0.0
    %4554 = vmatpush2.msra.mxu0 0.0
    %4555 = vmatprep.subr.mxu0 0.0
    %4556 = vmatpush2.msra.mxu0 0.0
    %4557 = vmatprep.subr.mxu0 0.0
    %4558 = vmatpush2.msra.mxu0 0.0
    %4559 = vmatprep.subr.mxu0 0.0
    %4560 = vmatpush2.msra.mxu0 0.0
    %4561 = vmatprep.subr.mxu0 0.0
    %4562 = vmatpush2.msra.mxu0 0.0
    %4563 = vmatprep.subr.mxu0 0.0
    %4564 = vmatpush2.msra.mxu0 0.0
    %4565 = vmatprep.subr.mxu0 0.0
    %4566 = vmatpush2.msra.mxu0 0.0
    %4567 = vmatprep.subr.mxu0 0.0
    %4568 = vmatpush2.msra.mxu0 0.0
    %4569 = vmatprep.mubr.f32.mxu0 0.0
    %4570 = vmatmul.mubr.f32.gmra.mxu0 %v4500
    %v4571 = vpop.f32.mrf.mxu0
    %v4572 = vadd.f32 0.0, %v4571
    %v4573 = vpop.f32.mrf.mxu0
    %4574 = vmatprep.mubr.f32.mxu0 0.0
    %4575 = vmatmul.mubr.f32.gmra.mxu0 %v4503
    %v4576 = vpop.f32.mrf.mxu0
    %v4577 = vadd.f32 0.0, %v4576
    %v4578 = vpop.f32.mrf.mxu0
    %4579 = vdwg.mxu0
    %v4581 = vsel %vm2085, %v4493, 0
    %v4584 = vsel %vm2085, %v4494, 0
    %4586 = vmatprep.subr.mxu0 0.0
    %4587 = vmatpush1.msra.mxu0 0.0
    %4588 = vmatprep.subr.mxu0 0.0
    %4589 = vmatpush1.msra.mxu0 0.0
    %4590 = vmatprep.subr.mxu0 0.0
    %4591 = vmatpush1.msra.mxu0 0.0
    %4592 = vmatprep.subr.mxu0 0.0
    %4593 = vmatpush1.msra.mxu0 0.0
    %4594 = vmatprep.subr.mxu0 0.0
    %4595 = vmatpush1.msra.mxu0 0.0
    %4596 = vmatprep.subr.mxu0 0.0
    %4597 = vmatpush1.msra.mxu0 0.0
    %4598 = vmatprep.subr.mxu0 0.0
    %4599 = vmatpush1.msra.mxu0 0.0
    %4600 = vmatprep.subr.mxu0 0.0
    %4601 = vmatpush1.msra.mxu0 0.0
    %4602 = vmatprep.subr.mxu0 0.0
    %4603 = vmatpush1.msra.mxu0 0.0
    %4604 = vmatprep.subr.mxu0 0.0
    %4605 = vmatpush1.msra.mxu0 0.0
    %4606 = vmatprep.subr.mxu0 0.0
    %4607 = vmatpush1.msra.mxu0 0.0
    %4608 = vmatprep.subr.mxu0 0.0
    %4609 = vmatpush1.msra.mxu0 0.0
    %4610 = vmatprep.subr.mxu0 0.0
    %4611 = vmatpush1.msra.mxu0 0.0
    %4612 = vmatprep.subr.mxu0 0.0
    %4613 = vmatpush1.msra.mxu0 0.0
    %4614 = vmatprep.subr.mxu0 0.0
    %4615 = vmatpush1.msra.mxu0 %v4044
    %4616 = vmatprep.subr.mxu0 0.0
    %4617 = vmatpush1.msra.mxu0 %v3976
    %4618 = vmatprep.subr.mxu0 0.0
    %4619 = vmatpush2.msra.mxu0 0.0
    %4620 = vmatprep.subr.mxu0 0.0
    %4621 = vmatpush2.msra.mxu0 0.0
    %4622 = vmatprep.subr.mxu0 0.0
    %4623 = vmatpush2.msra.mxu0 0.0
    %4624 = vmatprep.subr.mxu0 0.0
    %4625 = vmatpush2.msra.mxu0 0.0
    %4626 = vmatprep.subr.mxu0 0.0
    %4627 = vmatpush2.msra.mxu0 0.0
    %4628 = vmatprep.subr.mxu0 0.0
    %4629 = vmatpush2.msra.mxu0 0.0
    %4630 = vmatprep.subr.mxu0 0.0
    %4631 = vmatpush2.msra.mxu0 0.0
    %4632 = vmatprep.subr.mxu0 0.0
    %4633 = vmatpush2.msra.mxu0 0.0
    %4634 = vmatprep.subr.mxu0 0.0
    %4635 = vmatpush2.msra.mxu0 0.0
    %4636 = vmatprep.subr.mxu0 0.0
    %4637 = vmatpush2.msra.mxu0 0.0
    %4638 = vmatprep.subr.mxu0 0.0
    %4639 = vmatpush2.msra.mxu0 0.0
    %4640 = vmatprep.subr.mxu0 0.0
    %4641 = vmatpush2.msra.mxu0 0.0
    %4642 = vmatprep.subr.mxu0 0.0
    %4643 = vmatpush2.msra.mxu0 0.0
    %4644 = vmatprep.subr.mxu0 0.0
    %4645 = vmatpush2.msra.mxu0 0.0
    %4646 = vmatprep.subr.mxu0 0.0
    %4647 = vmatpush2.msra.mxu0 0.0
    %4648 = vmatprep.subr.mxu0 0.0
    %4649 = vmatpush2.msra.mxu0 0.0
    %4650 = vmatprep.mubr.f32.mxu0 0.0
    %4651 = vmatmul.mubr.f32.gmra.mxu0 %v4581
    %v4652 = vpop.f32.mrf.mxu0
    %v4653 = vadd.f32 0.0, %v4652
    %v4654 = vpop.f32.mrf.mxu0
    %4655 = vmatprep.mubr.f32.mxu0 0.0
    %4656 = vmatmul.mubr.f32.gmra.mxu0 %v4584
    %v4657 = vpop.f32.mrf.mxu0
    %v4658 = vadd.f32 0.0, %v4657
    %v4659 = vpop.f32.mrf.mxu0
    %4660 = vdwg.mxu0
    %v4662 = vsel %vm2085, %v4495, 0
    %v4665 = vsel %vm2085, %v4496, 0
    %4667 = vmatprep.subr.mxu0 0.0
    %4668 = vmatpush1.msra.mxu0 0.0
    %4669 = vmatprep.subr.mxu0 0.0
    %4670 = vmatpush1.msra.mxu0 0.0
    %4671 = vmatprep.subr.mxu0 0.0
    %4672 = vmatpush1.msra.mxu0 0.0
    %4673 = vmatprep.subr.mxu0 0.0
    %4674 = vmatpush1.msra.mxu0 0.0
    %4675 = vmatprep.subr.mxu0 0.0
    %4676 = vmatpush1.msra.mxu0 0.0
    %4677 = vmatprep.subr.mxu0 0.0
    %4678 = vmatpush1.msra.mxu0 0.0
    %4679 = vmatprep.subr.mxu0 0.0
    %4680 = vmatpush1.msra.mxu0 0.0
    %4681 = vmatprep.subr.mxu0 0.0
    %4682 = vmatpush1.msra.mxu0 0.0
    %4683 = vmatprep.subr.mxu0 0.0
    %4684 = vmatpush1.msra.mxu0 0.0
    %4685 = vmatprep.subr.mxu0 0.0
    %4686 = vmatpush1.msra.mxu0 0.0
    %4687 = vmatprep.subr.mxu0 0.0
    %4688 = vmatpush1.msra.mxu0 0.0
    %4689 = vmatprep.subr.mxu0 0.0
    %4690 = vmatpush1.msra.mxu0 0.0
    %4691 = vmatprep.subr.mxu0 0.0
    %4692 = vmatpush1.msra.mxu0 0.0
    %4693 = vmatprep.subr.mxu0 0.0
    %4694 = vmatpush1.msra.mxu0 0.0
    %4695 = vmatprep.subr.mxu0 0.0
    %4696 = vmatpush1.msra.mxu0 %v4045
    %4697 = vmatprep.subr.mxu0 0.0
    %4698 = vmatpush1.msra.mxu0 %v3977
    %4699 = vmatprep.subr.mxu0 0.0
    %4700 = vmatpush2.msra.mxu0 0.0
    %4701 = vmatprep.subr.mxu0 0.0
    %4702 = vmatpush2.msra.mxu0 0.0
    %4703 = vmatprep.subr.mxu0 0.0
    %4704 = vmatpush2.msra.mxu0 0.0
    %4705 = vmatprep.subr.mxu0 0.0
    %4706 = vmatpush2.msra.mxu0 0.0
    %4707 = vmatprep.subr.mxu0 0.0
    %4708 = vmatpush2.msra.mxu0 0.0
    %4709 = vmatprep.subr.mxu0 0.0
    %4710 = vmatpush2.msra.mxu0 0.0
    %4711 = vmatprep.subr.mxu0 0.0
    %4712 = vmatpush2.msra.mxu0 0.0
    %4713 = vmatprep.subr.mxu0 0.0
    %4714 = vmatpush2.msra.mxu0 0.0
    %4715 = vmatprep.subr.mxu0 0.0
    %4716 = vmatpush2.msra.mxu0 0.0
    %4717 = vmatprep.subr.mxu0 0.0
    %4718 = vmatpush2.msra.mxu0 0.0
    %4719 = vmatprep.subr.mxu0 0.0
    %4720 = vmatpush2.msra.mxu0 0.0
    %4721 = vmatprep.subr.mxu0 0.0
    %4722 = vmatpush2.msra.mxu0 0.0
    %4723 = vmatprep.subr.mxu0 0.0
    %4724 = vmatpush2.msra.mxu0 0.0
    %4725 = vmatprep.subr.mxu0 0.0
    %4726 = vmatpush2.msra.mxu0 0.0
    %4727 = vmatprep.subr.mxu0 0.0
    %4728 = vmatpush2.msra.mxu0 0.0
    %4729 = vmatprep.subr.mxu0 0.0
    %4730 = vmatpush2.msra.mxu0 0.0
    %4731 = vmatprep.mubr.f32.mxu0 0.0
    %4732 = vmatmul.mubr.f32.gmra.mxu0 %v4662
    %v4733 = vpop.f32.mrf.mxu0
    %v4734 = vadd.f32 0.0, %v4733
    %v4735 = vpop.f32.mrf.mxu0
    %4736 = vmatprep.mubr.f32.mxu0 0.0
    %4737 = vmatmul.mubr.f32.gmra.mxu0 %v4665
    %v4738 = vpop.f32.mrf.mxu0
    %v4739 = vadd.f32 0.0, %v4738
    %v4740 = vpop.f32.mrf.mxu0
    %4741 = vdwg.mxu0
    %v4743 = vsel %vm2085, %v4497, 0
    %v4746 = vsel %vm2085, %v4498, 0
    %4748 = vmatprep.subr.mxu0 0.0
    %4749 = vmatpush1.msra.mxu0 0.0
    %4750 = vmatprep.subr.mxu0 0.0
    %4751 = vmatpush1.msra.mxu0 0.0
    %4752 = vmatprep.subr.mxu0 0.0
    %4753 = vmatpush1.msra.mxu0 0.0
    %4754 = vmatprep.subr.mxu0 0.0
    %4755 = vmatpush1.msra.mxu0 0.0
    %4756 = vmatprep.subr.mxu0 0.0
    %4757 = vmatpush1.msra.mxu0 0.0
    %4758 = vmatprep.subr.mxu0 0.0
    %4759 = vmatpush1.msra.mxu0 0.0
    %4760 = vmatprep.subr.mxu0 0.0
    %4761 = vmatpush1.msra.mxu0 0.0
    %4762 = vmatprep.subr.mxu0 0.0
    %4763 = vmatpush1.msra.mxu0 0.0
    %4764 = vmatprep.subr.mxu0 0.0
    %4765 = vmatpush1.msra.mxu0 0.0
    %4766 = vmatprep.subr.mxu0 0.0
    %4767 = vmatpush1.msra.mxu0 0.0
    %4768 = vmatprep.subr.mxu0 0.0
    %4769 = vmatpush1.msra.mxu0 0.0
    %4770 = vmatprep.subr.mxu0 0.0
    %4771 = vmatpush1.msra.mxu0 0.0
    %4772 = vmatprep.subr.mxu0 0.0
    %4773 = vmatpush1.msra.mxu0 0.0
    %4774 = vmatprep.subr.mxu0 0.0
    %4775 = vmatpush1.msra.mxu0 0.0
    %4776 = vmatprep.subr.mxu0 0.0
    %4777 = vmatpush1.msra.mxu0 %v4046
    %4778 = vmatprep.subr.mxu0 0.0
    %4779 = vmatpush1.msra.mxu0 %v3978
    %4780 = vmatprep.subr.mxu0 0.0
    %4781 = vmatpush2.msra.mxu0 0.0
    %4782 = vmatprep.subr.mxu0 0.0
    %4783 = vmatpush2.msra.mxu0 0.0
    %4784 = vmatprep.subr.mxu0 0.0
    %4785 = vmatpush2.msra.mxu0 0.0
    %4786 = vmatprep.subr.mxu0 0.0
    %4787 = vmatpush2.msra.mxu0 0.0
    %4788 = vmatprep.subr.mxu0 0.0
    %4789 = vmatpush2.msra.mxu0 0.0
    %4790 = vmatprep.subr.mxu0 0.0
    %4791 = vmatpush2.msra.mxu0 0.0
    %4792 = vmatprep.subr.mxu0 0.0
    %4793 = vmatpush2.msra.mxu0 0.0
    %4794 = vmatprep.subr.mxu0 0.0
    %4795 = vmatpush2.msra.mxu0 0.0
    %4796 = vmatprep.subr.mxu0 0.0
    %4797 = vmatpush2.msra.mxu0 0.0
    %4798 = vmatprep.subr.mxu0 0.0
    %4799 = vmatpush2.msra.mxu0 0.0
    %4800 = vmatprep.subr.mxu0 0.0
    %4801 = vmatpush2.msra.mxu0 0.0
    %4802 = vmatprep.subr.mxu0 0.0
    %4803 = vmatpush2.msra.mxu0 0.0
    %4804 = vmatprep.subr.mxu0 0.0
    %4805 = vmatpush2.msra.mxu0 0.0
    %4806 = vmatprep.subr.mxu0 0.0
    %4807 = vmatpush2.msra.mxu0 0.0
    %4808 = vmatprep.subr.mxu0 0.0
    %4809 = vmatpush2.msra.mxu0 0.0
    %4810 = vmatprep.subr.mxu0 0.0
    %4811 = vmatpush2.msra.mxu0 0.0
    %4812 = vmatprep.mubr.f32.mxu0 0.0
    %4813 = vmatmul.mubr.f32.gmra.mxu0 %v4743
    %v4814 = vpop.f32.mrf.mxu0
    %v4815 = vadd.f32 0.0, %v4814
    %v4816 = vpop.f32.mrf.mxu0
    %4817 = vmatprep.mubr.f32.mxu0 0.0
    %4818 = vmatmul.mubr.f32.gmra.mxu0 %v4746
    %v4819 = vpop.f32.mrf.mxu0
    %v4820 = vadd.f32 0.0, %v4819
    %v4821 = vpop.f32.mrf.mxu0
    %4822 = vdwg.mxu0
    %v4823 = vcombine.low %v4572, %v4734
    %v4824 = vcombine.high %v4572, %v4734
    %v4826 = vunpack.c.l.s4 1983009808
    %v4827 = vunpack.c.0.s8 %v4826
    %v4828 = vlaneseq
    %v4829 = vshrl.u32 %v4828, 7
    %v4830 = vsub.s32 %v4827, %v4829
    %v4831 = vrot.slane %v4823, %v4830
    %v4833 = vunpack.c.l.s4 1983009808
    %v4834 = vunpack.c.0.s8 %v4833
    %v4835 = vlaneseq
    %v4836 = vshrl.u32 %v4835, 7
    %v4837 = vsub.s32 %v4834, %v4836
    %v4838 = vrot.slane %v4824, %v4837
    %v4839 = vcombine.low %v4653, %v4815
    %v4840 = vcombine.high %v4653, %v4815
    %v4842 = vunpack.c.l.s4 1983009808
    %v4843 = vunpack.c.0.s8 %v4842
    %v4844 = vlaneseq
    %v4845 = vshrl.u32 %v4844, 7
    %v4846 = vsub.s32 %v4843, %v4845
    %v4847 = vrot.slane %v4839, %v4846
    %v4849 = vunpack.c.l.s4 1983009808
    %v4850 = vunpack.c.0.s8 %v4849
    %v4851 = vlaneseq
    %v4852 = vshrl.u32 %v4851, 7
    %v4853 = vsub.s32 %v4850, %v4852
    %v4854 = vrot.slane %v4840, %v4853
    %v4855 = vcombine.low %v4831, %v4847
    %v4856 = vcombine.high %v4831, %v4847
    %v4858 = vunpack.c.l.s4 1934713408
    %v4859 = vunpack.c.0.s8 %v4858
    %v4860 = vlaneseq
    %v4861 = vshrl.u32 %v4860, 7
    %v4862 = vsub.s32 %v4859, %v4861
    %v4863 = vrot.slane %v4855, %v4862
    %v4865 = vunpack.c.l.s4 1934713408
    %v4866 = vunpack.c.0.s8 %v4865
    %v4867 = vlaneseq
    %v4868 = vshrl.u32 %v4867, 7
    %v4869 = vsub.s32 %v4866, %v4868
    %v4870 = vrot.slane %v4856, %v4869
    %v4871 = vcombine.low %v4838, %v4854
    %v4872 = vcombine.high %v4838, %v4854
    %v4874 = vunpack.c.l.s4 1934713408
    %v4875 = vunpack.c.0.s8 %v4874
    %v4876 = vlaneseq
    %v4877 = vshrl.u32 %v4876, 7
    %v4878 = vsub.s32 %v4875, %v4877
    %v4879 = vrot.slane %v4871, %v4878
    %v4881 = vunpack.c.l.s4 1934713408
    %v4882 = vunpack.c.0.s8 %v4881
    %v4883 = vlaneseq
    %v4884 = vshrl.u32 %v4883, 7
    %v4885 = vsub.s32 %v4882, %v4884
    %v4886 = vrot.slane %v4872, %v4885
    %v4887 = vcombine.high %v4863, 0.0
    %v4888 = vcombine.high %v4870, 0.0
    %v4889 = vcombine.high %v4879, 0.0
    %v4890 = vcombine.high %v4886, 0.0
    %v4891 = vcombine.low %v4577, %v4739
    %v4892 = vcombine.high %v4577, %v4739
    %v4894 = vunpack.c.l.s4 1983009808
    %v4895 = vunpack.c.0.s8 %v4894
    %v4896 = vlaneseq
    %v4897 = vshrl.u32 %v4896, 7
    %v4898 = vsub.s32 %v4895, %v4897
    %v4899 = vrot.slane %v4891, %v4898
    %v4901 = vunpack.c.l.s4 1983009808
    %v4902 = vunpack.c.0.s8 %v4901
    %v4903 = vlaneseq
    %v4904 = vshrl.u32 %v4903, 7
    %v4905 = vsub.s32 %v4902, %v4904
    %v4906 = vrot.slane %v4892, %v4905
    %v4907 = vcombine.low %v4658, %v4820
    %v4908 = vcombine.high %v4658, %v4820
    %v4910 = vunpack.c.l.s4 1983009808
    %v4911 = vunpack.c.0.s8 %v4910
    %v4912 = vlaneseq
    %v4913 = vshrl.u32 %v4912, 7
    %v4914 = vsub.s32 %v4911, %v4913
    %v4915 = vrot.slane %v4907, %v4914
    %v4917 = vunpack.c.l.s4 1983009808
    %v4918 = vunpack.c.0.s8 %v4917
    %v4919 = vlaneseq
    %v4920 = vshrl.u32 %v4919, 7
    %v4921 = vsub.s32 %v4918, %v4920
    %v4922 = vrot.slane %v4908, %v4921
    %v4923 = vcombine.low %v4899, %v4915
    %v4924 = vcombine.high %v4899, %v4915
    %v4926 = vunpack.c.l.s4 1934713408
    %v4927 = vunpack.c.0.s8 %v4926
    %v4928 = vlaneseq
    %v4929 = vshrl.u32 %v4928, 7
    %v4930 = vsub.s32 %v4927, %v4929
    %v4931 = vrot.slane %v4923, %v4930
    %v4933 = vunpack.c.l.s4 1934713408
    %v4934 = vunpack.c.0.s8 %v4933
    %v4935 = vlaneseq
    %v4936 = vshrl.u32 %v4935, 7
    %v4937 = vsub.s32 %v4934, %v4936
    %v4938 = vrot.slane %v4924, %v4937
    %v4939 = vcombine.low %v4906, %v4922
    %v4940 = vcombine.high %v4906, %v4922
    %v4942 = vunpack.c.l.s4 1934713408
    %v4943 = vunpack.c.0.s8 %v4942
    %v4944 = vlaneseq
    %v4945 = vshrl.u32 %v4944, 7
    %v4946 = vsub.s32 %v4943, %v4945
    %v4947 = vrot.slane %v4939, %v4946
    %v4949 = vunpack.c.l.s4 1934713408
    %v4950 = vunpack.c.0.s8 %v4949
    %v4951 = vlaneseq
    %v4952 = vshrl.u32 %v4951, 7
    %v4953 = vsub.s32 %v4950, %v4952
    %v4954 = vrot.slane %v4940, %v4953
    %v4955 = vcombine.high %v4931, 0.0
    %v4956 = vcombine.high %v4938, 0.0
    %v4957 = vcombine.high %v4947, 0.0
    %v4958 = vcombine.high %v4954, 0.0
    %v4959 = vcombine.low %v4863, %v4870
    %v4961 = vunpack.c.l.s4 1983009808
    %v4962 = vunpack.c.0.s8 %v4961
    %v4963 = vlaneseq
    %v4964 = vshrl.u32 %v4963, 7
    %v4965 = vsub.s32 %v4962, %v4964
    %v4966 = vrot.slane %v4959, %v4965
    %v4967 = vcombine.low %v4887, %v4888
    %v4969 = vunpack.c.l.s4 1983009808
    %v4970 = vunpack.c.0.s8 %v4969
    %v4971 = vlaneseq
    %v4972 = vshrl.u32 %v4971, 7
    %v4973 = vsub.s32 %v4970, %v4972
    %v4974 = vrot.slane %v4967, %v4973
    %v4975 = vcombine.low %v4879, %v4886
    %v4977 = vunpack.c.l.s4 1983009808
    %v4978 = vunpack.c.0.s8 %v4977
    %v4979 = vlaneseq
    %v4980 = vshrl.u32 %v4979, 7
    %v4981 = vsub.s32 %v4978, %v4980
    %v4982 = vrot.slane %v4975, %v4981
    %v4983 = vcombine.low %v4889, %v4890
    %v4985 = vunpack.c.l.s4 1983009808
    %v4986 = vunpack.c.0.s8 %v4985
    %v4987 = vlaneseq
    %v4988 = vshrl.u32 %v4987, 7
    %v4989 = vsub.s32 %v4986, %v4988
    %v4990 = vrot.slane %v4983, %v4989
    %v4991 = vcombine.low %v4966, %v4974
    %v4992 = vcombine.high %v4966, %v4974
    %v4994 = vunpack.c.l.s4 1934713408
    %v4995 = vunpack.c.0.s8 %v4994
    %v4996 = vlaneseq
    %v4997 = vshrl.u32 %v4996, 7
    %v4998 = vsub.s32 %v4995, %v4997
    %v4999 = vrot.slane %v4991, %v4998
    %v5001 = vunpack.c.l.s4 1934713408
    %v5002 = vunpack.c.0.s8 %v5001
    %v5003 = vlaneseq
    %v5004 = vshrl.u32 %v5003, 7
    %v5005 = vsub.s32 %v5002, %v5004
    %v5006 = vrot.slane %v4992, %v5005
    %v5007 = vcombine.low %v4982, %v4990
    %v5008 = vcombine.high %v4982, %v4990
    %v5010 = vunpack.c.l.s4 1934713408
    %v5011 = vunpack.c.0.s8 %v5010
    %v5012 = vlaneseq
    %v5013 = vshrl.u32 %v5012, 7
    %v5014 = vsub.s32 %v5011, %v5013
    %v5015 = vrot.slane %v5007, %v5014
    %v5017 = vunpack.c.l.s4 1934713408
    %v5018 = vunpack.c.0.s8 %v5017
    %v5019 = vlaneseq
    %v5020 = vshrl.u32 %v5019, 7
    %v5021 = vsub.s32 %v5018, %v5020
    %v5022 = vrot.slane %v5008, %v5021
    %v5023 = vcombine.low %v4999, %v5015
    %v5024 = vcombine.high %v4999, %v5015
    %v5025 = vcombine.low %v5006, %v5022
    %v5026 = vcombine.high %v5006, %v5022
    %v5027 = vcombine.low %v4931, %v4938
    %v5029 = vunpack.c.l.s4 1983009808
    %v5030 = vunpack.c.0.s8 %v5029
    %v5031 = vlaneseq
    %v5032 = vshrl.u32 %v5031, 7
    %v5033 = vsub.s32 %v5030, %v5032
    %v5034 = vrot.slane %v5027, %v5033
    %v5035 = vcombine.low %v4955, %v4956
    %v5037 = vunpack.c.l.s4 1983009808
    %v5038 = vunpack.c.0.s8 %v5037
    %v5039 = vlaneseq
    %v5040 = vshrl.u32 %v5039, 7
    %v5041 = vsub.s32 %v5038, %v5040
    %v5042 = vrot.slane %v5035, %v5041
    %v5043 = vcombine.low %v4947, %v4954
    %v5045 = vunpack.c.l.s4 1983009808
    %v5046 = vunpack.c.0.s8 %v5045
    %v5047 = vlaneseq
    %v5048 = vshrl.u32 %v5047, 7
    %v5049 = vsub.s32 %v5046, %v5048
    %v5050 = vrot.slane %v5043, %v5049
    %v5051 = vcombine.low %v4957, %v4958
    %v5053 = vunpack.c.l.s4 1983009808
    %v5054 = vunpack.c.0.s8 %v5053
    %v5055 = vlaneseq
    %v5056 = vshrl.u32 %v5055, 7
    %v5057 = vsub.s32 %v5054, %v5056
    %v5058 = vrot.slane %v5051, %v5057
    %v5059 = vcombine.low %v5034, %v5042
    %v5060 = vcombine.high %v5034, %v5042
    %v5062 = vunpack.c.l.s4 1934713408
    %v5063 = vunpack.c.0.s8 %v5062
    %v5064 = vlaneseq
    %v5065 = vshrl.u32 %v5064, 7
    %v5066 = vsub.s32 %v5063, %v5065
    %v5067 = vrot.slane %v5059, %v5066
    %v5069 = vunpack.c.l.s4 1934713408
    %v5070 = vunpack.c.0.s8 %v5069
    %v5071 = vlaneseq
    %v5072 = vshrl.u32 %v5071, 7
    %v5073 = vsub.s32 %v5070, %v5072
    %v5074 = vrot.slane %v5060, %v5073
    %v5075 = vcombine.low %v5050, %v5058
    %v5076 = vcombine.high %v5050, %v5058
    %v5078 = vunpack.c.l.s4 1934713408
    %v5079 = vunpack.c.0.s8 %v5078
    %v5080 = vlaneseq
    %v5081 = vshrl.u32 %v5080, 7
    %v5082 = vsub.s32 %v5079, %v5081
    %v5083 = vrot.slane %v5075, %v5082
    %v5085 = vunpack.c.l.s4 1934713408
    %v5086 = vunpack.c.0.s8 %v5085
    %v5087 = vlaneseq
    %v5088 = vshrl.u32 %v5087, 7
    %v5089 = vsub.s32 %v5086, %v5088
    %v5090 = vrot.slane %v5076, %v5089
    %v5091 = vcombine.low %v5067, %v5083
    %v5092 = vcombine.high %v5067, %v5083
    %v5093 = vcombine.low %v5074, %v5090
    %v5094 = vcombine.high %v5074, %v5090
    %5097 = vrot.lane.b32.xlu0 %v5024, 8
    %v5098 = vpop.permute.xlu0 %5097
    %5099 = vrot.lane.b32.xlu0 %v5092, 8
    %v5100 = vpop.permute.xlu0 %5099
    %5105 = vrot.lane.b32.xlu0 %v5025, 16
    %v5106 = vpop.permute.xlu0 %5105
    %5107 = vrot.lane.b32.xlu0 %v5093, 16
    %v5108 = vpop.permute.xlu0 %5107
    %5113 = vrot.lane.b32.xlu0 %v5026, 24
    %v5114 = vpop.permute.xlu0 %5113
    %5115 = vrot.lane.b32.xlu0 %v5094, 24
    %v5116 = vpop.permute.xlu0 %5115
    %v5119 = vsel %vm374, %v5023, %v5098
    %v5120 = vsel %vm374, %v5091, %v5100
    %v5121 = vsel %vm2085, %v5119, %v5106
    %v5122 = vsel %vm2085, %v5120, %v5108
    %v5123 = vsel %vm2798, %v5121, %v5114
    %v5124 = vsel %vm2798, %v5122, %v5116
    %v5125 = vld [vmem:[%s3097 + $0x30] sm:$0xf]
    %v5126 = vld [vmem:[%s3097 + $0x34] sm:$0xf]
    %v5127 = vld [vmem:[%s3097 + $0x38] sm:$0xf]
    %v5128 = vld [vmem:[%s3097 + $0x3c] sm:$0xf]
    %v5129 = vpack.c.bf16 %v5124, %v5123
    %v5130 = vlaneseq
    %v5131 = vshrl.u32 %v5130, 7
    %v5132 = vsub.s32 0, %v5131
    %v5133 = vrot.slane %v3096, %v5132
    %v5138 = vunpack.c.l.b16 %v5125
    %v5139 = vunpack.c.l.b16 %v5126
    %v5140 = vunpack.c.l.b16 %v5127
    %v5141 = vunpack.c.l.b16 %v5128
    %v5142 = vpack.c.b16 %v5139, %v5138
    %v5143 = vpack.c.b16 %v5141, %v5140
    %v5147 = vsel %vm748, %v5129, 0
    %5149 = vmatprep.subr.bf16.mxu0 0
    %5150 = vmatpush1.bf16.msra.mxu0 0
    %5151 = vmatprep.subr.bf16.mxu0 0
    %5152 = vmatpush1.bf16.msra.mxu0 0
    %5153 = vmatprep.subr.bf16.mxu0 0
    %5154 = vmatpush1.bf16.msra.mxu0 0
    %5155 = vmatprep.subr.bf16.mxu0 0
    %5156 = vmatpush1.bf16.msra.mxu0 0
    %5157 = vmatprep.subr.bf16.mxu0 0
    %5158 = vmatpush1.bf16.msra.mxu0 0
    %5159 = vmatprep.subr.bf16.mxu0 0
    %5160 = vmatpush1.bf16.msra.mxu0 0
    %5161 = vmatprep.subr.bf16.mxu0 0
    %5162 = vmatpush1.bf16.msra.mxu0 %v5143
    %5163 = vmatprep.subr.bf16.mxu0 0
    %5164 = vmatpush1.bf16.msra.mxu0 %v5142
    %5165 = vmatprep.subr.bf16.mxu0 0
    %5166 = vmatpush2.bf16.msra.mxu0 0
    %5167 = vmatprep.subr.bf16.mxu0 0
    %5168 = vmatpush2.bf16.msra.mxu0 0
    %5169 = vmatprep.subr.bf16.mxu0 0
    %5170 = vmatpush2.bf16.msra.mxu0 0
    %5171 = vmatprep.subr.bf16.mxu0 0
    %5172 = vmatpush2.bf16.msra.mxu0 0
    %5173 = vmatprep.subr.bf16.mxu0 0
    %5174 = vmatpush2.bf16.msra.mxu0 0
    %5175 = vmatprep.subr.bf16.mxu0 0
    %5176 = vmatpush2.bf16.msra.mxu0 0
    %5177 = vmatprep.subr.bf16.mxu0 0
    %5178 = vmatpush2.bf16.msra.mxu0 0
    %5179 = vmatprep.subr.bf16.mxu0 0
    %5180 = vmatpush2.bf16.msra.mxu0 0
    %5181 = vmatprep.mubr.bf16.mxu0 0
    %5182 = vmatmul.mubr.bf16.gmra.mxu0 %v5147
    %v5183 = vpop.f32.mrf.mxu0
    %v5184 = vadd.f32 %v5133, %v5183
    %v5185 = vpop.f32.mrf.mxu0
    %v5186 = vpop.f32.mrf.mxu0
    %v5187 = vadd.f32 %v5133, %v5186
    %v5188 = vpop.f32.mrf.mxu0
    %5189 = vdwg.mxu0
    %v5190 = vadd.f32 %v3093, %v5184
    %v5191 = vadd.f32 %v3094, %v5187
    %v5192 = vsel %vm748, %v5190, 0.0
    %5193 = vadd.xlane.f32.xlu0 %v5192
    %v5194 = vpop.xlane.xlu0 %5193
    %v5195 = vsel %vm748, %v5191, 0.0
    %5196 = vadd.xlane.f32.xlu0 %v5195
    %v5197 = vpop.xlane.xlu0 %5196
    %v5198 = vmul.f32 %v5194, %v2874
    %v5199 = vmul.f32 %v5197, %v2874
    %v5200 = vsub.f32 %v5190, %v5198
    %v5201 = vsub.f32 %v5191, %v5199
    %v5202 = vmul.f32 %v5200, %v5200
    %v5203 = vmul.f32 %v5201, %v5201
    %v5204 = vsel %vm748, %v5202, 0.0
    %5205 = vadd.xlane.f32.xlu0 %v5204
    %v5206 = vpop.xlane.xlu0 %5205
    %v5207 = vsel %vm748, %v5203, 0.0
    %5208 = vadd.xlane.f32.xlu0 %v5207
    %v5209 = vpop.xlane.xlu0 %5208
    %v5210 = vmul.f32 %v5206, %v2874
    %v5211 = vmul.f32 %v5209, %v2874
    %v5212 = vadd.f32 %v5210, 1e-05
    %v5213 = vadd.f32 %v5211, 1e-05
    %v5214 = vrsqrt.pop %v5212
    %v5215 = vrsqrt.pop %v5213
    %v5216 = vmul.f32 %v5200, %v5214
    %v5217 = vmul.f32 %v5201, %v5215
    %v5218 = vlaneseq
    %v5219 = vshrl.u32 %v5218, 7
    %v5220 = vsub.s32 1, %v5219
    %v5221 = vrot.slane %v3096, %v5220
    %v5222 = vmul.f32 %v5216, %v5221
    %v5223 = vmul.f32 %v5217, %v5221
    %v5224 = vlaneseq
    %v5225 = vshrl.u32 %v5224, 7
    %v5226 = vsub.s32 2, %v5225
    %v5227 = vrot.slane %v3096, %v5226
    %v5228 = vadd.f32 %v5222, %v5227
    %v5229 = vadd.f32 %v5223, %v5227
    %v5230 = vld [vmem:[%s3097 + $0x40] sm:$0xf]
    %v5231 = vld [vmem:[%s3097 + $0x44] sm:$0xf]
    %v5232 = vld [vmem:[%s3097 + $0x48] sm:$0xf]
    %v5233 = vld [vmem:[%s3097 + $0x4c] sm:$0xf]
    %v5234 = vld [vmem:[%s3097 + $0x10] sm:$0xf]
    %v5235 = vld [vmem:[%s3097 + $0x14] sm:$0xf]
    %v5236 = vld [vmem:[%s3097 + $0x18] sm:$0xf]
    %v5237 = vld [vmem:[%s3097 + $0x1c] sm:$0xf]
    %v5238 = vld [vmem:[%s3097 + $0x20] sm:$0xf]
    %v5239 = vld [vmem:[%s3097 + $0x24] sm:$0xf]
    %v5240 = vld [vmem:[%s3097 + $0x28] sm:$0xf]
    %v5241 = vld [vmem:[%s3097 + $0x2c] sm:$0xf]
    %v5242 = vpack.c.bf16 %v5229, %v5228
    %v5243 = vlaneseq
    %v5244 = vshrl.u32 %v5243, 7
    %v5245 = vsub.s32 3, %v5244
    %v5246 = vrot.slane %v3096, %v5245
    %v5251 = vunpack.c.l.b16 %v5230
    %v5252 = vunpack.c.l.b16 %v5231
    %v5253 = vunpack.c.l.b16 %v5232
    %v5254 = vunpack.c.l.b16 %v5233
    %v5255 = vpack.c.b16 %v5252, %v5251
    %v5256 = vpack.c.b16 %v5254, %v5253
    %v5260 = vsel %vm748, %v5242, 0
    %5262 = vmatprep.subr.bf16.mxu0 0
    %5263 = vmatpush1.bf16.msra.mxu0 0
    %5264 = vmatprep.subr.bf16.mxu0 0
    %5265 = vmatpush1.bf16.msra.mxu0 0
    %5266 = vmatprep.subr.bf16.mxu0 0
    %5267 = vmatpush1.bf16.msra.mxu0 0
    %5268 = vmatprep.subr.bf16.mxu0 0
    %5269 = vmatpush1.bf16.msra.mxu0 0
    %5270 = vmatprep.subr.bf16.mxu0 0
    %5271 = vmatpush1.bf16.msra.mxu0 0
    %5272 = vmatprep.subr.bf16.mxu0 0
    %5273 = vmatpush1.bf16.msra.mxu0 0
    %5274 = vmatprep.subr.bf16.mxu0 0
    %5275 = vmatpush1.bf16.msra.mxu0 %v5256
    %5276 = vmatprep.subr.bf16.mxu0 0
    %5277 = vmatpush1.bf16.msra.mxu0 %v5255
    %5278 = vmatprep.subr.bf16.mxu0 0
    %5279 = vmatpush2.bf16.msra.mxu0 0
    %5280 = vmatprep.subr.bf16.mxu0 0
    %5281 = vmatpush2.bf16.msra.mxu0 0
    %5282 = vmatprep.subr.bf16.mxu0 0
    %5283 = vmatpush2.bf16.msra.mxu0 0
    %5284 = vmatprep.subr.bf16.mxu0 0
    %5285 = vmatpush2.bf16.msra.mxu0 0
    %5286 = vmatprep.subr.bf16.mxu0 0
    %5287 = vmatpush2.bf16.msra.mxu0 0
    %5288 = vmatprep.subr.bf16.mxu0 0
    %5289 = vmatpush2.bf16.msra.mxu0 0
    %5290 = vmatprep.subr.bf16.mxu0 0
    %5291 = vmatpush2.bf16.msra.mxu0 0
    %5292 = vmatprep.subr.bf16.mxu0 0
    %5293 = vmatpush2.bf16.msra.mxu0 0
    %5294 = vmatprep.mubr.bf16.mxu0 0
    %5295 = vmatmul.mubr.bf16.gmra.mxu0 %v5260
    %v5296 = vpop.f32.mrf.mxu0
    %v5297 = vadd.f32 %v5246, %v5296
    %v5298 = vpop.f32.mrf.mxu0
    %v5299 = vpop.f32.mrf.mxu0
    %v5300 = vadd.f32 %v5246, %v5299
    %v5301 = vpop.f32.mrf.mxu0
    %5302 = vdwg.mxu0
    %v5303 = vmax.f32 %v5297, 0.0
    %v5304 = vmax.f32 %v5300, 0.0
    %v5305 = vpack.c.bf16 %v5304, %v5303
    %v5306 = vlaneseq
    %v5307 = vshrl.u32 %v5306, 7
    %v5308 = vsub.s32 4, %v5307
    %v5309 = vrot.slane %v3096, %v5308
    %v5318 = vunpack.c.l.b16 %v5234
    %v5319 = vunpack.c.l.b16 %v5235
    %v5320 = vunpack.c.l.b16 %v5236
    %v5321 = vunpack.c.l.b16 %v5237
    %v5322 = vunpack.c.l.b16 %v5238
    %v5323 = vunpack.c.l.b16 %v5239
    %v5324 = vunpack.c.l.b16 %v5240
    %v5325 = vunpack.c.l.b16 %v5241
    %v5326 = vpack.c.b16 %v5319, %v5318
    %v5327 = vpack.c.b16 %v5321, %v5320
    %v5328 = vpack.c.b16 %v5323, %v5322
    %v5329 = vpack.c.b16 %v5325, %v5324
    %v5335 = vsel %vm99, %v5305, 0
    %5337 = vmatprep.subr.bf16.mxu0 0
    %5338 = vmatpush1.bf16.msra.mxu0 0
    %5339 = vmatprep.subr.bf16.mxu0 0
    %5340 = vmatpush1.bf16.msra.mxu0 0
    %5341 = vmatprep.subr.bf16.mxu0 0
    %5342 = vmatpush1.bf16.msra.mxu0 0
    %5343 = vmatprep.subr.bf16.mxu0 0
    %5344 = vmatpush1.bf16.msra.mxu0 0
    %5345 = vmatprep.subr.bf16.mxu0 0
    %5346 = vmatpush1.bf16.msra.mxu0 %v5329
    %5347 = vmatprep.subr.bf16.mxu0 0
    %5348 = vmatpush1.bf16.msra.mxu0 %v5328
    %5349 = vmatprep.subr.bf16.mxu0 0
    %5350 = vmatpush1.bf16.msra.mxu0 %v5327
    %5351 = vmatprep.subr.bf16.mxu0 0
    %5352 = vmatpush1.bf16.msra.mxu0 %v5326
    %5353 = vmatprep.subr.bf16.mxu0 0
    %5354 = vmatpush2.bf16.msra.mxu0 0
    %5355 = vmatprep.subr.bf16.mxu0 0
    %5356 = vmatpush2.bf16.msra.mxu0 0
    %5357 = vmatprep.subr.bf16.mxu0 0
    %5358 = vmatpush2.bf16.msra.mxu0 0
    %5359 = vmatprep.subr.bf16.mxu0 0
    %5360 = vmatpush2.bf16.msra.mxu0 0
    %5361 = vmatprep.subr.bf16.mxu0 0
    %5362 = vmatpush2.bf16.msra.mxu0 0
    %5363 = vmatprep.subr.bf16.mxu0 0
    %5364 = vmatpush2.bf16.msra.mxu0 0
    %5365 = vmatprep.subr.bf16.mxu0 0
    %5366 = vmatpush2.bf16.msra.mxu0 0
    %5367 = vmatprep.subr.bf16.mxu0 0
    %5368 = vmatpush2.bf16.msra.mxu0 0
    %5369 = vmatprep.mubr.bf16.mxu0 0
    %5370 = vmatmul.mubr.bf16.gmra.mxu0 %v5335
    %v5371 = vpop.f32.mrf.mxu0
    %v5372 = vadd.f32 %v5309, %v5371
    %v5373 = vpop.f32.mrf.mxu0
    %v5374 = vpop.f32.mrf.mxu0
    %v5375 = vadd.f32 %v5309, %v5374
    %v5376 = vpop.f32.mrf.mxu0
    %5377 = vdwg.mxu0
    %v5378 = vadd.f32 %v5228, %v5372
    %v5379 = vadd.f32 %v5229, %v5375
    %v5380 = vsel %vm748, %v5378, 0.0
    %5381 = vadd.xlane.f32.xlu0 %v5380
    %v5382 = vpop.xlane.xlu0 %5381
    %v5383 = vsel %vm748, %v5379, 0.0
    %5384 = vadd.xlane.f32.xlu0 %v5383
    %v5385 = vpop.xlane.xlu0 %5384
    %v5386 = vmul.f32 %v5382, %v2874
    %v5387 = vmul.f32 %v5385, %v2874
    %v5388 = vsub.f32 %v5378, %v5386
    %v5389 = vsub.f32 %v5379, %v5387
    %v5390 = vmul.f32 %v5388, %v5388
    %v5391 = vmul.f32 %v5389, %v5389
    %v5392 = vsel %vm748, %v5390, 0.0
    %5393 = vadd.xlane.f32.xlu0 %v5392
    %v5394 = vpop.xlane.xlu0 %5393
    %v5395 = vsel %vm748, %v5391, 0.0
    %5396 = vadd.xlane.f32.xlu0 %v5395
    %v5397 = vpop.xlane.xlu0 %5396
    %v5398 = vmul.f32 %v5394, %v2874
    %v5399 = vmul.f32 %v5397, %v2874
    %v5400 = vadd.f32 %v5398, 1e-05
    %v5401 = vadd.f32 %v5399, 1e-05
    %v5402 = vrsqrt.pop %v5400
    %v5403 = vrsqrt.pop %v5401
    %v5404 = vmul.f32 %v5388, %v5402
    %v5405 = vmul.f32 %v5389, %v5403
    %v5406 = vlaneseq
    %v5407 = vshrl.u32 %v5406, 7
    %v5408 = vsub.s32 5, %v5407
    %v5409 = vrot.slane %v3096, %v5408
    %v5410 = vmul.f32 %v5404, %v5409
    %v5411 = vmul.f32 %v5405, %v5409
    %v5412 = vlaneseq
    %v5413 = vshrl.u32 %v5412, 7
    %v5414 = vsub.s32 6, %v5413
    %v5415 = vrot.slane %v3096, %v5414
    %v5416 = vadd.f32 %v5410, %v5415
    %v5417 = vadd.f32 %v5411, %v5415
    %v5418 = vld [vmem:[#allocation2 + $0x28] sm:$0xf]
    %v5419 = vld [vmem:[#allocation2 + $0x2c] sm:$0xf]
    %v5420 = vld [vmem:[#allocation2 + $0x30] sm:$0xf]
    %v5421 = vld [vmem:[#allocation2 + $0x34] sm:$0xf]
    %v5422 = vld [vmem:[#allocation2 + $0x38] sm:$0x1]
    %v5423 = vunpack.c.l.bf16 %v5422
    %v5424 = vpack.c.bf16 %v5417, %v5416
    %v5425 = vlaneseq
    %v5426 = vshrl.u32 %v5425, 7
    %v5427 = vsub.s32 0, %v5426
    %v5428 = vrot.slane %v5423, %v5427
    %v5433 = vunpack.c.l.b16 %v5418
    %v5434 = vunpack.c.l.b16 %v5419
    %v5435 = vunpack.c.l.b16 %v5420
    %v5436 = vunpack.c.l.b16 %v5421
    %v5437 = vpack.c.b16 %v5434, %v5433
    %v5438 = vpack.c.b16 %v5436, %v5435
    %v5442 = vsel %vm748, %v5424, 0
    %5444 = vmatprep.subr.bf16.mxu0 0
    %5445 = vmatpush1.bf16.msra.mxu0 0
    %5446 = vmatprep.subr.bf16.mxu0 0
    %5447 = vmatpush1.bf16.msra.mxu0 0
    %5448 = vmatprep.subr.bf16.mxu0 0
    %5449 = vmatpush1.bf16.msra.mxu0 0
    %5450 = vmatprep.subr.bf16.mxu0 0
    %5451 = vmatpush1.bf16.msra.mxu0 0
    %5452 = vmatprep.subr.bf16.mxu0 0
    %5453 = vmatpush1.bf16.msra.mxu0 0
    %5454 = vmatprep.subr.bf16.mxu0 0
    %5455 = vmatpush1.bf16.msra.mxu0 0
    %5456 = vmatprep.subr.bf16.mxu0 0
    %5457 = vmatpush1.bf16.msra.mxu0 %v5438
    %5458 = vmatprep.subr.bf16.mxu0 0
    %5459 = vmatpush1.bf16.msra.mxu0 %v5437
    %5460 = vmatprep.subr.bf16.mxu0 0
    %5461 = vmatpush2.bf16.msra.mxu0 0
    %5462 = vmatprep.subr.bf16.mxu0 0
    %5463 = vmatpush2.bf16.msra.mxu0 0
    %5464 = vmatprep.subr.bf16.mxu0 0
    %5465 = vmatpush2.bf16.msra.mxu0 0
    %5466 = vmatprep.subr.bf16.mxu0 0
    %5467 = vmatpush2.bf16.msra.mxu0 0
    %5468 = vmatprep.subr.bf16.mxu0 0
    %5469 = vmatpush2.bf16.msra.mxu0 0
    %5470 = vmatprep.subr.bf16.mxu0 0
    %5471 = vmatpush2.bf16.msra.mxu0 0
    %5472 = vmatprep.subr.bf16.mxu0 0
    %5473 = vmatpush2.bf16.msra.mxu0 0
    %5474 = vmatprep.subr.bf16.mxu0 0
    %5475 = vmatpush2.bf16.msra.mxu0 0
    %5476 = vmatprep.mubr.bf16.mxu0 0
    %5477 = vmatmul.mubr.bf16.gmra.mxu0 %v5442
    %v5478 = vpop.f32.mrf.mxu0
    %v5479 = vadd.f32 %v5428, %v5478
    %v5480 = vpop.f32.mrf.mxu0
    %v5481 = vpop.f32.mrf.mxu0
    %v5482 = vadd.f32 %v5428, %v5481
    %v5483 = vpop.f32.mrf.mxu0
    %5484 = vdwg.mxu0
    %5485 = vst [vmem:[#allocation7] sm:$0xff] %v5479
    %5486 = vst [vmem:[#allocation7 + $0x8] sm:$0xff] %v5482
    // Predicated region
    $region30: #{transformer_forward.1} parent=1 // pred_check
      _
    $region31: #{transformer_forward.1} parent=1 // pred_check_branch
      %5488 = sbr.rel (0) target = $region33
    $region32: #{transformer_forward.1} parent=1 // pred_region
      %s5490 = ssub.s32 256, 256
      %5491 = vsyncadd [#allocation4], %s5490
      %s5492 = sshll.u32 [#allocation7], 4
      %s5493 = int_to_ptr.vmem [resolvable:$true] %s5492
      %5498 = dma.vmem_to_hbm [thread:$0]  %s5493, 256, %s5, [#allocation4], 128, 128, 8
    $region33: #{transformer_forward.1} parent=1 // pred_fallthru
      _
    // Predicated region
    $region34: #{transformer_forward.1} parent=1 // pred_check
      _
    $region35: #{transformer_forward.1} parent=1 // pred_check_branch
      %5500 = sbr.rel (0) target = $region37
    $region36: #{transformer_forward.1} parent=1 // pred_region
      %5501 = dma.done [#allocation4], 256
    $region37: #{transformer_forward.1} parent=1 // pred_fallthru
      _
    %5502 = vsyncpa [#allocation3], 1
    %5503 = vsyncpa [#allocation6], 1
    %5504 = vsyncpa [#allocation4], 1

</llo_original>
